<compile_context>
chip_gen: v7x
topology: tpu7x:2x2x1
jax: 0.10.0
libtpu: 0.0.40
codegen_flags: <defaults>
</compile_context>

<pallas_src>
import math

import jax
import jax.numpy as jnp
from jax import lax
from jax.experimental import pallas as pl
from jax.experimental.pallas import tpu as pltpu

LANE = 128   # vreg lane width
BT = 16      # batch tile: multiple of the bf16 sublane tile (16) so bf16 time-slab slices are
             # tile-aligned, and each recurrent matmul feeds >=16 MXU rows.
             # TODO(synk): raise toward 128-256 rows per core at production batch sizes.


def _round_up(n, m):
    return -(-n // m) * m


def _pad_to(x, axis, target):
    pad = target - x.shape[axis]
    if pad == 0:
        return x
    widths = [(0, 0)] * x.ndim
    widths[axis] = (0, pad)
    return jnp.pad(x, widths)


# ----------------------------- Pallas kernel --------------------------------
def _make_kernel(L, T, BT_, Hp, mlp_layers):
    """Builds the kernel body (static config closed over)."""
    G = 4 * Hp  # packed gate width, order (i, f, o, g)

    def kernel(*refs):
        idx = 0
        emb_ref = refs[idx]; idx += 1          # (T, BT, Hp) f32 time-major batch tile
        w_ih_ref = refs[idx]; idx += 1         # (L, Hp, 4Hp) bf16 contraction-ready (i,f,o,g)
        w_hh_ref = refs[idx]; idx += 1         # (L, Hp, 4Hp) bf16
        b_ref = refs[idx]; idx += 1            # (L, 1, 4Hp) f32 (= b_ih + b_hh)
        mlp_w_refs, mlp_b_refs = [], []
        for _ in range(mlp_layers):
            mlp_w_refs.append(refs[idx]); idx += 1   # (in_p, MHp) bf16 contraction-ready
            mlp_b_refs.append(refs[idx]); idx += 1   # (1, MHp) f32
        reg_w_ref = refs[idx]; idx += 1        # (reg_in_p, 1) bf16
        reg_b_ref = refs[idx]; idx += 1        # (1, 1) f32
        # outputs
        enc_out_ref = refs[idx]; idx += 1      # (T, BT, Hp) time-major normalized outputs
        hn_ref = refs[idx]; idx += 1           # (L, BT, Hp)
        cn_ref = refs[idx]; idx += 1           # (L, BT, Hp)
        seq_ref = refs[idx]; idx += 1          # (BT, Hp)
        pred_ref = refs[idx]; idx += 1         # (BT, 1)
        # scratch
        act = refs[idx]; idx += 1              # (T*BT, Hp) f32 in-place activation slab
        xproj = refs[idx]; idx += 1            # (T*BT, 4Hp) bf16 hoisted input projections

        # dropout on the embedding is identity in eval mode
        act[...] = emb_ref[...].reshape(T * BT_, Hp)      # layout no-op reshape

        for l in range(L):
            # Hoisted input projection: one (T*BT, Hp) @ (Hp, 4Hp) bf16 matmul per layer,
            # f32 accumulation; stored bf16 (halves xproj VMEM; gate math stays f32).
            xp = jnp.dot(act[...].astype(jnp.bfloat16), w_ih_ref[l],
                         preferred_element_type=jnp.float32) + b_ref[l]
            xproj[...] = xp.astype(jnp.bfloat16)

            w_hh_l = w_hh_ref[l]               # (Hp, 4Hp) bf16, no transpose in the hot loop

            def step(t, carry, w_hh_l=w_hh_l):
                h, c = carry                                   # f32
                row = pl.multiple_of(t * BT_, BT_)
                gates = (xproj[pl.ds(row, BT_), :].astype(jnp.float32)
                         + jnp.dot(h.astype(jnp.bfloat16), w_hh_l,
                                   preferred_element_type=jnp.float32))
                # gate blocks are 128-lane aligned: (i | f | o) sigmoid, g tanh
                sig = jax.nn.sigmoid(gates[:, :3 * Hp])
                i_g = sig[:, :Hp]
                f_g = sig[:, Hp:2 * Hp]
                o_g = sig[:, 2 * Hp:]
                g_g = jnp.tanh(gates[:, 3 * Hp:])
                c_new = f_g * c + i_g * g_g
                h_new = o_g * jnp.tanh(c_new)
                # Safe in-place overwrite: this layer's xproj is fully materialized above.
                act[pl.ds(row, BT_), :] = h_new
                return (h_new, c_new)

            h0 = jnp.zeros((BT_, Hp), jnp.float32)
            c0 = jnp.zeros((BT_, Hp), jnp.float32)
            # Full unroll is right for short static T.
            # TODO(synk): switch to unroll=4-8 / time-chunking for production T.
            h_fin, c_fin = lax.fori_loop(0, T, step, (h0, c0), unroll=True)
            hn_ref[l] = h_fin
            cn_ref[l] = c_fin
            # NOTE: inter-layer dropout of nn.LSTM is identity in eval mode.

        out = act[...]                                        # (T*BT, Hp)

        # F.normalize(out, p=2, dim=-1), eps=1e-12:
        #   x / max(||x||, eps) == x * rsqrt(max(||x||^2, eps^2))
        ss = jnp.sum(out * out, axis=-1, keepdims=True)
        out_n = out * lax.rsqrt(jnp.maximum(ss, 1e-24))
        enc_out_ref[...] = out_n.reshape(T, BT_, Hp)

        # mean over time (leading axis in time-major layout), then normalize again
        seq = jnp.mean(out_n.reshape(T, BT_, Hp), axis=0)     # (BT, Hp)
        ss2 = jnp.sum(seq * seq, axis=-1, keepdims=True)
        seq_n = seq * lax.rsqrt(jnp.maximum(ss2, 1e-24))
        seq_ref[...] = seq_n

        # MLP (Linear -> ReLU -> Dropout[=identity]) x mlp_layers
        h_mlp = seq_n
        for i in range(mlp_layers):
            h_mlp = jnp.maximum(
                jnp.dot(h_mlp.astype(jnp.bfloat16), mlp_w_refs[i][...],
                        preferred_element_type=jnp.float32) + mlp_b_refs[i][...],
                0.0)

        logits = (jnp.dot(h_mlp.astype(jnp.bfloat16), reg_w_ref[...],
                          preferred_element_type=jnp.float32) + reg_b_ref[...])
        pred_ref[...] = jax.nn.sigmoid(logits)                # (BT, 1)

    return kernel


# --------------------------- parameter packing --------------------------------
def _pack_params(params, *, H, Hp, MH, MHp, mlp_layers):
    """PyTorch-layout params -> kernel layout (contraction-ready, packed gates, padded, bf16).

    Zero-padding of the gate columns keeps padded hidden lanes exactly 0 through the
    recurrence (sigmoid(0)*0 cell path), so padding never leaks into the L2 norms.
    """
    # PyTorch gate order in storage is (i, f, g, o); pack as (i, f, o, g) so the
    # sigmoid gates occupy one contiguous lane block and tanh the remaining one.
    order = (0, 1, 3, 2)

    def pack_rnn(w):                                   # (L, 4, H_out, H_in)
        blocks = []
        for g in order:
            wg = jnp.transpose(w[:, g], (0, 2, 1))     # contraction-ready (L, H_in, H_out)
            wg = _pad_to(_pad_to(wg, 1, Hp), 2, Hp)    # lane-align with zero padding
            blocks.append(wg)
        return jnp.concatenate(blocks, axis=-1).astype(jnp.bfloat16)   # (L, Hp, 4Hp)

    w_ih_p = pack_rnn(params["w_ih"])
    w_hh_p = pack_rnn(params["w_hh"])
    b_p = jnp.concatenate([_pad_to(params["b"][:, g], 2, Hp) for g in order],
                          axis=-1)                     # (L, 1, 4Hp) f32

    mlp_w_p, mlp_b_p = [], []
    for i in range(mlp_layers):
        in_p = Hp if i == 0 else MHp
        w = _pad_to(_pad_to(params["mlp_w"][i].T, 0, in_p), 1, MHp)     # (in_p, MHp)
        mlp_w_p.append(w.astype(jnp.bfloat16))
        mlp_b_p.append(_pad_to(params["mlp_b"][i], 1, MHp))             # (1, MHp) f32
    reg_in_p = Hp if mlp_layers == 0 else MHp
    reg_w_p = _pad_to(params["reg_w"].T, 0, reg_in_p).astype(jnp.bfloat16)  # (reg_in_p, 1)
    return w_ih_p, w_hh_p, b_p, mlp_w_p, mlp_b_p, reg_w_p


# ------------------------------ wrapper --------------------------------------
def rnn_encoder_forward(x, params, *, layers, hidden_size, mlp_layers,
                        mlp_hidden_size):
    B, T = x.shape
    H, MH, L = hidden_size, mlp_hidden_size, layers
    Hp = _round_up(max(H, LANE), LANE)          # lane-aligned hidden width
    MHp = _round_up(max(MH, LANE), LANE)
    Bp = _round_up(max(B, BT), BT)              # sublane/tile-aligned batch
    G = 4 * Hp
    reg_in_p = Hp if mlp_layers == 0 else MHp

    # embedding lookup + time-major layout + padding are XLA glue (free with the HBM read)
    embedded = jnp.take(params["embedding"], x, axis=0)        # (B, T, H)
    emb_tm = jnp.transpose(embedded, (1, 0, 2))                # (T, B, H)
    emb_tm = _pad_to(_pad_to(emb_tm, 1, Bp), 2, Hp)            # (T, Bp, Hp)

    w_ih_p, w_hh_p, b_p, mlp_w_p, mlp_b_p, reg_w_p = _pack_params(
        params, H=H, Hp=Hp, MH=MH, MHp=MHp, mlp_layers=mlp_layers)
    reg_b_p = params["reg_b"]

    inputs = [emb_tm, w_ih_p, w_hh_p, b_p]
    in_specs = [
        pl.BlockSpec((T, BT, Hp), lambda b: (0, b, 0)),
        pl.BlockSpec((L, Hp, G), lambda b: (0, 0, 0)),
        pl.BlockSpec((L, Hp, G), lambda b: (0, 0, 0)),
        pl.BlockSpec((L, 1, G), lambda b: (0, 0, 0)),
    ]
    for i in range(mlp_layers):
        in_p = Hp if i == 0 else MHp
        inputs += [mlp_w_p[i], mlp_b_p[i]]
        in_specs += [pl.BlockSpec((in_p, MHp), lambda b: (0, 0)),
                     pl.BlockSpec((1, MHp), lambda b: (0, 0))]
    inputs += [reg_w_p, reg_b_p]
    in_specs += [pl.BlockSpec((reg_in_p, 1), lambda b: (0, 0)),
                 pl.BlockSpec((1, 1), lambda b: (0, 0))]

    out_shapes = (
        jax.ShapeDtypeStruct((T, Bp, Hp), jnp.float32),   # encoder outputs (time-major, padded)
        jax.ShapeDtypeStruct((L, Bp, Hp), jnp.float32),   # h_n
        jax.ShapeDtypeStruct((L, Bp, Hp), jnp.float32),   # c_n
        jax.ShapeDtypeStruct((Bp, Hp), jnp.float32),      # seq_emb
        jax.ShapeDtypeStruct((Bp, 1), jnp.float32),       # predict_value
    )
    out_specs = [
        pl.BlockSpec((T, BT, Hp), lambda b: (0, b, 0)),
        pl.BlockSpec((L, BT, Hp), lambda b: (0, b, 0)),
        pl.BlockSpec((L, BT, Hp), lambda b: (0, b, 0)),
        pl.BlockSpec((BT, Hp), lambda b: (b, 0)),
        pl.BlockSpec((BT, 1), lambda b: (b, 0)),
    ]
    scratch_shapes = [pltpu.VMEM((T * BT, Hp), jnp.float32),   # in-place activation slab
                      pltpu.VMEM((T * BT, G), jnp.bfloat16)]   # hoisted input projections

    # ---- size the VMEM limit from the per-core working set (x2 for double buffering),
    #      capped at 75% of the queried physical VMEM (v7x has only 64 MiB).
    def _nbytes(shape, dtype):
        return math.prod(shape) * jnp.dtype(dtype).itemsize

    in_block_bytes = (_nbytes((T, BT, Hp), jnp.float32)
                      + 2 * _nbytes((L, Hp, G), jnp.bfloat16)
                      + _nbytes((L, 1, G), jnp.float32)
                      + sum(int(a.size) * a.dtype.itemsize for a in inputs[4:]))
    out_block_bytes = (_nbytes((T, BT, Hp), jnp.float32)
                       + 2 * _nbytes((L, BT, Hp), jnp.float32)
                       + _nbytes((BT, Hp), jnp.float32)
                       + _nbytes((BT, 1), jnp.float32))
    scratch_bytes = (_nbytes((T * BT, Hp), jnp.float32)
                     + _nbytes((T * BT, G), jnp.bfloat16))
    working_set = 2 * (in_block_bytes + out_block_bytes) + scratch_bytes
    try:
        vmem_cap = int(pltpu.get_tpu_info().vmem_capacity_bytes)
    except Exception:
        vmem_cap = 64 * 1024 * 1024                      # v7x-safe fallback
    vmem_limit = int(min(0.75 * vmem_cap, max(16 * 1024 * 1024, 2 * working_set)))

    # advisory cost estimate
    lstm_flops = 4 * L * T * Bp * Hp * G                 # hoisted proj + recurrent matmuls
    mlp_flops, prev = 0, Hp
    for _ in range(mlp_layers):
        mlp_flops += 2 * Bp * prev * MHp
        prev = MHp
    mlp_flops += 2 * Bp * prev                            # regressor
    transcendentals = L * T * Bp * 5 * Hp + T * Bp + 2 * Bp
    bytes_accessed = (sum(int(a.size) * a.dtype.itemsize for a in inputs)
                      + sum(4 * math.prod(s.shape) for s in out_shapes))

    kernel = _make_kernel(L, T, BT, Hp, mlp_layers)
    fn = pl.pallas_call(
        kernel,
        out_shape=out_shapes,
        grid_spec=pltpu.PrefetchScalarGridSpec(
            num_scalar_prefetch=0,
            grid=(Bp // BT,),                            # batch shards -> both TCs on v7x
            in_specs=in_specs,
            out_specs=out_specs,
            scratch_shapes=scratch_shapes),
        compiler_params=pltpu.CompilerParams(
            dimension_semantics=("parallel",),
            vmem_limit_bytes=vmem_limit),
        cost_estimate=pl.CostEstimate(flops=int(lstm_flops + mlp_flops),
                                      transcendentals=int(transcendentals),
                                      bytes_accessed=int(bytes_accessed)),
    )
    enc_tm, h_n, c_n, seq_emb, pred = fn(*inputs)
    # strip padding, restore batch-first layout (XLA glue)
    enc_out = jnp.transpose(enc_tm[:, :B, :H], (1, 0, 2))
    return enc_out, (h_n[:, :B, :H], c_n[:, :B, :H]), seq_emb[:B, :H], pred[:B]


# --------------------------- pure-JAX reference -------------------------------
def rnn_encoder_reference(x, params, *, layers, hidden_size, mlp_layers,
                          mlp_hidden_size):
    B, T = x.shape
    H, L = hidden_size, layers
    emb = jnp.take(params["embedding"], x, axis=0)
    seq = jnp.transpose(emb, (1, 0, 2))      # (T, B, H)
    hns, cns = [], []
    for l in range(L):
        h = jnp.zeros((B, H), jnp.float32)
        c = jnp.zeros((B, H), jnp.float32)
        outs = []
        for t in range(T):
            x_t = seq[t]
            gates = []
            for g in range(4):
                gates.append(x_t @ params["w_ih"][l, g].T
                             + h @ params["w_hh"][l, g].T
                             + params["b"][l, g])
            i_g = jax.nn.sigmoid(gates[0]); f_g = jax.nn.sigmoid(gates[1])
            g_g = jnp.tanh(gates[2]);       o_g = jax.nn.sigmoid(gates[3])
            c = f_g * c + i_g * g_g
            h = o_g * jnp.tanh(c)
            outs.append(h)
        seq = jnp.stack(outs, axis=0)
        hns.append(h); cns.append(c)
    out = jnp.transpose(seq, (1, 0, 2))
    out = out / jnp.maximum(jnp.linalg.norm(out, axis=-1, keepdims=True), 1e-12)
    enc_out = out
    s = jnp.mean(out, axis=1)
    s = s / jnp.maximum(jnp.linalg.norm(s, axis=-1, keepdims=True), 1e-12)
    seq_emb = s
    hmlp = s
    for i in range(mlp_layers):
        hmlp = jnp.maximum(hmlp @ params["mlp_w"][i].T + params["mlp_b"][i], 0.0)
    pred = jax.nn.sigmoid(hmlp @ params["reg_w"].T + params["reg_b"])
    return enc_out, (jnp.stack(hns), jnp.stack(cns)), seq_emb, pred


# ------------------------------- params ---------------------------------------
def init_params(key, *, vocab_size, hidden_size, layers, mlp_layers,
                mlp_hidden_size):
    H, MH, L = hidden_size, mlp_hidden_size, layers
    ks = jax.random.split(key, 8 + 2 * mlp_layers)
    stdv = 1.0 / jnp.sqrt(jnp.float32(H))

    def u(k, shape, s=stdv):
        return jax.random.uniform(k, shape, jnp.float32, -s, s)

    params = {
        "embedding": jax.random.normal(ks[0], (vocab_size, H), jnp.float32),
        "w_ih": u(ks[1], (L, 4, H, H)),
        "w_hh": u(ks[2], (L, 4, H, H)),
        # combined b_ih + b_hh, kept 2D-broadcastable per gate
        "b": u(ks[3], (L, 4, 1, H), 2.0 * stdv),
        "mlp_w": [],
        "mlp_b": [],
    }
    for i in range(mlp_layers):
        fan_in = H if i == 0 else MH
        s = 1.0 / jnp.sqrt(jnp.float32(fan_in))
        params["mlp_w"].append(u(ks[4 + 2 * i], (MH, fan_in), s))
        params["mlp_b"].append(u(ks[5 + 2 * i], (1, MH), s))
    reg_in = H if mlp_layers == 0 else MH
    s = 1.0 / jnp.sqrt(jnp.float32(reg_in))
    params["reg_w"] = u(ks[-2], (1, reg_in), s)
    params["reg_b"] = u(ks[-1], (1, 1), s)
    return params


# --------------------------------- main ----------------------------------------
if __name__ == "__main__":
    # module config (small, consistent with RNNEncoder.__init__)
    LAYERS = 2
    VOCAB = 10
    HIDDEN = 32
    MLP_LAYERS = 2
    MLP_HIDDEN = 32
    B, T = 2, 8

    key = jax.random.PRNGKey(0)
    k_params, k_x = jax.random.split(key)
    params = init_params(k_params, vocab_size=VOCAB, hidden_size=HIDDEN,
                         layers=LAYERS, mlp_layers=MLP_LAYERS,
                         mlp_hidden_size=MLP_HIDDEN)
    x = jax.random.randint(k_x, (B, T), 0, VOCAB, dtype=jnp.int32)

    enc_out, (h_n, c_n), seq_emb, pred = rnn_encoder_forward(
        x, params, layers=LAYERS, hidden_size=HIDDEN,
        mlp_layers=MLP_LAYERS, mlp_hidden_size=MLP_HIDDEN)
    jax.block_until_ready((enc_out, h_n, c_n, seq_emb, pred))

    # sanity check against a pure-JAX f32 reference.
    # Tolerance loosened slightly vs. the f32-MXU version: the kernel now feeds the MXU
    # bf16 operands (f32 accumulation) per the performance review.
    r_enc, (r_h, r_c), r_seq, r_pred = rnn_encoder_reference(
        x, params, layers=LAYERS, hidden_size=HIDDEN,
        mlp_layers=MLP_LAYERS, mlp_hidden_size=MLP_HIDDEN)
    assert enc_out.shape == r_enc.shape and pred.shape == r_pred.shape
    assert jnp.allclose(enc_out, r_enc, atol=5e-2, rtol=5e-2)
    assert jnp.allclose(h_n, r_h, atol=5e-2, rtol=5e-2)
    assert jnp.allclose(c_n, r_c, atol=5e-2, rtol=5e-2)
    assert jnp.allclose(seq_emb, r_seq, atol=5e-2, rtol=5e-2)
    assert jnp.allclose(pred, r_pred, atol=5e-2, rtol=5e-2)

    print("KERNEL_OK")
</pallas_src>

<mosaic_0001>
module attributes {stable_mosaic.version = 11 : i64} {
  func.func @kernel(%arg0: i32, %arg1: memref<8x16x128xf32, #tpu.memory_space<vmem>>, %arg2: memref<2x128x512xbf16, #tpu.memory_space<vmem>>, %arg3: memref<2x128x512xbf16, #tpu.memory_space<vmem>>, %arg4: memref<2x1x512xf32, #tpu.memory_space<vmem>>, %arg5: memref<128x128xbf16, #tpu.memory_space<vmem>>, %arg6: memref<1x128xf32, #tpu.memory_space<vmem>>, %arg7: memref<128x128xbf16, #tpu.memory_space<vmem>>, %arg8: memref<1x128xf32, #tpu.memory_space<vmem>>, %arg9: memref<128x1xbf16, #tpu.memory_space<vmem>>, %arg10: memref<1x1xf32, #tpu.memory_space<vmem>>, %arg11: memref<8x16x128xf32, #tpu.memory_space<vmem>>, %arg12: memref<2x16x128xf32, #tpu.memory_space<vmem>>, %arg13: memref<2x16x128xf32, #tpu.memory_space<vmem>>, %arg14: memref<16x128xf32, #tpu.memory_space<vmem>>, %arg15: memref<16x1xf32, #tpu.memory_space<vmem>>, %arg16: memref<128x128xf32, #tpu.memory_space<vmem>>, %arg17: memref<128x512xbf16, #tpu.memory_space<vmem>>) attributes {dimension_semantics = [#tpu.dimension_semantics<parallel>], iteration_bounds = array<i64: 1>, scalar_prefetch = 0 : i64, scratch_operands = 2 : i64, tpu.core_type = #tpu.core_type<tc>, window_params = [{transform_indices = @transform_0, window_bounds = array<i64: 8, 16, 128>}, {pipeline_mode = #tpu.pipeline_mode<synchronous>, transform_indices = @transform_1, window_bounds = array<i64: 2, 128, 512>}, {pipeline_mode = #tpu.pipeline_mode<synchronous>, transform_indices = @transform_2, window_bounds = array<i64: 2, 128, 512>}, {pipeline_mode = #tpu.pipeline_mode<synchronous>, transform_indices = @transform_3, window_bounds = array<i64: 2, 1, 512>}, {pipeline_mode = #tpu.pipeline_mode<synchronous>, transform_indices = @transform_4, window_bounds = array<i64: 128, 128>}, {pipeline_mode = #tpu.pipeline_mode<synchronous>, transform_indices = @transform_5, window_bounds = array<i64: 1, 128>}, {pipeline_mode = #tpu.pipeline_mode<synchronous>, transform_indices = @transform_6, window_bounds = array<i64: 128, 128>}, {pipeline_mode = #tpu.pipeline_mode<synchronous>, transform_indices = @transform_7, window_bounds = array<i64: 1, 128>}, {pipeline_mode = #tpu.pipeline_mode<synchronous>, transform_indices = @transform_8, window_bounds = array<i64: 128, 1>}, {pipeline_mode = #tpu.pipeline_mode<synchronous>, transform_indices = @transform_9, window_bounds = array<i64: 1, 1>}, {transform_indices = @transform_10, window_bounds = array<i64: 8, 16, 128>}, {transform_indices = @transform_11, window_bounds = array<i64: 2, 16, 128>}, {transform_indices = @transform_12, window_bounds = array<i64: 2, 16, 128>}, {transform_indices = @transform_13, window_bounds = array<i64: 16, 128>}, {transform_indices = @transform_14, window_bounds = array<i64: 16, 1>}]} {
    %c0 = arith.constant 0 : index
    %c0_0 = arith.constant 0 : index
    %c0_1 = arith.constant 0 : index
    %0 = vector.load %arg1[%c0, %c0_0, %c0_1] : memref<8x16x128xf32, #tpu.memory_space<vmem>>, vector<8x16x128xf32>
    %1 = vector.shape_cast %0 : vector<8x16x128xf32> to vector<128x128xf32>
    %c0_2 = arith.constant 0 : index
    %c0_3 = arith.constant 0 : index
    %2 = vector.load %arg16[%c0_2, %c0_3] : memref<128x128xf32, #tpu.memory_space<vmem>>, vector<128x128xf32>
    tpu.vector_store %arg16[%c0_2, %c0_3], %1 {strides = array<i32>} : memref<128x128xf32, #tpu.memory_space<vmem>>, vector<128x128xf32>,
    %c0_4 = arith.constant 0 : index
    %c0_5 = arith.constant 0 : index
    %3 = vector.load %arg16[%c0_4, %c0_5] : memref<128x128xf32, #tpu.memory_space<vmem>>, vector<128x128xf32>
    %4 = arith.truncf %3 : vector<128x128xf32> to vector<128x128xbf16>
    %c0_6 = arith.constant 0 : index
    %c0_7 = arith.constant 0 : index
    %c0_8 = arith.constant 0 : index
    %5 = vector.load %arg2[%c0_6, %c0_7, %c0_8] : memref<2x128x512xbf16, #tpu.memory_space<vmem>>, vector<1x128x512xbf16>
    %6 = vector.shape_cast %5 : vector<1x128x512xbf16> to vector<128x512xbf16>
    %cst = arith.constant dense<0.000000e+00> : vector<128x512xf32>
    %7 = tpu.matmul %4, %6, %cst {dimension_numbers = #tpu.dot_dimension_numbers<[1], [0], [0], [1], [0, 0, 1, 1], [], []>} : vector<128x128xbf16>, vector<128x512xbf16>, vector<128x512xf32> -> vector<128x512xf32>
    %c0_9 = arith.constant 0 : index
    %c0_10 = arith.constant 0 : index
    %c0_11 = arith.constant 0 : index
    %8 = vector.load %arg4[%c0_9, %c0_10, %c0_11] : memref<2x1x512xf32, #tpu.memory_space<vmem>>, vector<1x1x512xf32>
    %9 = vector.shape_cast %8 : vector<1x1x512xf32> to vector<1x512xf32>
    %10 = vector.broadcast %9 : vector<1x512xf32> to vector<128x512xf32>
    %11 = arith.addf %7, %10 : vector<128x512xf32>
    %12 = arith.truncf %11 : vector<128x512xf32> to vector<128x512xbf16>
    %c0_12 = arith.constant 0 : index
    %c0_13 = arith.constant 0 : index
    %13 = vector.load %arg17[%c0_12, %c0_13] : memref<128x512xbf16, #tpu.memory_space<vmem>>, vector<128x512xbf16>
    tpu.vector_store %arg17[%c0_12, %c0_13], %12 {strides = array<i32>} : memref<128x512xbf16, #tpu.memory_space<vmem>>, vector<128x512xbf16>,
    %c0_14 = arith.constant 0 : index
    %c0_15 = arith.constant 0 : index
    %c0_16 = arith.constant 0 : index
    %14 = vector.load %arg3[%c0_14, %c0_15, %c0_16] : memref<2x128x512xbf16, #tpu.memory_space<vmem>>, vector<1x128x512xbf16>
    %15 = vector.shape_cast %14 : vector<1x128x512xbf16> to vector<128x512xbf16>
    %cst_17 = arith.constant 0.000000e+00 : f32
    %16 = vector.broadcast %cst_17 : f32 to vector<16x128xf32>
    %cst_18 = arith.constant 0.000000e+00 : f32
    %17 = vector.broadcast %cst_18 : f32 to vector<16x128xf32>
    %c0_i32 = arith.constant 0 : i32
    %c16_i32 = arith.constant 16 : i32
    %18 = arith.muli %c0_i32, %c16_i32 : i32
    %19 = tpu.assume_multiple %18, 16 : i32
    %20 = arith.index_cast %19 : i32 to index
    %c0_19 = arith.constant 0 : index
    %21 = vector.load %arg17[%20, %c0_19] : memref<128x512xbf16, #tpu.memory_space<vmem>>, vector<16x512xbf16>
    %22 = arith.extf %21 : vector<16x512xbf16> to vector<16x512xf32>
    %23 = arith.truncf %16 : vector<16x128xf32> to vector<16x128xbf16>
    %cst_20 = arith.constant dense<0.000000e+00> : vector<16x512xf32>
    %24 = tpu.matmul %23, %15, %cst_20 {dimension_numbers = #tpu.dot_dimension_numbers<[1], [0], [0], [1], [0, 0, 1, 1], [], []>} : vector<16x128xbf16>, vector<128x512xbf16>, vector<16x512xf32> -> vector<16x512xf32>
    %25 = arith.addf %22, %24 : vector<16x512xf32>
    %26 = vector.extract_strided_slice %25 {offsets = [0, 0], sizes = [16, 384], strides = [1, 1]} : vector<16x512xf32> to vector<16x384xf32>
    %27 = arith.negf %26 : vector<16x384xf32>
    %28 = math.exp %27 : vector<16x384xf32>
    %cst_21 = arith.constant 1.000000e+00 : f32
    %29 = vector.broadcast %cst_21 : f32 to vector<16x384xf32>
    %30 = arith.addf %29, %28 : vector<16x384xf32>
    %31 = arith.divf %29, %30 : vector<16x384xf32>
    %32 = vector.extract_strided_slice %31 {offsets = [0, 0], sizes = [16, 128], strides = [1, 1]} : vector<16x384xf32> to vector<16x128xf32>
    %33 = vector.extract_strided_slice %31 {offsets = [0, 128], sizes = [16, 128], strides = [1, 1]} : vector<16x384xf32> to vector<16x128xf32>
    %34 = vector.extract_strided_slice %31 {offsets = [0, 256], sizes = [16, 128], strides = [1, 1]} : vector<16x384xf32> to vector<16x128xf32>
    %35 = vector.extract_strided_slice %25 {offsets = [0, 384], sizes = [16, 128], strides = [1, 1]} : vector<16x512xf32> to vector<16x128xf32>
    %36 = math.tanh %35 : vector<16x128xf32>
    %37 = arith.mulf %33, %17 : vector<16x128xf32>
    %38 = arith.mulf %32, %36 : vector<16x128xf32>
    %39 = arith.addf %37, %38 : vector<16x128xf32>
    %40 = math.tanh %39 : vector<16x128xf32>
    %41 = arith.mulf %34, %40 : vector<16x128xf32>
    %42 = arith.index_cast %19 : i32 to index
    %c0_22 = arith.constant 0 : index
    %43 = vector.load %arg16[%42, %c0_22] : memref<128x128xf32, #tpu.memory_space<vmem>>, vector<16x128xf32>
    tpu.vector_store %arg16[%42, %c0_22], %41 {strides = array<i32>} : memref<128x128xf32, #tpu.memory_space<vmem>>, vector<16x128xf32>,
    %c1_i32 = arith.constant 1 : i32
    %c16_i32_23 = arith.constant 16 : i32
    %44 = arith.muli %c1_i32, %c16_i32_23 : i32
    %45 = tpu.assume_multiple %44, 16 : i32
    %46 = arith.index_cast %45 : i32 to index
    %c0_24 = arith.constant 0 : index
    %47 = vector.load %arg17[%46, %c0_24] : memref<128x512xbf16, #tpu.memory_space<vmem>>, vector<16x512xbf16>
    %48 = arith.extf %47 : vector<16x512xbf16> to vector<16x512xf32>
    %49 = arith.truncf %41 : vector<16x128xf32> to vector<16x128xbf16>
    %cst_25 = arith.constant dense<0.000000e+00> : vector<16x512xf32>
    %50 = tpu.matmul %49, %15, %cst_25 {dimension_numbers = #tpu.dot_dimension_numbers<[1], [0], [0], [1], [0, 0, 1, 1], [], []>} : vector<16x128xbf16>, vector<128x512xbf16>, vector<16x512xf32> -> vector<16x512xf32>
    %51 = arith.addf %48, %50 : vector<16x512xf32>
    %52 = vector.extract_strided_slice %51 {offsets = [0, 0], sizes = [16, 384], strides = [1, 1]} : vector<16x512xf32> to vector<16x384xf32>
    %53 = arith.negf %52 : vector<16x384xf32>
    %54 = math.exp %53 : vector<16x384xf32>
    %cst_26 = arith.constant 1.000000e+00 : f32
    %55 = vector.broadcast %cst_26 : f32 to vector<16x384xf32>
    %56 = arith.addf %55, %54 : vector<16x384xf32>
    %57 = arith.divf %55, %56 : vector<16x384xf32>
    %58 = vector.extract_strided_slice %57 {offsets = [0, 0], sizes = [16, 128], strides = [1, 1]} : vector<16x384xf32> to vector<16x128xf32>
    %59 = vector.extract_strided_slice %57 {offsets = [0, 128], sizes = [16, 128], strides = [1, 1]} : vector<16x384xf32> to vector<16x128xf32>
    %60 = vector.extract_strided_slice %57 {offsets = [0, 256], sizes = [16, 128], strides = [1, 1]} : vector<16x384xf32> to vector<16x128xf32>
    %61 = vector.extract_strided_slice %51 {offsets = [0, 384], sizes = [16, 128], strides = [1, 1]} : vector<16x512xf32> to vector<16x128xf32>
    %62 = math.tanh %61 : vector<16x128xf32>
    %63 = arith.mulf %59, %39 : vector<16x128xf32>
    %64 = arith.mulf %58, %62 : vector<16x128xf32>
    %65 = arith.addf %63, %64 : vector<16x128xf32>
    %66 = math.tanh %65 : vector<16x128xf32>
    %67 = arith.mulf %60, %66 : vector<16x128xf32>
    %68 = arith.index_cast %45 : i32 to index
    %c0_27 = arith.constant 0 : index
    %69 = vector.load %arg16[%68, %c0_27] : memref<128x128xf32, #tpu.memory_space<vmem>>, vector<16x128xf32>
    tpu.vector_store %arg16[%68, %c0_27], %67 {strides = array<i32>} : memref<128x128xf32, #tpu.memory_space<vmem>>, vector<16x128xf32>,
    %c2_i32 = arith.constant 2 : i32
    %c16_i32_28 = arith.constant 16 : i32
    %70 = arith.muli %c2_i32, %c16_i32_28 : i32
    %71 = tpu.assume_multiple %70, 16 : i32
    %72 = arith.index_cast %71 : i32 to index
    %c0_29 = arith.constant 0 : index
    %73 = vector.load %arg17[%72, %c0_29] : memref<128x512xbf16, #tpu.memory_space<vmem>>, vector<16x512xbf16>
    %74 = arith.extf %73 : vector<16x512xbf16> to vector<16x512xf32>
    %75 = arith.truncf %67 : vector<16x128xf32> to vector<16x128xbf16>
    %cst_30 = arith.constant dense<0.000000e+00> : vector<16x512xf32>
    %76 = tpu.matmul %75, %15, %cst_30 {dimension_numbers = #tpu.dot_dimension_numbers<[1], [0], [0], [1], [0, 0, 1, 1], [], []>} : vector<16x128xbf16>, vector<128x512xbf16>, vector<16x512xf32> -> vector<16x512xf32>
    %77 = arith.addf %74, %76 : vector<16x512xf32>
    %78 = vector.extract_strided_slice %77 {offsets = [0, 0], sizes = [16, 384], strides = [1, 1]} : vector<16x512xf32> to vector<16x384xf32>
    %79 = arith.negf %78 : vector<16x384xf32>
    %80 = math.exp %79 : vector<16x384xf32>
    %cst_31 = arith.constant 1.000000e+00 : f32
    %81 = vector.broadcast %cst_31 : f32 to vector<16x384xf32>
    %82 = arith.addf %81, %80 : vector<16x384xf32>
    %83 = arith.divf %81, %82 : vector<16x384xf32>
    %84 = vector.extract_strided_slice %83 {offsets = [0, 0], sizes = [16, 128], strides = [1, 1]} : vector<16x384xf32> to vector<16x128xf32>
    %85 = vector.extract_strided_slice %83 {offsets = [0, 128], sizes = [16, 128], strides = [1, 1]} : vector<16x384xf32> to vector<16x128xf32>
    %86 = vector.extract_strided_slice %83 {offsets = [0, 256], sizes = [16, 128], strides = [1, 1]} : vector<16x384xf32> to vector<16x128xf32>
    %87 = vector.extract_strided_slice %77 {offsets = [0, 384], sizes = [16, 128], strides = [1, 1]} : vector<16x512xf32> to vector<16x128xf32>
    %88 = math.tanh %87 : vector<16x128xf32>
    %89 = arith.mulf %85, %65 : vector<16x128xf32>
    %90 = arith.mulf %84, %88 : vector<16x128xf32>
    %91 = arith.addf %89, %90 : vector<16x128xf32>
    %92 = math.tanh %91 : vector<16x128xf32>
    %93 = arith.mulf %86, %92 : vector<16x128xf32>
    %94 = arith.index_cast %71 : i32 to index
    %c0_32 = arith.constant 0 : index
    %95 = vector.load %arg16[%94, %c0_32] : memref<128x128xf32, #tpu.memory_space<vmem>>, vector<16x128xf32>
    tpu.vector_store %arg16[%94, %c0_32], %93 {strides = array<i32>} : memref<128x128xf32, #tpu.memory_space<vmem>>, vector<16x128xf32>,
    %c3_i32 = arith.constant 3 : i32
    %c16_i32_33 = arith.constant 16 : i32
    %96 = arith.muli %c3_i32, %c16_i32_33 : i32
    %97 = tpu.assume_multiple %96, 16 : i32
    %98 = arith.index_cast %97 : i32 to index
    %c0_34 = arith.constant 0 : index
    %99 = vector.load %arg17[%98, %c0_34] : memref<128x512xbf16, #tpu.memory_space<vmem>>, vector<16x512xbf16>
    %100 = arith.extf %99 : vector<16x512xbf16> to vector<16x512xf32>
    %101 = arith.truncf %93 : vector<16x128xf32> to vector<16x128xbf16>
    %cst_35 = arith.constant dense<0.000000e+00> : vector<16x512xf32>
    %102 = tpu.matmul %101, %15, %cst_35 {dimension_numbers = #tpu.dot_dimension_numbers<[1], [0], [0], [1], [0, 0, 1, 1], [], []>} : vector<16x128xbf16>, vector<128x512xbf16>, vector<16x512xf32> -> vector<16x512xf32>
    %103 = arith.addf %100, %102 : vector<16x512xf32>
    %104 = vector.extract_strided_slice %103 {offsets = [0, 0], sizes = [16, 384], strides = [1, 1]} : vector<16x512xf32> to vector<16x384xf32>
    %105 = arith.negf %104 : vector<16x384xf32>
    %106 = math.exp %105 : vector<16x384xf32>
    %cst_36 = arith.constant 1.000000e+00 : f32
    %107 = vector.broadcast %cst_36 : f32 to vector<16x384xf32>
    %108 = arith.addf %107, %106 : vector<16x384xf32>
    %109 = arith.divf %107, %108 : vector<16x384xf32>
    %110 = vector.extract_strided_slice %109 {offsets = [0, 0], sizes = [16, 128], strides = [1, 1]} : vector<16x384xf32> to vector<16x128xf32>
    %111 = vector.extract_strided_slice %109 {offsets = [0, 128], sizes = [16, 128], strides = [1, 1]} : vector<16x384xf32> to vector<16x128xf32>
    %112 = vector.extract_strided_slice %109 {offsets = [0, 256], sizes = [16, 128], strides = [1, 1]} : vector<16x384xf32> to vector<16x128xf32>
    %113 = vector.extract_strided_slice %103 {offsets = [0, 384], sizes = [16, 128], strides = [1, 1]} : vector<16x512xf32> to vector<16x128xf32>
    %114 = math.tanh %113 : vector<16x128xf32>
    %115 = arith.mulf %111, %91 : vector<16x128xf32>
    %116 = arith.mulf %110, %114 : vector<16x128xf32>
    %117 = arith.addf %115, %116 : vector<16x128xf32>
    %118 = math.tanh %117 : vector<16x128xf32>
    %119 = arith.mulf %112, %118 : vector<16x128xf32>
    %120 = arith.index_cast %97 : i32 to index
    %c0_37 = arith.constant 0 : index
    %121 = vector.load %arg16[%120, %c0_37] : memref<128x128xf32, #tpu.memory_space<vmem>>, vector<16x128xf32>
    tpu.vector_store %arg16[%120, %c0_37], %119 {strides = array<i32>} : memref<128x128xf32, #tpu.memory_space<vmem>>, vector<16x128xf32>,
    %c4_i32 = arith.constant 4 : i32
    %c16_i32_38 = arith.constant 16 : i32
    %122 = arith.muli %c4_i32, %c16_i32_38 : i32
    %123 = tpu.assume_multiple %122, 16 : i32
    %124 = arith.index_cast %123 : i32 to index
    %c0_39 = arith.constant 0 : index
    %125 = vector.load %arg17[%124, %c0_39] : memref<128x512xbf16, #tpu.memory_space<vmem>>, vector<16x512xbf16>
    %126 = arith.extf %125 : vector<16x512xbf16> to vector<16x512xf32>
    %127 = arith.truncf %119 : vector<16x128xf32> to vector<16x128xbf16>
    %cst_40 = arith.constant dense<0.000000e+00> : vector<16x512xf32>
    %128 = tpu.matmul %127, %15, %cst_40 {dimension_numbers = #tpu.dot_dimension_numbers<[1], [0], [0], [1], [0, 0, 1, 1], [], []>} : vector<16x128xbf16>, vector<128x512xbf16>, vector<16x512xf32> -> vector<16x512xf32>
    %129 = arith.addf %126, %128 : vector<16x512xf32>
    %130 = vector.extract_strided_slice %129 {offsets = [0, 0], sizes = [16, 384], strides = [1, 1]} : vector<16x512xf32> to vector<16x384xf32>
    %131 = arith.negf %130 : vector<16x384xf32>
    %132 = math.exp %131 : vector<16x384xf32>
    %cst_41 = arith.constant 1.000000e+00 : f32
    %133 = vector.broadcast %cst_41 : f32 to vector<16x384xf32>
    %134 = arith.addf %133, %132 : vector<16x384xf32>
    %135 = arith.divf %133, %134 : vector<16x384xf32>
    %136 = vector.extract_strided_slice %135 {offsets = [0, 0], sizes = [16, 128], strides = [1, 1]} : vector<16x384xf32> to vector<16x128xf32>
    %137 = vector.extract_strided_slice %135 {offsets = [0, 128], sizes = [16, 128], strides = [1, 1]} : vector<16x384xf32> to vector<16x128xf32>
    %138 = vector.extract_strided_slice %135 {offsets = [0, 256], sizes = [16, 128], strides = [1, 1]} : vector<16x384xf32> to vector<16x128xf32>
    %139 = vector.extract_strided_slice %129 {offsets = [0, 384], sizes = [16, 128], strides = [1, 1]} : vector<16x512xf32> to vector<16x128xf32>
    %140 = math.tanh %139 : vector<16x128xf32>
    %141 = arith.mulf %137, %117 : vector<16x128xf32>
    %142 = arith.mulf %136, %140 : vector<16x128xf32>
    %143 = arith.addf %141, %142 : vector<16x128xf32>
    %144 = math.tanh %143 : vector<16x128xf32>
    %145 = arith.mulf %138, %144 : vector<16x128xf32>
    %146 = arith.index_cast %123 : i32 to index
    %c0_42 = arith.constant 0 : index
    %147 = vector.load %arg16[%146, %c0_42] : memref<128x128xf32, #tpu.memory_space<vmem>>, vector<16x128xf32>
    tpu.vector_store %arg16[%146, %c0_42], %145 {strides = array<i32>} : memref<128x128xf32, #tpu.memory_space<vmem>>, vector<16x128xf32>,
    %c5_i32 = arith.constant 5 : i32
    %c16_i32_43 = arith.constant 16 : i32
    %148 = arith.muli %c5_i32, %c16_i32_43 : i32
    %149 = tpu.assume_multiple %148, 16 : i32
    %150 = arith.index_cast %149 : i32 to index
    %c0_44 = arith.constant 0 : index
    %151 = vector.load %arg17[%150, %c0_44] : memref<128x512xbf16, #tpu.memory_space<vmem>>, vector<16x512xbf16>
    %152 = arith.extf %151 : vector<16x512xbf16> to vector<16x512xf32>
    %153 = arith.truncf %145 : vector<16x128xf32> to vector<16x128xbf16>
    %cst_45 = arith.constant dense<0.000000e+00> : vector<16x512xf32>
    %154 = tpu.matmul %153, %15, %cst_45 {dimension_numbers = #tpu.dot_dimension_numbers<[1], [0], [0], [1], [0, 0, 1, 1], [], []>} : vector<16x128xbf16>, vector<128x512xbf16>, vector<16x512xf32> -> vector<16x512xf32>
    %155 = arith.addf %152, %154 : vector<16x512xf32>
    %156 = vector.extract_strided_slice %155 {offsets = [0, 0], sizes = [16, 384], strides = [1, 1]} : vector<16x512xf32> to vector<16x384xf32>
    %157 = arith.negf %156 : vector<16x384xf32>
    %158 = math.exp %157 : vector<16x384xf32>
    %cst_46 = arith.constant 1.000000e+00 : f32
    %159 = vector.broadcast %cst_46 : f32 to vector<16x384xf32>
    %160 = arith.addf %159, %158 : vector<16x384xf32>
    %161 = arith.divf %159, %160 : vector<16x384xf32>
    %162 = vector.extract_strided_slice %161 {offsets = [0, 0], sizes = [16, 128], strides = [1, 1]} : vector<16x384xf32> to vector<16x128xf32>
    %163 = vector.extract_strided_slice %161 {offsets = [0, 128], sizes = [16, 128], strides = [1, 1]} : vector<16x384xf32> to vector<16x128xf32>
    %164 = vector.extract_strided_slice %161 {offsets = [0, 256], sizes = [16, 128], strides = [1, 1]} : vector<16x384xf32> to vector<16x128xf32>
    %165 = vector.extract_strided_slice %155 {offsets = [0, 384], sizes = [16, 128], strides = [1, 1]} : vector<16x512xf32> to vector<16x128xf32>
    %166 = math.tanh %165 : vector<16x128xf32>
    %167 = arith.mulf %163, %143 : vector<16x128xf32>
    %168 = arith.mulf %162, %166 : vector<16x128xf32>
    %169 = arith.addf %167, %168 : vector<16x128xf32>
    %170 = math.tanh %169 : vector<16x128xf32>
    %171 = arith.mulf %164, %170 : vector<16x128xf32>
    %172 = arith.index_cast %149 : i32 to index
    %c0_47 = arith.constant 0 : index
    %173 = vector.load %arg16[%172, %c0_47] : memref<128x128xf32, #tpu.memory_space<vmem>>, vector<16x128xf32>
    tpu.vector_store %arg16[%172, %c0_47], %171 {strides = array<i32>} : memref<128x128xf32, #tpu.memory_space<vmem>>, vector<16x128xf32>,
    %c6_i32 = arith.constant 6 : i32
    %c16_i32_48 = arith.constant 16 : i32
    %174 = arith.muli %c6_i32, %c16_i32_48 : i32
    %175 = tpu.assume_multiple %174, 16 : i32
    %176 = arith.index_cast %175 : i32 to index
    %c0_49 = arith.constant 0 : index
    %177 = vector.load %arg17[%176, %c0_49] : memref<128x512xbf16, #tpu.memory_space<vmem>>, vector<16x512xbf16>
    %178 = arith.extf %177 : vector<16x512xbf16> to vector<16x512xf32>
    %179 = arith.truncf %171 : vector<16x128xf32> to vector<16x128xbf16>
    %cst_50 = arith.constant dense<0.000000e+00> : vector<16x512xf32>
    %180 = tpu.matmul %179, %15, %cst_50 {dimension_numbers = #tpu.dot_dimension_numbers<[1], [0], [0], [1], [0, 0, 1, 1], [], []>} : vector<16x128xbf16>, vector<128x512xbf16>, vector<16x512xf32> -> vector<16x512xf32>
    %181 = arith.addf %178, %180 : vector<16x512xf32>
    %182 = vector.extract_strided_slice %181 {offsets = [0, 0], sizes = [16, 384], strides = [1, 1]} : vector<16x512xf32> to vector<16x384xf32>
    %183 = arith.negf %182 : vector<16x384xf32>
    %184 = math.exp %183 : vector<16x384xf32>
    %cst_51 = arith.constant 1.000000e+00 : f32
    %185 = vector.broadcast %cst_51 : f32 to vector<16x384xf32>
    %186 = arith.addf %185, %184 : vector<16x384xf32>
    %187 = arith.divf %185, %186 : vector<16x384xf32>
    %188 = vector.extract_strided_slice %187 {offsets = [0, 0], sizes = [16, 128], strides = [1, 1]} : vector<16x384xf32> to vector<16x128xf32>
    %189 = vector.extract_strided_slice %187 {offsets = [0, 128], sizes = [16, 128], strides = [1, 1]} : vector<16x384xf32> to vector<16x128xf32>
    %190 = vector.extract_strided_slice %187 {offsets = [0, 256], sizes = [16, 128], strides = [1, 1]} : vector<16x384xf32> to vector<16x128xf32>
    %191 = vector.extract_strided_slice %181 {offsets = [0, 384], sizes = [16, 128], strides = [1, 1]} : vector<16x512xf32> to vector<16x128xf32>
    %192 = math.tanh %191 : vector<16x128xf32>
    %193 = arith.mulf %189, %169 : vector<16x128xf32>
    %194 = arith.mulf %188, %192 : vector<16x128xf32>
    %195 = arith.addf %193, %194 : vector<16x128xf32>
    %196 = math.tanh %195 : vector<16x128xf32>
    %197 = arith.mulf %190, %196 : vector<16x128xf32>
    %198 = arith.index_cast %175 : i32 to index
    %c0_52 = arith.constant 0 : index
    %199 = vector.load %arg16[%198, %c0_52] : memref<128x128xf32, #tpu.memory_space<vmem>>, vector<16x128xf32>
    tpu.vector_store %arg16[%198, %c0_52], %197 {strides = array<i32>} : memref<128x128xf32, #tpu.memory_space<vmem>>, vector<16x128xf32>,
    %c7_i32 = arith.constant 7 : i32
    %c16_i32_53 = arith.constant 16 : i32
    %200 = arith.muli %c7_i32, %c16_i32_53 : i32
    %201 = tpu.assume_multiple %200, 16 : i32
    %202 = arith.index_cast %201 : i32 to index
    %c0_54 = arith.constant 0 : index
    %203 = vector.load %arg17[%202, %c0_54] : memref<128x512xbf16, #tpu.memory_space<vmem>>, vector<16x512xbf16>
    %204 = arith.extf %203 : vector<16x512xbf16> to vector<16x512xf32>
    %205 = arith.truncf %197 : vector<16x128xf32> to vector<16x128xbf16>
    %cst_55 = arith.constant dense<0.000000e+00> : vector<16x512xf32>
    %206 = tpu.matmul %205, %15, %cst_55 {dimension_numbers = #tpu.dot_dimension_numbers<[1], [0], [0], [1], [0, 0, 1, 1], [], []>} : vector<16x128xbf16>, vector<128x512xbf16>, vector<16x512xf32> -> vector<16x512xf32>
    %207 = arith.addf %204, %206 : vector<16x512xf32>
    %208 = vector.extract_strided_slice %207 {offsets = [0, 0], sizes = [16, 384], strides = [1, 1]} : vector<16x512xf32> to vector<16x384xf32>
    %209 = arith.negf %208 : vector<16x384xf32>
    %210 = math.exp %209 : vector<16x384xf32>
    %cst_56 = arith.constant 1.000000e+00 : f32
    %211 = vector.broadcast %cst_56 : f32 to vector<16x384xf32>
    %212 = arith.addf %211, %210 : vector<16x384xf32>
    %213 = arith.divf %211, %212 : vector<16x384xf32>
    %214 = vector.extract_strided_slice %213 {offsets = [0, 0], sizes = [16, 128], strides = [1, 1]} : vector<16x384xf32> to vector<16x128xf32>
    %215 = vector.extract_strided_slice %213 {offsets = [0, 128], sizes = [16, 128], strides = [1, 1]} : vector<16x384xf32> to vector<16x128xf32>
    %216 = vector.extract_strided_slice %213 {offsets = [0, 256], sizes = [16, 128], strides = [1, 1]} : vector<16x384xf32> to vector<16x128xf32>
    %217 = vector.extract_strided_slice %207 {offsets = [0, 384], sizes = [16, 128], strides = [1, 1]} : vector<16x512xf32> to vector<16x128xf32>
    %218 = math.tanh %217 : vector<16x128xf32>
    %219 = arith.mulf %215, %195 : vector<16x128xf32>
    %220 = arith.mulf %214, %218 : vector<16x128xf32>
    %221 = arith.addf %219, %220 : vector<16x128xf32>
    %222 = math.tanh %221 : vector<16x128xf32>
    %223 = arith.mulf %216, %222 : vector<16x128xf32>
    %224 = arith.index_cast %201 : i32 to index
    %c0_57 = arith.constant 0 : index
    %225 = vector.load %arg16[%224, %c0_57] : memref<128x128xf32, #tpu.memory_space<vmem>>, vector<16x128xf32>
    tpu.vector_store %arg16[%224, %c0_57], %223 {strides = array<i32>} : memref<128x128xf32, #tpu.memory_space<vmem>>, vector<16x128xf32>,
    %c8_i32 = arith.constant 8 : i32
    %c0_58 = arith.constant 0 : index
    %c0_59 = arith.constant 0 : index
    %c0_60 = arith.constant 0 : index
    %226 = vector.load %arg12[%c0_58, %c0_59, %c0_60] : memref<2x16x128xf32, #tpu.memory_space<vmem>>, vector<1x16x128xf32>
    %227 = vector.shape_cast %226 : vector<1x16x128xf32> to vector<16x128xf32>
    %228 = vector.shape_cast %223 : vector<16x128xf32> to vector<1x16x128xf32>
    tpu.vector_store %arg12[%c0_58, %c0_59, %c0_60], %228 {strides = array<i32>} : memref<2x16x128xf32, #tpu.memory_space<vmem>>, vector<1x16x128xf32>,
    %c0_61 = arith.constant 0 : index
    %c0_62 = arith.constant 0 : index
    %c0_63 = arith.constant 0 : index
    %229 = vector.load %arg13[%c0_61, %c0_62, %c0_63] : memref<2x16x128xf32, #tpu.memory_space<vmem>>, vector<1x16x128xf32>
    %230 = vector.shape_cast %229 : vector<1x16x128xf32> to vector<16x128xf32>
    %231 = vector.shape_cast %221 : vector<16x128xf32> to vector<1x16x128xf32>
    tpu.vector_store %arg13[%c0_61, %c0_62, %c0_63], %231 {strides = array<i32>} : memref<2x16x128xf32, #tpu.memory_space<vmem>>, vector<1x16x128xf32>,
    %c0_64 = arith.constant 0 : index
    %c0_65 = arith.constant 0 : index
    %232 = vector.load %arg16[%c0_64, %c0_65] : memref<128x128xf32, #tpu.memory_space<vmem>>, vector<128x128xf32>
    %233 = arith.truncf %232 : vector<128x128xf32> to vector<128x128xbf16>
    %c1 = arith.constant 1 : index
    %c0_66 = arith.constant 0 : index
    %c0_67 = arith.constant 0 : index
    %234 = vector.load %arg2[%c1, %c0_66, %c0_67] : memref<2x128x512xbf16, #tpu.memory_space<vmem>>, vector<1x128x512xbf16>
    %235 = vector.shape_cast %234 : vector<1x128x512xbf16> to vector<128x512xbf16>
    %cst_68 = arith.constant dense<0.000000e+00> : vector<128x512xf32>
    %236 = tpu.matmul %233, %235, %cst_68 {dimension_numbers = #tpu.dot_dimension_numbers<[1], [0], [0], [1], [0, 0, 1, 1], [], []>} : vector<128x128xbf16>, vector<128x512xbf16>, vector<128x512xf32> -> vector<128x512xf32>
    %c1_69 = arith.constant 1 : index
    %c0_70 = arith.constant 0 : index
    %c0_71 = arith.constant 0 : index
    %237 = vector.load %arg4[%c1_69, %c0_70, %c0_71] : memref<2x1x512xf32, #tpu.memory_space<vmem>>, vector<1x1x512xf32>
    %238 = vector.shape_cast %237 : vector<1x1x512xf32> to vector<1x512xf32>
    %239 = vector.broadcast %238 : vector<1x512xf32> to vector<128x512xf32>
    %240 = arith.addf %236, %239 : vector<128x512xf32>
    %241 = arith.truncf %240 : vector<128x512xf32> to vector<128x512xbf16>
    %c0_72 = arith.constant 0 : index
    %c0_73 = arith.constant 0 : index
    %242 = vector.load %arg17[%c0_72, %c0_73] : memref<128x512xbf16, #tpu.memory_space<vmem>>, vector<128x512xbf16>
    tpu.vector_store %arg17[%c0_72, %c0_73], %241 {strides = array<i32>} : memref<128x512xbf16, #tpu.memory_space<vmem>>, vector<128x512xbf16>,
    %c1_74 = arith.constant 1 : index
    %c0_75 = arith.constant 0 : index
    %c0_76 = arith.constant 0 : index
    %243 = vector.load %arg3[%c1_74, %c0_75, %c0_76] : memref<2x128x512xbf16, #tpu.memory_space<vmem>>, vector<1x128x512xbf16>
    %244 = vector.shape_cast %243 : vector<1x128x512xbf16> to vector<128x512xbf16>
    %cst_77 = arith.constant 0.000000e+00 : f32
    %245 = vector.broadcast %cst_77 : f32 to vector<16x128xf32>
    %cst_78 = arith.constant 0.000000e+00 : f32
    %246 = vector.broadcast %cst_78 : f32 to vector<16x128xf32>
    %c0_i32_79 = arith.constant 0 : i32
    %c16_i32_80 = arith.constant 16 : i32
    %247 = arith.muli %c0_i32_79, %c16_i32_80 : i32
    %248 = tpu.assume_multiple %247, 16 : i32
    %249 = arith.index_cast %248 : i32 to index
    %c0_81 = arith.constant 0 : index
    %250 = vector.load %arg17[%249, %c0_81] : memref<128x512xbf16, #tpu.memory_space<vmem>>, vector<16x512xbf16>
    %251 = arith.extf %250 : vector<16x512xbf16> to vector<16x512xf32>
    %252 = arith.truncf %245 : vector<16x128xf32> to vector<16x128xbf16>
    %cst_82 = arith.constant dense<0.000000e+00> : vector<16x512xf32>
    %253 = tpu.matmul %252, %244, %cst_82 {dimension_numbers = #tpu.dot_dimension_numbers<[1], [0], [0], [1], [0, 0, 1, 1], [], []>} : vector<16x128xbf16>, vector<128x512xbf16>, vector<16x512xf32> -> vector<16x512xf32>
    %254 = arith.addf %251, %253 : vector<16x512xf32>
    %255 = vector.extract_strided_slice %254 {offsets = [0, 0], sizes = [16, 384], strides = [1, 1]} : vector<16x512xf32> to vector<16x384xf32>
    %256 = arith.negf %255 : vector<16x384xf32>
    %257 = math.exp %256 : vector<16x384xf32>
    %cst_83 = arith.constant 1.000000e+00 : f32
    %258 = vector.broadcast %cst_83 : f32 to vector<16x384xf32>
    %259 = arith.addf %258, %257 : vector<16x384xf32>
    %260 = arith.divf %258, %259 : vector<16x384xf32>
    %261 = vector.extract_strided_slice %260 {offsets = [0, 0], sizes = [16, 128], strides = [1, 1]} : vector<16x384xf32> to vector<16x128xf32>
    %262 = vector.extract_strided_slice %260 {offsets = [0, 128], sizes = [16, 128], strides = [1, 1]} : vector<16x384xf32> to vector<16x128xf32>
    %263 = vector.extract_strided_slice %260 {offsets = [0, 256], sizes = [16, 128], strides = [1, 1]} : vector<16x384xf32> to vector<16x128xf32>
    %264 = vector.extract_strided_slice %254 {offsets = [0, 384], sizes = [16, 128], strides = [1, 1]} : vector<16x512xf32> to vector<16x128xf32>
    %265 = math.tanh %264 : vector<16x128xf32>
    %266 = arith.mulf %262, %246 : vector<16x128xf32>
    %267 = arith.mulf %261, %265 : vector<16x128xf32>
    %268 = arith.addf %266, %267 : vector<16x128xf32>
    %269 = math.tanh %268 : vector<16x128xf32>
    %270 = arith.mulf %263, %269 : vector<16x128xf32>
    %271 = arith.index_cast %248 : i32 to index
    %c0_84 = arith.constant 0 : index
    %272 = vector.load %arg16[%271, %c0_84] : memref<128x128xf32, #tpu.memory_space<vmem>>, vector<16x128xf32>
    tpu.vector_store %arg16[%271, %c0_84], %270 {strides = array<i32>} : memref<128x128xf32, #tpu.memory_space<vmem>>, vector<16x128xf32>,
    %c1_i32_85 = arith.constant 1 : i32
    %c16_i32_86 = arith.constant 16 : i32
    %273 = arith.muli %c1_i32_85, %c16_i32_86 : i32
    %274 = tpu.assume_multiple %273, 16 : i32
    %275 = arith.index_cast %274 : i32 to index
    %c0_87 = arith.constant 0 : index
    %276 = vector.load %arg17[%275, %c0_87] : memref<128x512xbf16, #tpu.memory_space<vmem>>, vector<16x512xbf16>
    %277 = arith.extf %276 : vector<16x512xbf16> to vector<16x512xf32>
    %278 = arith.truncf %270 : vector<16x128xf32> to vector<16x128xbf16>
    %cst_88 = arith.constant dense<0.000000e+00> : vector<16x512xf32>
    %279 = tpu.matmul %278, %244, %cst_88 {dimension_numbers = #tpu.dot_dimension_numbers<[1], [0], [0], [1], [0, 0, 1, 1], [], []>} : vector<16x128xbf16>, vector<128x512xbf16>, vector<16x512xf32> -> vector<16x512xf32>
    %280 = arith.addf %277, %279 : vector<16x512xf32>
    %281 = vector.extract_strided_slice %280 {offsets = [0, 0], sizes = [16, 384], strides = [1, 1]} : vector<16x512xf32> to vector<16x384xf32>
    %282 = arith.negf %281 : vector<16x384xf32>
    %283 = math.exp %282 : vector<16x384xf32>
    %cst_89 = arith.constant 1.000000e+00 : f32
    %284 = vector.broadcast %cst_89 : f32 to vector<16x384xf32>
    %285 = arith.addf %284, %283 : vector<16x384xf32>
    %286 = arith.divf %284, %285 : vector<16x384xf32>
    %287 = vector.extract_strided_slice %286 {offsets = [0, 0], sizes = [16, 128], strides = [1, 1]} : vector<16x384xf32> to vector<16x128xf32>
    %288 = vector.extract_strided_slice %286 {offsets = [0, 128], sizes = [16, 128], strides = [1, 1]} : vector<16x384xf32> to vector<16x128xf32>
    %289 = vector.extract_strided_slice %286 {offsets = [0, 256], sizes = [16, 128], strides = [1, 1]} : vector<16x384xf32> to vector<16x128xf32>
    %290 = vector.extract_strided_slice %280 {offsets = [0, 384], sizes = [16, 128], strides = [1, 1]} : vector<16x512xf32> to vector<16x128xf32>
    %291 = math.tanh %290 : vector<16x128xf32>
    %292 = arith.mulf %288, %268 : vector<16x128xf32>
    %293 = arith.mulf %287, %291 : vector<16x128xf32>
    %294 = arith.addf %292, %293 : vector<16x128xf32>
    %295 = math.tanh %294 : vector<16x128xf32>
    %296 = arith.mulf %289, %295 : vector<16x128xf32>
    %297 = arith.index_cast %274 : i32 to index
    %c0_90 = arith.constant 0 : index
    %298 = vector.load %arg16[%297, %c0_90] : memref<128x128xf32, #tpu.memory_space<vmem>>, vector<16x128xf32>
    tpu.vector_store %arg16[%297, %c0_90], %296 {strides = array<i32>} : memref<128x128xf32, #tpu.memory_space<vmem>>, vector<16x128xf32>,
    %c2_i32_91 = arith.constant 2 : i32
    %c16_i32_92 = arith.constant 16 : i32
    %299 = arith.muli %c2_i32_91, %c16_i32_92 : i32
    %300 = tpu.assume_multiple %299, 16 : i32
    %301 = arith.index_cast %300 : i32 to index
    %c0_93 = arith.constant 0 : index
    %302 = vector.load %arg17[%301, %c0_93] : memref<128x512xbf16, #tpu.memory_space<vmem>>, vector<16x512xbf16>
    %303 = arith.extf %302 : vector<16x512xbf16> to vector<16x512xf32>
    %304 = arith.truncf %296 : vector<16x128xf32> to vector<16x128xbf16>
    %cst_94 = arith.constant dense<0.000000e+00> : vector<16x512xf32>
    %305 = tpu.matmul %304, %244, %cst_94 {dimension_numbers = #tpu.dot_dimension_numbers<[1], [0], [0], [1], [0, 0, 1, 1], [], []>} : vector<16x128xbf16>, vector<128x512xbf16>, vector<16x512xf32> -> vector<16x512xf32>
    %306 = arith.addf %303, %305 : vector<16x512xf32>
    %307 = vector.extract_strided_slice %306 {offsets = [0, 0], sizes = [16, 384], strides = [1, 1]} : vector<16x512xf32> to vector<16x384xf32>
    %308 = arith.negf %307 : vector<16x384xf32>
    %309 = math.exp %308 : vector<16x384xf32>
    %cst_95 = arith.constant 1.000000e+00 : f32
    %310 = vector.broadcast %cst_95 : f32 to vector<16x384xf32>
    %311 = arith.addf %310, %309 : vector<16x384xf32>
    %312 = arith.divf %310, %311 : vector<16x384xf32>
    %313 = vector.extract_strided_slice %312 {offsets = [0, 0], sizes = [16, 128], strides = [1, 1]} : vector<16x384xf32> to vector<16x128xf32>
    %314 = vector.extract_strided_slice %312 {offsets = [0, 128], sizes = [16, 128], strides = [1, 1]} : vector<16x384xf32> to vector<16x128xf32>
    %315 = vector.extract_strided_slice %312 {offsets = [0, 256], sizes = [16, 128], strides = [1, 1]} : vector<16x384xf32> to vector<16x128xf32>
    %316 = vector.extract_strided_slice %306 {offsets = [0, 384], sizes = [16, 128], strides = [1, 1]} : vector<16x512xf32> to vector<16x128xf32>
    %317 = math.tanh %316 : vector<16x128xf32>
    %318 = arith.mulf %314, %294 : vector<16x128xf32>
    %319 = arith.mulf %313, %317 : vector<16x128xf32>
    %320 = arith.addf %318, %319 : vector<16x128xf32>
    %321 = math.tanh %320 : vector<16x128xf32>
    %322 = arith.mulf %315, %321 : vector<16x128xf32>
    %323 = arith.index_cast %300 : i32 to index
    %c0_96 = arith.constant 0 : index
    %324 = vector.load %arg16[%323, %c0_96] : memref<128x128xf32, #tpu.memory_space<vmem>>, vector<16x128xf32>
    tpu.vector_store %arg16[%323, %c0_96], %322 {strides = array<i32>} : memref<128x128xf32, #tpu.memory_space<vmem>>, vector<16x128xf32>,
    %c3_i32_97 = arith.constant 3 : i32
    %c16_i32_98 = arith.constant 16 : i32
    %325 = arith.muli %c3_i32_97, %c16_i32_98 : i32
    %326 = tpu.assume_multiple %325, 16 : i32
    %327 = arith.index_cast %326 : i32 to index
    %c0_99 = arith.constant 0 : index
    %328 = vector.load %arg17[%327, %c0_99] : memref<128x512xbf16, #tpu.memory_space<vmem>>, vector<16x512xbf16>
    %329 = arith.extf %328 : vector<16x512xbf16> to vector<16x512xf32>
    %330 = arith.truncf %322 : vector<16x128xf32> to vector<16x128xbf16>
    %cst_100 = arith.constant dense<0.000000e+00> : vector<16x512xf32>
    %331 = tpu.matmul %330, %244, %cst_100 {dimension_numbers = #tpu.dot_dimension_numbers<[1], [0], [0], [1], [0, 0, 1, 1], [], []>} : vector<16x128xbf16>, vector<128x512xbf16>, vector<16x512xf32> -> vector<16x512xf32>
    %332 = arith.addf %329, %331 : vector<16x512xf32>
    %333 = vector.extract_strided_slice %332 {offsets = [0, 0], sizes = [16, 384], strides = [1, 1]} : vector<16x512xf32> to vector<16x384xf32>
    %334 = arith.negf %333 : vector<16x384xf32>
    %335 = math.exp %334 : vector<16x384xf32>
    %cst_101 = arith.constant 1.000000e+00 : f32
    %336 = vector.broadcast %cst_101 : f32 to vector<16x384xf32>
    %337 = arith.addf %336, %335 : vector<16x384xf32>
    %338 = arith.divf %336, %337 : vector<16x384xf32>
    %339 = vector.extract_strided_slice %338 {offsets = [0, 0], sizes = [16, 128], strides = [1, 1]} : vector<16x384xf32> to vector<16x128xf32>
    %340 = vector.extract_strided_slice %338 {offsets = [0, 128], sizes = [16, 128], strides = [1, 1]} : vector<16x384xf32> to vector<16x128xf32>
    %341 = vector.extract_strided_slice %338 {offsets = [0, 256], sizes = [16, 128], strides = [1, 1]} : vector<16x384xf32> to vector<16x128xf32>
    %342 = vector.extract_strided_slice %332 {offsets = [0, 384], sizes = [16, 128], strides = [1, 1]} : vector<16x512xf32> to vector<16x128xf32>
    %343 = math.tanh %342 : vector<16x128xf32>
    %344 = arith.mulf %340, %320 : vector<16x128xf32>
    %345 = arith.mulf %339, %343 : vector<16x128xf32>
    %346 = arith.addf %344, %345 : vector<16x128xf32>
    %347 = math.tanh %346 : vector<16x128xf32>
    %348 = arith.mulf %341, %347 : vector<16x128xf32>
    %349 = arith.index_cast %326 : i32 to index
    %c0_102 = arith.constant 0 : index
    %350 = vector.load %arg16[%349, %c0_102] : memref<128x128xf32, #tpu.memory_space<vmem>>, vector<16x128xf32>
    tpu.vector_store %arg16[%349, %c0_102], %348 {strides = array<i32>} : memref<128x128xf32, #tpu.memory_space<vmem>>, vector<16x128xf32>,
    %c4_i32_103 = arith.constant 4 : i32
    %c16_i32_104 = arith.constant 16 : i32
    %351 = arith.muli %c4_i32_103, %c16_i32_104 : i32
    %352 = tpu.assume_multiple %351, 16 : i32
    %353 = arith.index_cast %352 : i32 to index
    %c0_105 = arith.constant 0 : index
    %354 = vector.load %arg17[%353, %c0_105] : memref<128x512xbf16, #tpu.memory_space<vmem>>, vector<16x512xbf16>
    %355 = arith.extf %354 : vector<16x512xbf16> to vector<16x512xf32>
    %356 = arith.truncf %348 : vector<16x128xf32> to vector<16x128xbf16>
    %cst_106 = arith.constant dense<0.000000e+00> : vector<16x512xf32>
    %357 = tpu.matmul %356, %244, %cst_106 {dimension_numbers = #tpu.dot_dimension_numbers<[1], [0], [0], [1], [0, 0, 1, 1], [], []>} : vector<16x128xbf16>, vector<128x512xbf16>, vector<16x512xf32> -> vector<16x512xf32>
    %358 = arith.addf %355, %357 : vector<16x512xf32>
    %359 = vector.extract_strided_slice %358 {offsets = [0, 0], sizes = [16, 384], strides = [1, 1]} : vector<16x512xf32> to vector<16x384xf32>
    %360 = arith.negf %359 : vector<16x384xf32>
    %361 = math.exp %360 : vector<16x384xf32>
    %cst_107 = arith.constant 1.000000e+00 : f32
    %362 = vector.broadcast %cst_107 : f32 to vector<16x384xf32>
    %363 = arith.addf %362, %361 : vector<16x384xf32>
    %364 = arith.divf %362, %363 : vector<16x384xf32>
    %365 = vector.extract_strided_slice %364 {offsets = [0, 0], sizes = [16, 128], strides = [1, 1]} : vector<16x384xf32> to vector<16x128xf32>
    %366 = vector.extract_strided_slice %364 {offsets = [0, 128], sizes = [16, 128], strides = [1, 1]} : vector<16x384xf32> to vector<16x128xf32>
    %367 = vector.extract_strided_slice %364 {offsets = [0, 256], sizes = [16, 128], strides = [1, 1]} : vector<16x384xf32> to vector<16x128xf32>
    %368 = vector.extract_strided_slice %358 {offsets = [0, 384], sizes = [16, 128], strides = [1, 1]} : vector<16x512xf32> to vector<16x128xf32>
    %369 = math.tanh %368 : vector<16x128xf32>
    %370 = arith.mulf %366, %346 : vector<16x128xf32>
    %371 = arith.mulf %365, %369 : vector<16x128xf32>
    %372 = arith.addf %370, %371 : vector<16x128xf32>
    %373 = math.tanh %372 : vector<16x128xf32>
    %374 = arith.mulf %367, %373 : vector<16x128xf32>
    %375 = arith.index_cast %352 : i32 to index
    %c0_108 = arith.constant 0 : index
    %376 = vector.load %arg16[%375, %c0_108] : memref<128x128xf32, #tpu.memory_space<vmem>>, vector<16x128xf32>
    tpu.vector_store %arg16[%375, %c0_108], %374 {strides = array<i32>} : memref<128x128xf32, #tpu.memory_space<vmem>>, vector<16x128xf32>,
    %c5_i32_109 = arith.constant 5 : i32
    %c16_i32_110 = arith.constant 16 : i32
    %377 = arith.muli %c5_i32_109, %c16_i32_110 : i32
    %378 = tpu.assume_multiple %377, 16 : i32
    %379 = arith.index_cast %378 : i32 to index
    %c0_111 = arith.constant 0 : index
    %380 = vector.load %arg17[%379, %c0_111] : memref<128x512xbf16, #tpu.memory_space<vmem>>, vector<16x512xbf16>
    %381 = arith.extf %380 : vector<16x512xbf16> to vector<16x512xf32>
    %382 = arith.truncf %374 : vector<16x128xf32> to vector<16x128xbf16>
    %cst_112 = arith.constant dense<0.000000e+00> : vector<16x512xf32>
    %383 = tpu.matmul %382, %244, %cst_112 {dimension_numbers = #tpu.dot_dimension_numbers<[1], [0], [0], [1], [0, 0, 1, 1], [], []>} : vector<16x128xbf16>, vector<128x512xbf16>, vector<16x512xf32> -> vector<16x512xf32>
    %384 = arith.addf %381, %383 : vector<16x512xf32>
    %385 = vector.extract_strided_slice %384 {offsets = [0, 0], sizes = [16, 384], strides = [1, 1]} : vector<16x512xf32> to vector<16x384xf32>
    %386 = arith.negf %385 : vector<16x384xf32>
    %387 = math.exp %386 : vector<16x384xf32>
    %cst_113 = arith.constant 1.000000e+00 : f32
    %388 = vector.broadcast %cst_113 : f32 to vector<16x384xf32>
    %389 = arith.addf %388, %387 : vector<16x384xf32>
    %390 = arith.divf %388, %389 : vector<16x384xf32>
    %391 = vector.extract_strided_slice %390 {offsets = [0, 0], sizes = [16, 128], strides = [1, 1]} : vector<16x384xf32> to vector<16x128xf32>
    %392 = vector.extract_strided_slice %390 {offsets = [0, 128], sizes = [16, 128], strides = [1, 1]} : vector<16x384xf32> to vector<16x128xf32>
    %393 = vector.extract_strided_slice %390 {offsets = [0, 256], sizes = [16, 128], strides = [1, 1]} : vector<16x384xf32> to vector<16x128xf32>
    %394 = vector.extract_strided_slice %384 {offsets = [0, 384], sizes = [16, 128], strides = [1, 1]} : vector<16x512xf32> to vector<16x128xf32>
    %395 = math.tanh %394 : vector<16x128xf32>
    %396 = arith.mulf %392, %372 : vector<16x128xf32>
    %397 = arith.mulf %391, %395 : vector<16x128xf32>
    %398 = arith.addf %396, %397 : vector<16x128xf32>
    %399 = math.tanh %398 : vector<16x128xf32>
    %400 = arith.mulf %393, %399 : vector<16x128xf32>
    %401 = arith.index_cast %378 : i32 to index
    %c0_114 = arith.constant 0 : index
    %402 = vector.load %arg16[%401, %c0_114] : memref<128x128xf32, #tpu.memory_space<vmem>>, vector<16x128xf32>
    tpu.vector_store %arg16[%401, %c0_114], %400 {strides = array<i32>} : memref<128x128xf32, #tpu.memory_space<vmem>>, vector<16x128xf32>,
    %c6_i32_115 = arith.constant 6 : i32
    %c16_i32_116 = arith.constant 16 : i32
    %403 = arith.muli %c6_i32_115, %c16_i32_116 : i32
    %404 = tpu.assume_multiple %403, 16 : i32
    %405 = arith.index_cast %404 : i32 to index
    %c0_117 = arith.constant 0 : index
    %406 = vector.load %arg17[%405, %c0_117] : memref<128x512xbf16, #tpu.memory_space<vmem>>, vector<16x512xbf16>
    %407 = arith.extf %406 : vector<16x512xbf16> to vector<16x512xf32>
    %408 = arith.truncf %400 : vector<16x128xf32> to vector<16x128xbf16>
    %cst_118 = arith.constant dense<0.000000e+00> : vector<16x512xf32>
    %409 = tpu.matmul %408, %244, %cst_118 {dimension_numbers = #tpu.dot_dimension_numbers<[1], [0], [0], [1], [0, 0, 1, 1], [], []>} : vector<16x128xbf16>, vector<128x512xbf16>, vector<16x512xf32> -> vector<16x512xf32>
    %410 = arith.addf %407, %409 : vector<16x512xf32>
    %411 = vector.extract_strided_slice %410 {offsets = [0, 0], sizes = [16, 384], strides = [1, 1]} : vector<16x512xf32> to vector<16x384xf32>
    %412 = arith.negf %411 : vector<16x384xf32>
    %413 = math.exp %412 : vector<16x384xf32>
    %cst_119 = arith.constant 1.000000e+00 : f32
    %414 = vector.broadcast %cst_119 : f32 to vector<16x384xf32>
    %415 = arith.addf %414, %413 : vector<16x384xf32>
    %416 = arith.divf %414, %415 : vector<16x384xf32>
    %417 = vector.extract_strided_slice %416 {offsets = [0, 0], sizes = [16, 128], strides = [1, 1]} : vector<16x384xf32> to vector<16x128xf32>
    %418 = vector.extract_strided_slice %416 {offsets = [0, 128], sizes = [16, 128], strides = [1, 1]} : vector<16x384xf32> to vector<16x128xf32>
    %419 = vector.extract_strided_slice %416 {offsets = [0, 256], sizes = [16, 128], strides = [1, 1]} : vector<16x384xf32> to vector<16x128xf32>
    %420 = vector.extract_strided_slice %410 {offsets = [0, 384], sizes = [16, 128], strides = [1, 1]} : vector<16x512xf32> to vector<16x128xf32>
    %421 = math.tanh %420 : vector<16x128xf32>
    %422 = arith.mulf %418, %398 : vector<16x128xf32>
    %423 = arith.mulf %417, %421 : vector<16x128xf32>
    %424 = arith.addf %422, %423 : vector<16x128xf32>
    %425 = math.tanh %424 : vector<16x128xf32>
    %426 = arith.mulf %419, %425 : vector<16x128xf32>
    %427 = arith.index_cast %404 : i32 to index
    %c0_120 = arith.constant 0 : index
    %428 = vector.load %arg16[%427, %c0_120] : memref<128x128xf32, #tpu.memory_space<vmem>>, vector<16x128xf32>
    tpu.vector_store %arg16[%427, %c0_120], %426 {strides = array<i32>} : memref<128x128xf32, #tpu.memory_space<vmem>>, vector<16x128xf32>,
    %c7_i32_121 = arith.constant 7 : i32
    %c16_i32_122 = arith.constant 16 : i32
    %429 = arith.muli %c7_i32_121, %c16_i32_122 : i32
    %430 = tpu.assume_multiple %429, 16 : i32
    %431 = arith.index_cast %430 : i32 to index
    %c0_123 = arith.constant 0 : index
    %432 = vector.load %arg17[%431, %c0_123] : memref<128x512xbf16, #tpu.memory_space<vmem>>, vector<16x512xbf16>
    %433 = arith.extf %432 : vector<16x512xbf16> to vector<16x512xf32>
    %434 = arith.truncf %426 : vector<16x128xf32> to vector<16x128xbf16>
    %cst_124 = arith.constant dense<0.000000e+00> : vector<16x512xf32>
    %435 = tpu.matmul %434, %244, %cst_124 {dimension_numbers = #tpu.dot_dimension_numbers<[1], [0], [0], [1], [0, 0, 1, 1], [], []>} : vector<16x128xbf16>, vector<128x512xbf16>, vector<16x512xf32> -> vector<16x512xf32>
    %436 = arith.addf %433, %435 : vector<16x512xf32>
    %437 = vector.extract_strided_slice %436 {offsets = [0, 0], sizes = [16, 384], strides = [1, 1]} : vector<16x512xf32> to vector<16x384xf32>
    %438 = arith.negf %437 : vector<16x384xf32>
    %439 = math.exp %438 : vector<16x384xf32>
    %cst_125 = arith.constant 1.000000e+00 : f32
    %440 = vector.broadcast %cst_125 : f32 to vector<16x384xf32>
    %441 = arith.addf %440, %439 : vector<16x384xf32>
    %442 = arith.divf %440, %441 : vector<16x384xf32>
    %443 = vector.extract_strided_slice %442 {offsets = [0, 0], sizes = [16, 128], strides = [1, 1]} : vector<16x384xf32> to vector<16x128xf32>
    %444 = vector.extract_strided_slice %442 {offsets = [0, 128], sizes = [16, 128], strides = [1, 1]} : vector<16x384xf32> to vector<16x128xf32>
    %445 = vector.extract_strided_slice %442 {offsets = [0, 256], sizes = [16, 128], strides = [1, 1]} : vector<16x384xf32> to vector<16x128xf32>
    %446 = vector.extract_strided_slice %436 {offsets = [0, 384], sizes = [16, 128], strides = [1, 1]} : vector<16x512xf32> to vector<16x128xf32>
    %447 = math.tanh %446 : vector<16x128xf32>
    %448 = arith.mulf %444, %424 : vector<16x128xf32>
    %449 = arith.mulf %443, %447 : vector<16x128xf32>
    %450 = arith.addf %448, %449 : vector<16x128xf32>
    %451 = math.tanh %450 : vector<16x128xf32>
    %452 = arith.mulf %445, %451 : vector<16x128xf32>
    %453 = arith.index_cast %430 : i32 to index
    %c0_126 = arith.constant 0 : index
    %454 = vector.load %arg16[%453, %c0_126] : memref<128x128xf32, #tpu.memory_space<vmem>>, vector<16x128xf32>
    tpu.vector_store %arg16[%453, %c0_126], %452 {strides = array<i32>} : memref<128x128xf32, #tpu.memory_space<vmem>>, vector<16x128xf32>,
    %c8_i32_127 = arith.constant 8 : i32
    %c1_128 = arith.constant 1 : index
    %c0_129 = arith.constant 0 : index
    %c0_130 = arith.constant 0 : index
    %455 = vector.load %arg12[%c1_128, %c0_129, %c0_130] : memref<2x16x128xf32, #tpu.memory_space<vmem>>, vector<1x16x128xf32>
    %456 = vector.shape_cast %455 : vector<1x16x128xf32> to vector<16x128xf32>
    %457 = vector.shape_cast %452 : vector<16x128xf32> to vector<1x16x128xf32>
    tpu.vector_store %arg12[%c1_128, %c0_129, %c0_130], %457 {strides = array<i32>} : memref<2x16x128xf32, #tpu.memory_space<vmem>>, vector<1x16x128xf32>,
    %c1_131 = arith.constant 1 : index
    %c0_132 = arith.constant 0 : index
    %c0_133 = arith.constant 0 : index
    %458 = vector.load %arg13[%c1_131, %c0_132, %c0_133] : memref<2x16x128xf32, #tpu.memory_space<vmem>>, vector<1x16x128xf32>
    %459 = vector.shape_cast %458 : vector<1x16x128xf32> to vector<16x128xf32>
    %460 = vector.shape_cast %450 : vector<16x128xf32> to vector<1x16x128xf32>
    tpu.vector_store %arg13[%c1_131, %c0_132, %c0_133], %460 {strides = array<i32>} : memref<2x16x128xf32, #tpu.memory_space<vmem>>, vector<1x16x128xf32>,
    %c0_134 = arith.constant 0 : index
    %c0_135 = arith.constant 0 : index
    %461 = vector.load %arg16[%c0_134, %c0_135] : memref<128x128xf32, #tpu.memory_space<vmem>>, vector<128x128xf32>
    %462 = arith.mulf %461, %461 : vector<128x128xf32>
    %cst_136 = arith.constant dense<0.000000e+00> : vector<128xf32>
    %463 = vector.multi_reduction <add>, %462, %cst_136 [1] : vector<128x128xf32> to vector<128xf32>
    %464 = vector.shape_cast %463 : vector<128xf32> to vector<128x1xf32>
    %cst_137 = arith.constant 1.000000e-24 : f32
    %465 = vector.broadcast %cst_137 : f32 to vector<128x1xf32>
    %466 = arith.maximumf %464, %465 : vector<128x1xf32>
    %467 = math.rsqrt %466 : vector<128x1xf32>
    %468 = vector.broadcast %467 : vector<128x1xf32> to vector<128x128xf32>
    %469 = arith.mulf %461, %468 : vector<128x128xf32>
    %470 = vector.shape_cast %469 : vector<128x128xf32> to vector<8x16x128xf32>
    %c0_138 = arith.constant 0 : index
    %c0_139 = arith.constant 0 : index
    %c0_140 = arith.constant 0 : index
    %471 = vector.load %arg11[%c0_138, %c0_139, %c0_140] : memref<8x16x128xf32, #tpu.memory_space<vmem>>, vector<8x16x128xf32>
    tpu.vector_store %arg11[%c0_138, %c0_139, %c0_140], %470 {strides = array<i32>} : memref<8x16x128xf32, #tpu.memory_space<vmem>>, vector<8x16x128xf32>,
    %472 = vector.shape_cast %469 : vector<128x128xf32> to vector<8x16x128xf32>
    %cst_141 = arith.constant dense<0.000000e+00> : vector<16x128xf32>
    %473 = vector.multi_reduction <add>, %472, %cst_141 [0] : vector<8x16x128xf32> to vector<16x128xf32>
    %cst_142 = arith.constant 8.000000e+00 : f32
    %474 = vector.broadcast %cst_142 : f32 to vector<16x128xf32>
    %475 = arith.divf %473, %474 : vector<16x128xf32>
    %476 = arith.mulf %475, %475 : vector<16x128xf32>
    %cst_143 = arith.constant dense<0.000000e+00> : vector<16xf32>
    %477 = vector.multi_reduction <add>, %476, %cst_143 [1] : vector<16x128xf32> to vector<16xf32>
    %478 = vector.shape_cast %477 : vector<16xf32> to vector<16x1xf32>
    %cst_144 = arith.constant 1.000000e-24 : f32
    %479 = vector.broadcast %cst_144 : f32 to vector<16x1xf32>
    %480 = arith.maximumf %478, %479 : vector<16x1xf32>
    %481 = math.rsqrt %480 : vector<16x1xf32>
    %482 = vector.broadcast %481 : vector<16x1xf32> to vector<16x128xf32>
    %483 = arith.mulf %475, %482 : vector<16x128xf32>
    %c0_145 = arith.constant 0 : index
    %c0_146 = arith.constant 0 : index
    %484 = vector.load %arg14[%c0_145, %c0_146] : memref<16x128xf32, #tpu.memory_space<vmem>>, vector<16x128xf32>
    tpu.vector_store %arg14[%c0_145, %c0_146], %483 {strides = array<i32>} : memref<16x128xf32, #tpu.memory_space<vmem>>, vector<16x128xf32>,
    %485 = arith.truncf %483 : vector<16x128xf32> to vector<16x128xbf16>
    %c0_147 = arith.constant 0 : index
    %c0_148 = arith.constant 0 : index
    %486 = vector.load %arg5[%c0_147, %c0_148] : memref<128x128xbf16, #tpu.memory_space<vmem>>, vector<128x128xbf16>
    %cst_149 = arith.constant dense<0.000000e+00> : vector<16x128xf32>
    %487 = tpu.matmul %485, %486, %cst_149 {dimension_numbers = #tpu.dot_dimension_numbers<[1], [0], [0], [1], [0, 0, 1, 1], [], []>} : vector<16x128xbf16>, vector<128x128xbf16>, vector<16x128xf32> -> vector<16x128xf32>
    %c0_150 = arith.constant 0 : index
    %c0_151 = arith.constant 0 : index
    %488 = vector.load %arg6[%c0_150, %c0_151] : memref<1x128xf32, #tpu.memory_space<vmem>>, vector<1x128xf32>
    %489 = vector.broadcast %488 : vector<1x128xf32> to vector<16x128xf32>
    %490 = arith.addf %487, %489 : vector<16x128xf32>
    %cst_152 = arith.constant 0.000000e+00 : f32
    %491 = vector.broadcast %cst_152 : f32 to vector<16x128xf32>
    %492 = arith.maximumf %490, %491 : vector<16x128xf32>
    %493 = arith.truncf %492 : vector<16x128xf32> to vector<16x128xbf16>
    %c0_153 = arith.constant 0 : index
    %c0_154 = arith.constant 0 : index
    %494 = vector.load %arg7[%c0_153, %c0_154] : memref<128x128xbf16, #tpu.memory_space<vmem>>, vector<128x128xbf16>
    %cst_155 = arith.constant dense<0.000000e+00> : vector<16x128xf32>
    %495 = tpu.matmul %493, %494, %cst_155 {dimension_numbers = #tpu.dot_dimension_numbers<[1], [0], [0], [1], [0, 0, 1, 1], [], []>} : vector<16x128xbf16>, vector<128x128xbf16>, vector<16x128xf32> -> vector<16x128xf32>
    %c0_156 = arith.constant 0 : index
    %c0_157 = arith.constant 0 : index
    %496 = vector.load %arg8[%c0_156, %c0_157] : memref<1x128xf32, #tpu.memory_space<vmem>>, vector<1x128xf32>
    %497 = vector.broadcast %496 : vector<1x128xf32> to vector<16x128xf32>
    %498 = arith.addf %495, %497 : vector<16x128xf32>
    %cst_158 = arith.constant 0.000000e+00 : f32
    %499 = vector.broadcast %cst_158 : f32 to vector<16x128xf32>
    %500 = arith.maximumf %498, %499 : vector<16x128xf32>
    %501 = arith.truncf %500 : vector<16x128xf32> to vector<16x128xbf16>
    %c0_159 = arith.constant 0 : index
    %c0_160 = arith.constant 0 : index
    %502 = vector.load %arg9[%c0_159, %c0_160] : memref<128x1xbf16, #tpu.memory_space<vmem>>, vector<128x1xbf16>
    %cst_161 = arith.constant dense<0.000000e+00> : vector<16x1xf32>
    %503 = tpu.matmul %501, %502, %cst_161 {dimension_numbers = #tpu.dot_dimension_numbers<[1], [0], [0], [1], [0, 0, 1, 1], [], []>} : vector<16x128xbf16>, vector<128x1xbf16>, vector<16x1xf32> -> vector<16x1xf32>
    %c0_162 = arith.constant 0 : index
    %c0_163 = arith.constant 0 : index
    %504 = vector.load %arg10[%c0_162, %c0_163] : memref<1x1xf32, #tpu.memory_space<vmem>>, vector<1x1xf32>
    %505 = vector.broadcast %504 : vector<1x1xf32> to vector<16x1xf32>
    %506 = arith.addf %503, %505 : vector<16x1xf32>
    %507 = arith.negf %506 : vector<16x1xf32>
    %508 = math.exp %507 : vector<16x1xf32>
    %cst_164 = arith.constant 1.000000e+00 : f32
    %509 = vector.broadcast %cst_164 : f32 to vector<16x1xf32>
    %510 = arith.addf %509, %508 : vector<16x1xf32>
    %511 = arith.divf %509, %510 : vector<16x1xf32>
    %c0_165 = arith.constant 0 : index
    %c0_166 = arith.constant 0 : index
    %512 = vector.load %arg15[%c0_165, %c0_166] : memref<16x1xf32, #tpu.memory_space<vmem>>, vector<16x1xf32>
    tpu.vector_store %arg15[%c0_165, %c0_166], %511 {strides = array<i32>} : memref<16x1xf32, #tpu.memory_space<vmem>>, vector<16x1xf32>,
    return
  }
  func.func @transform_0(%arg0: i32) -> (i32, i32, i32) {
    %c0_i32 = arith.constant 0 : i32
    %c0_i32_0 = arith.constant 0 : i32
    %c0_i32_1 = arith.constant 0 : i32
    return %c0_i32, %arg0, %c0_i32_0 : i32, i32, i32
  }
  func.func @transform_1(%arg0: i32) -> (i32, i32, i32) {
    %c0_i32 = arith.constant 0 : i32
    %c0_i32_0 = arith.constant 0 : i32
    %c0_i32_1 = arith.constant 0 : i32
    %c0_i32_2 = arith.constant 0 : i32
    return %c0_i32, %c0_i32_0, %c0_i32_1 : i32, i32, i32
  }
  func.func @transform_2(%arg0: i32) -> (i32, i32, i32) {
    %c0_i32 = arith.constant 0 : i32
    %c0_i32_0 = arith.constant 0 : i32
    %c0_i32_1 = arith.constant 0 : i32
    %c0_i32_2 = arith.constant 0 : i32
    return %c0_i32, %c0_i32_0, %c0_i32_1 : i32, i32, i32
  }
  func.func @transform_3(%arg0: i32) -> (i32, i32, i32) {
    %c0_i32 = arith.constant 0 : i32
    %c0_i32_0 = arith.constant 0 : i32
    %c0_i32_1 = arith.constant 0 : i32
    %c0_i32_2 = arith.constant 0 : i32
    return %c0_i32, %c0_i32_0, %c0_i32_1 : i32, i32, i32
  }
  func.func @transform_4(%arg0: i32) -> (i32, i32) {
    %c0_i32 = arith.constant 0 : i32
    %c0_i32_0 = arith.constant 0 : i32
    %c0_i32_1 = arith.constant 0 : i32
    return %c0_i32, %c0_i32_0 : i32, i32
  }
  func.func @transform_5(%arg0: i32) -> (i32, i32) {
    %c0_i32 = arith.constant 0 : i32
    %c0_i32_0 = arith.constant 0 : i32
    %c0_i32_1 = arith.constant 0 : i32
    return %c0_i32, %c0_i32_0 : i32, i32
  }
  func.func @transform_6(%arg0: i32) -> (i32, i32) {
    %c0_i32 = arith.constant 0 : i32
    %c0_i32_0 = arith.constant 0 : i32
    %c0_i32_1 = arith.constant 0 : i32
    return %c0_i32, %c0_i32_0 : i32, i32
  }
  func.func @transform_7(%arg0: i32) -> (i32, i32) {
    %c0_i32 = arith.constant 0 : i32
    %c0_i32_0 = arith.constant 0 : i32
    %c0_i32_1 = arith.constant 0 : i32
    return %c0_i32, %c0_i32_0 : i32, i32
  }
  func.func @transform_8(%arg0: i32) -> (i32, i32) {
    %c0_i32 = arith.constant 0 : i32
    %c0_i32_0 = arith.constant 0 : i32
    %c0_i32_1 = arith.constant 0 : i32
    return %c0_i32, %c0_i32_0 : i32, i32
  }
  func.func @transform_9(%arg0: i32) -> (i32, i32) {
    %c0_i32 = arith.constant 0 : i32
    %c0_i32_0 = arith.constant 0 : i32
    %c0_i32_1 = arith.constant 0 : i32
    return %c0_i32, %c0_i32_0 : i32, i32
  }
  func.func @transform_10(%arg0: i32) -> (i32, i32, i32) {
    %c0_i32 = arith.constant 0 : i32
    %c0_i32_0 = arith.constant 0 : i32
    %c0_i32_1 = arith.constant 0 : i32
    return %c0_i32, %arg0, %c0_i32_0 : i32, i32, i32
  }
  func.func @transform_11(%arg0: i32) -> (i32, i32, i32) {
    %c0_i32 = arith.constant 0 : i32
    %c0_i32_0 = arith.constant 0 : i32
    %c0_i32_1 = arith.constant 0 : i32
    return %c0_i32, %arg0, %c0_i32_0 : i32, i32, i32
  }
  func.func @transform_12(%arg0: i32) -> (i32, i32, i32) {
    %c0_i32 = arith.constant 0 : i32
    %c0_i32_0 = arith.constant 0 : i32
    %c0_i32_1 = arith.constant 0 : i32
    return %c0_i32, %arg0, %c0_i32_0 : i32, i32, i32
  }
  func.func @transform_13(%arg0: i32) -> (i32, i32) {
    %c0_i32 = arith.constant 0 : i32
    %c0_i32_0 = arith.constant 0 : i32
    return %arg0, %c0_i32 : i32, i32
  }
  func.func @transform_14(%arg0: i32) -> (i32, i32) {
    %c0_i32 = arith.constant 0 : i32
    %c0_i32_0 = arith.constant 0 : i32
    return %arg0, %c0_i32 : i32, i32
  }
}

</mosaic_0001>

<llo_original>
// kernel: tpu_custom_call.1
$region0: #{tpu_custom_call.1}
  #allocation0 [shape = 'u32[]', space=smem, size = 0x4, offset = 0x4, fixed_abs, tag = 'smem constant byte address 0x4 - core index']
  #allocation1 [shape = 'u32[144,128]{1,0:T(1,128)}', space=vmem, size = 0x12000, scoped, tag = 'internal scratch']
  #allocation2 [shape = 'f32[128,128]{1,0:T(8,128)}', space=vmem, size = 0x10000, scoped, tag = 'scratch operand']
  #allocation3 [shape = 'bf16[128,512]{1,0:T(16,128)(2,1)}', space=vmem, size = 0x20000, scoped, tag = 'scratch operand']
  #allocation4 [shape = 'f32[1,1]{1,0:T(1,128)S(1)}', space=vmem, size = 0x200, scoped, tag = 'scoped memory for tpu_custom_call.1']
  %s0 = inlined_call_operand.hbm [shape: f32[8,16,128], index: 0, kind: input, shape index: {}]
  %s1 = inlined_call_operand.hbm [shape: bf16[2,128,512], index: 1, kind: input, shape index: {}]
  %s2 = inlined_call_operand.hbm [shape: bf16[2,128,512], index: 2, kind: input, shape index: {}]
  %s3 = inlined_call_operand.vmem [shape: f32[2,1,512], index: 3, kind: input, shape index: {}]
  %s4 = inlined_call_operand.vmem [shape: bf16[128,128], index: 4, kind: input, shape index: {}]
  %s5 = inlined_call_operand.vmem [shape: f32[1,128], index: 5, kind: input, shape index: {}]
  %s6 = inlined_call_operand.hbm [shape: bf16[128,128], index: 6, kind: input, shape index: {}]
  %s7 = inlined_call_operand.vmem [shape: f32[1,128], index: 7, kind: input, shape index: {}]
  %s8 = inlined_call_operand.vmem [shape: bf16[128,1], index: 8, kind: input, shape index: {}]
  %s9 = inlined_call_operand.<no memory space> [shape: f32[1,1], index: 9, kind: input, shape index: {}]
  %s10 = inlined_call_operand.hbm [shape: f32[8,16,128], index: 10, kind: output, shape index: {0}]
  %s11 = inlined_call_operand.hbm [shape: f32[2,16,128], index: 11, kind: output, shape index: {1}]
  %s12 = inlined_call_operand.hbm [shape: f32[2,16,128], index: 12, kind: output, shape index: {2}]
  %s13 = inlined_call_operand.hbm [shape: f32[16,128], index: 13, kind: output, shape index: {3}]
  %s14 = inlined_call_operand.vmem [shape: f32[16,1], index: 14, kind: output, shape index: {4}]
  %15 = xla_tuple %s10, %s11, %s12, %s13, %s14
  %s16 = sld [smem:[#allocation0]]
  $region98: #{tpu_custom_call.1} parent=0
    _
  %s18 = ssub.s32 1, %s16
  %s19 = scalar_select 0, %s18, %s16
  %v20 = vstv %s9
  %21 = vst [vmem:[#allocation4] sm:$0x1] %v20
  $region1: #{tpu_custom_call.1} parent=0
    #allocation5 [shape = 'u8[65536]{0}', space=vmem, size = 0x10000, scoped, tag = 'input window, operand 0, single buffered']
    #allocation6 [shape = 's32[1]{0}', space=sflag, size = 0x4, scoped, tag = 'scoped memory for tpu_custom_call.1']
    #allocation7 [shape = 's32[1]{0}', space=sflag, size = 0x4, scoped, tag = 'scoped memory for tpu_custom_call.1']
    #allocation8 [shape = 'u8[262144]{0}', space=vmem, size = 0x40000, scoped, tag = 'input window, operand 1, single buffered']
    #allocation9 [shape = 's32[1]{0}', space=sflag, size = 0x4, scoped, tag = 'scoped memory for tpu_custom_call.1']
    #allocation10 [shape = 'u8[262144]{0}', space=vmem, size = 0x40000, scoped, tag = 'input window, operand 2, single buffered']
    #allocation11 [shape = 'u8[32768]{0}', space=vmem, size = 0x8000, scoped, tag = 'input window, operand 6, single buffered']
    #allocation12 [shape = 's32[1]{0}', space=sflag, size = 0x4, scoped, tag = 'scoped memory for tpu_custom_call.1']
    #allocation13 [shape = 'u8[65536]{0}', space=vmem, size = 0x10000, scoped, tag = 'output window, operand 0, single buffered']
    #allocation14 [shape = 'u8[16384]{0}', space=vmem, size = 0x4000, scoped, tag = 'output window, operand 1, single buffered']
    #allocation15 [shape = 's32[1]{0}', space=sflag, size = 0x4, scoped, tag = 'scoped memory for tpu_custom_call.1']
    #allocation16 [shape = 'u8[16384]{0}', space=vmem, size = 0x4000, scoped, tag = 'output window, operand 2, single buffered']
    #allocation17 [shape = 'u8[8192]{0}', space=vmem, size = 0x2000, scoped, tag = 'output window, operand 3, single buffered']
    #allocation18 [shape = 's32[1]{0}', space=sflag, size = 0x4, scoped, tag = 'scoped memory for tpu_custom_call.1']
    %22 = vsyncpa [#allocation6], 0
    %23 = vsyncpa [#allocation9], 0
    %24 = vsyncpa [#allocation12], 0
    %25 = vsyncpa [#allocation7], 0
    %26 = vsyncpa [#allocation15], 0
    %27 = vsyncpa [#allocation18], 0
    // Predicated region
    $region2: #{tpu_custom_call.1} parent=1 // pred_check
      _
    $region3: #{tpu_custom_call.1} parent=1 // pred_check_branch
      %29 = sbr.rel (0) target = $region5
    $region4: #{tpu_custom_call.1} parent=1 // pred_region
      %s31 = ssub.s32 2048, 2048
      %32 = vsyncadd [#allocation6], %s31
      %s33 = sshll.u32 [#allocation5], 4
      %s34 = int_to_ptr.vmem [resolvable:$true] %s33
      %39 = dma.hbm_to_vmem [thread:$0]  %s0, 2048, %s34, [#allocation6], 128, 128, 8
    $region5: #{tpu_custom_call.1} parent=1 // pred_fallthru
      _
    // Predicated region
    $region6: #{tpu_custom_call.1} parent=1 // pred_check
      _
    $region7: #{tpu_custom_call.1} parent=1 // pred_check_branch
      %41 = sbr.rel (0) target = $region9
    $region8: #{tpu_custom_call.1} parent=1 // pred_region
      %s43 = ssub.s32 8192, 8192
      %44 = vsyncadd [#allocation9], %s43
      %s45 = sshll.u32 [#allocation8], 4
      %s46 = int_to_ptr.vmem [resolvable:$true] %s45
      %51 = dma.hbm_to_vmem [thread:$0]  %s1, 8192, %s46, [#allocation9], 256, 256, 16
    $region9: #{tpu_custom_call.1} parent=1 // pred_fallthru
      _
    // Predicated region
    $region10: #{tpu_custom_call.1} parent=1 // pred_check
      _
    $region11: #{tpu_custom_call.1} parent=1 // pred_check_branch
      %53 = sbr.rel (0) target = $region13
    $region12: #{tpu_custom_call.1} parent=1 // pred_region
      %s55 = ssub.s32 8192, 8192
      %56 = vsyncadd [#allocation9], %s55
      %s57 = sshll.u32 [#allocation10], 4
      %s58 = int_to_ptr.vmem [resolvable:$true] %s57
      %63 = dma.hbm_to_vmem [thread:$0]  %s2, 8192, %s58, [#allocation9], 256, 256, 16
    $region13: #{tpu_custom_call.1} parent=1 // pred_fallthru
      _
    // Predicated region
    $region14: #{tpu_custom_call.1} parent=1 // pred_check
      _
    $region15: #{tpu_custom_call.1} parent=1 // pred_check_branch
      %65 = sbr.rel (0) target = $region17
    $region16: #{tpu_custom_call.1} parent=1 // pred_region
      _
    $region17: #{tpu_custom_call.1} parent=1 // pred_fallthru
      _
    // Predicated region
    $region18: #{tpu_custom_call.1} parent=1 // pred_check
      _
    $region19: #{tpu_custom_call.1} parent=1 // pred_check_branch
      %67 = sbr.rel (0) target = $region21
    $region20: #{tpu_custom_call.1} parent=1 // pred_region
      _
    $region21: #{tpu_custom_call.1} parent=1 // pred_fallthru
      _
    // Predicated region
    $region22: #{tpu_custom_call.1} parent=1 // pred_check
      _
    $region23: #{tpu_custom_call.1} parent=1 // pred_check_branch
      %69 = sbr.rel (0) target = $region25
    $region24: #{tpu_custom_call.1} parent=1 // pred_region
      _
    $region25: #{tpu_custom_call.1} parent=1 // pred_fallthru
      _
    // Predicated region
    $region26: #{tpu_custom_call.1} parent=1 // pred_check
      _
    $region27: #{tpu_custom_call.1} parent=1 // pred_check_branch
      %71 = sbr.rel (0) target = $region29
    $region28: #{tpu_custom_call.1} parent=1 // pred_region
      %s73 = ssub.s32 1024, 1024
      %74 = vsyncadd [#allocation12], %s73
      %s75 = sshll.u32 [#allocation11], 4
      %s76 = int_to_ptr.vmem [resolvable:$true] %s75
      %81 = dma.hbm_to_vmem [thread:$0]  %s6, 1024, %s76, [#allocation12], 64, 64, 4
    $region29: #{tpu_custom_call.1} parent=1 // pred_fallthru
      _
    // Predicated region
    $region30: #{tpu_custom_call.1} parent=1 // pred_check
      _
    $region31: #{tpu_custom_call.1} parent=1 // pred_check_branch
      %83 = sbr.rel (0) target = $region33
    $region32: #{tpu_custom_call.1} parent=1 // pred_region
      _
    $region33: #{tpu_custom_call.1} parent=1 // pred_fallthru
      _
    // Predicated region
    $region34: #{tpu_custom_call.1} parent=1 // pred_check
      _
    $region35: #{tpu_custom_call.1} parent=1 // pred_check_branch
      %85 = sbr.rel (0) target = $region37
    $region36: #{tpu_custom_call.1} parent=1 // pred_region
      _
    $region37: #{tpu_custom_call.1} parent=1 // pred_fallthru
      _
    // Predicated region
    $region38: #{tpu_custom_call.1} parent=1 // pred_check
      _
    $region39: #{tpu_custom_call.1} parent=1 // pred_check_branch
      %87 = sbr.rel (0) target = $region41
    $region40: #{tpu_custom_call.1} parent=1 // pred_region
      _
    $region41: #{tpu_custom_call.1} parent=1 // pred_fallthru
      _
    // Predicated region
    $region42: #{tpu_custom_call.1} parent=1 // pred_check
      _
    $region43: #{tpu_custom_call.1} parent=1 // pred_check_branch
      %89 = sbr.rel (0) target = $region45
    $region44: #{tpu_custom_call.1} parent=1 // pred_region
      %90 = dma.done [#allocation6], 2048
    $region45: #{tpu_custom_call.1} parent=1 // pred_fallthru
      _
    // Predicated region
    $region46: #{tpu_custom_call.1} parent=1 // pred_check
      _
    $region47: #{tpu_custom_call.1} parent=1 // pred_check_branch
      %92 = sbr.rel (0) target = $region49
    $region48: #{tpu_custom_call.1} parent=1 // pred_region
      %93 = dma.done [#allocation9], 8192
    $region49: #{tpu_custom_call.1} parent=1 // pred_fallthru
      _
    // Predicated region
    $region50: #{tpu_custom_call.1} parent=1 // pred_check
      _
    $region51: #{tpu_custom_call.1} parent=1 // pred_check_branch
      %95 = sbr.rel (0) target = $region53
    $region52: #{tpu_custom_call.1} parent=1 // pred_region
      %96 = dma.done [#allocation9], 8192
    $region53: #{tpu_custom_call.1} parent=1 // pred_fallthru
      _
    // Predicated region
    $region54: #{tpu_custom_call.1} parent=1 // pred_check
      _
    $region55: #{tpu_custom_call.1} parent=1 // pred_check_branch
      %98 = sbr.rel (0) target = $region57
    $region56: #{tpu_custom_call.1} parent=1 // pred_region
      %99 = dma.done [#allocation12], 1024
    $region57: #{tpu_custom_call.1} parent=1 // pred_fallthru
      _
    %v101 = vld [vmem:[#allocation5] sm:$0xff]
    %v102 = vld [vmem:[#allocation5 + $0x8] sm:$0xff]
    %v103 = vld [vmem:[#allocation5 + $0x10] sm:$0xff]
    %v104 = vld [vmem:[#allocation5 + $0x18] sm:$0xff]
    %v105 = vld [vmem:[#allocation5 + $0x20] sm:$0xff]
    %v106 = vld [vmem:[#allocation5 + $0x28] sm:$0xff]
    %v107 = vld [vmem:[#allocation5 + $0x30] sm:$0xff]
    %v108 = vld [vmem:[#allocation5 + $0x38] sm:$0xff]
    %v109 = vld [vmem:[#allocation5 + $0x40] sm:$0xff]
    %v110 = vld [vmem:[#allocation5 + $0x48] sm:$0xff]
    %v111 = vld [vmem:[#allocation5 + $0x50] sm:$0xff]
    %v112 = vld [vmem:[#allocation5 + $0x58] sm:$0xff]
    %v113 = vld [vmem:[#allocation5 + $0x60] sm:$0xff]
    %v114 = vld [vmem:[#allocation5 + $0x68] sm:$0xff]
    %v115 = vld [vmem:[#allocation5 + $0x70] sm:$0xff]
    %v116 = vld [vmem:[#allocation5 + $0x78] sm:$0xff]
    %117 = vst [vmem:[#allocation2] sm:$0xff] %v101
    %118 = vst [vmem:[#allocation2 + $0x8] sm:$0xff] %v102
    %119 = vst [vmem:[#allocation2 + $0x10] sm:$0xff] %v103
    %120 = vst [vmem:[#allocation2 + $0x18] sm:$0xff] %v104
    %121 = vst [vmem:[#allocation2 + $0x20] sm:$0xff] %v105
    %122 = vst [vmem:[#allocation2 + $0x28] sm:$0xff] %v106
    %123 = vst [vmem:[#allocation2 + $0x30] sm:$0xff] %v107
    %124 = vst [vmem:[#allocation2 + $0x38] sm:$0xff] %v108
    %125 = vst [vmem:[#allocation2 + $0x40] sm:$0xff] %v109
    %126 = vst [vmem:[#allocation2 + $0x48] sm:$0xff] %v110
    %127 = vst [vmem:[#allocation2 + $0x50] sm:$0xff] %v111
    %128 = vst [vmem:[#allocation2 + $0x58] sm:$0xff] %v112
    %129 = vst [vmem:[#allocation2 + $0x60] sm:$0xff] %v113
    %130 = vst [vmem:[#allocation2 + $0x68] sm:$0xff] %v114
    %131 = vst [vmem:[#allocation2 + $0x70] sm:$0xff] %v115
    %132 = vst [vmem:[#allocation2 + $0x78] sm:$0xff] %v116
    %v133 = vld [vmem:[#allocation2] sm:$0xff]
    %v134 = vld [vmem:[#allocation2 + $0x8] sm:$0xff]
    %v135 = vld [vmem:[#allocation2 + $0x10] sm:$0xff]
    %v136 = vld [vmem:[#allocation2 + $0x18] sm:$0xff]
    %v137 = vld [vmem:[#allocation2 + $0x20] sm:$0xff]
    %v138 = vld [vmem:[#allocation2 + $0x28] sm:$0xff]
    %v139 = vld [vmem:[#allocation2 + $0x30] sm:$0xff]
    %v140 = vld [vmem:[#allocation2 + $0x38] sm:$0xff]
    %v141 = vld [vmem:[#allocation2 + $0x40] sm:$0xff]
    %v142 = vld [vmem:[#allocation2 + $0x48] sm:$0xff]
    %v143 = vld [vmem:[#allocation2 + $0x50] sm:$0xff]
    %v144 = vld [vmem:[#allocation2 + $0x58] sm:$0xff]
    %v145 = vld [vmem:[#allocation2 + $0x60] sm:$0xff]
    %v146 = vld [vmem:[#allocation2 + $0x68] sm:$0xff]
    %v147 = vld [vmem:[#allocation2 + $0x70] sm:$0xff]
    %v148 = vld [vmem:[#allocation2 + $0x78] sm:$0xff]
    %v149 = vpack.c.bf16 %v134, %v133
    %v150 = vpack.c.bf16 %v136, %v135
    %v151 = vpack.c.bf16 %v138, %v137
    %v152 = vpack.c.bf16 %v140, %v139
    %v153 = vpack.c.bf16 %v142, %v141
    %v154 = vpack.c.bf16 %v144, %v143
    %v155 = vpack.c.bf16 %v146, %v145
    %v156 = vpack.c.bf16 %v148, %v147
    %v157 = vld [vmem:[#allocation8] sm:$0xff]
    %v158 = vld [vmem:[#allocation8 + $0x8] sm:$0xff]
    %v159 = vld [vmem:[#allocation8 + $0x10] sm:$0xff]
    %v160 = vld [vmem:[#allocation8 + $0x18] sm:$0xff]
    %v161 = vld [vmem:[#allocation8 + $0x20] sm:$0xff]
    %v162 = vld [vmem:[#allocation8 + $0x28] sm:$0xff]
    %v163 = vld [vmem:[#allocation8 + $0x30] sm:$0xff]
    %v164 = vld [vmem:[#allocation8 + $0x38] sm:$0xff]
    %v165 = vld [vmem:[#allocation8 + $0x40] sm:$0xff]
    %v166 = vld [vmem:[#allocation8 + $0x48] sm:$0xff]
    %v167 = vld [vmem:[#allocation8 + $0x50] sm:$0xff]
    %v168 = vld [vmem:[#allocation8 + $0x58] sm:$0xff]
    %v169 = vld [vmem:[#allocation8 + $0x60] sm:$0xff]
    %v170 = vld [vmem:[#allocation8 + $0x68] sm:$0xff]
    %v171 = vld [vmem:[#allocation8 + $0x70] sm:$0xff]
    %v172 = vld [vmem:[#allocation8 + $0x78] sm:$0xff]
    %v173 = vld [vmem:[#allocation8 + $0x80] sm:$0xff]
    %v174 = vld [vmem:[#allocation8 + $0x88] sm:$0xff]
    %v175 = vld [vmem:[#allocation8 + $0x90] sm:$0xff]
    %v176 = vld [vmem:[#allocation8 + $0x98] sm:$0xff]
    %v177 = vld [vmem:[#allocation8 + $0xa0] sm:$0xff]
    %v178 = vld [vmem:[#allocation8 + $0xa8] sm:$0xff]
    %v179 = vld [vmem:[#allocation8 + $0xb0] sm:$0xff]
    %v180 = vld [vmem:[#allocation8 + $0xb8] sm:$0xff]
    %v181 = vld [vmem:[#allocation8 + $0xc0] sm:$0xff]
    %v182 = vld [vmem:[#allocation8 + $0xc8] sm:$0xff]
    %v183 = vld [vmem:[#allocation8 + $0xd0] sm:$0xff]
    %v184 = vld [vmem:[#allocation8 + $0xd8] sm:$0xff]
    %v185 = vld [vmem:[#allocation8 + $0xe0] sm:$0xff]
    %v186 = vld [vmem:[#allocation8 + $0xe8] sm:$0xff]
    %v187 = vld [vmem:[#allocation8 + $0xf0] sm:$0xff]
    %v188 = vld [vmem:[#allocation8 + $0xf8] sm:$0xff]
    %v189 = vld [vmem:[%s3] sm:$0xf]
    %v191 = vlaneseq
    %v192 = vshrl.u32 %v191, 7
    %v193 = vsub.s32 0, %v192
    %v194 = vrot.slane %v189, %v193
    %v195 = vlaneseq
    %v196 = vshrl.u32 %v195, 7
    %v197 = vsub.s32 1, %v196
    %v198 = vrot.slane %v189, %v197
    %v199 = vlaneseq
    %v200 = vshrl.u32 %v199, 7
    %v201 = vsub.s32 2, %v200
    %v202 = vrot.slane %v189, %v201
    %v203 = vlaneseq
    %v204 = vshrl.u32 %v203, 7
    %v205 = vsub.s32 3, %v204
    %v206 = vrot.slane %v189, %v205
    %v243 = vunpack.c.l.b16 %v157
    %v244 = vunpack.c.h.b16 %v157
    %v245 = vunpack.c.l.b16 %v158
    %v246 = vunpack.c.h.b16 %v158
    %v247 = vunpack.c.l.b16 %v159
    %v248 = vunpack.c.h.b16 %v159
    %v249 = vunpack.c.l.b16 %v160
    %v250 = vunpack.c.h.b16 %v160
    %v251 = vunpack.c.l.b16 %v161
    %v252 = vunpack.c.h.b16 %v161
    %v253 = vunpack.c.l.b16 %v162
    %v254 = vunpack.c.h.b16 %v162
    %v255 = vunpack.c.l.b16 %v163
    %v256 = vunpack.c.h.b16 %v163
    %v257 = vunpack.c.l.b16 %v164
    %v258 = vunpack.c.h.b16 %v164
    %v259 = vunpack.c.l.b16 %v165
    %v260 = vunpack.c.h.b16 %v165
    %v261 = vunpack.c.l.b16 %v166
    %v262 = vunpack.c.h.b16 %v166
    %v263 = vunpack.c.l.b16 %v167
    %v264 = vunpack.c.h.b16 %v167
    %v265 = vunpack.c.l.b16 %v168
    %v266 = vunpack.c.h.b16 %v168
    %v267 = vunpack.c.l.b16 %v169
    %v268 = vunpack.c.h.b16 %v169
    %v269 = vunpack.c.l.b16 %v170
    %v270 = vunpack.c.h.b16 %v170
    %v271 = vunpack.c.l.b16 %v171
    %v272 = vunpack.c.h.b16 %v171
    %v273 = vunpack.c.l.b16 %v172
    %v274 = vunpack.c.h.b16 %v172
    %v275 = vunpack.c.l.b16 %v173
    %v276 = vunpack.c.h.b16 %v173
    %v277 = vunpack.c.l.b16 %v174
    %v278 = vunpack.c.h.b16 %v174
    %v279 = vunpack.c.l.b16 %v175
    %v280 = vunpack.c.h.b16 %v175
    %v281 = vunpack.c.l.b16 %v176
    %v282 = vunpack.c.h.b16 %v176
    %v283 = vunpack.c.l.b16 %v177
    %v284 = vunpack.c.h.b16 %v177
    %v285 = vunpack.c.l.b16 %v178
    %v286 = vunpack.c.h.b16 %v178
    %v287 = vunpack.c.l.b16 %v179
    %v288 = vunpack.c.h.b16 %v179
    %v289 = vunpack.c.l.b16 %v180
    %v290 = vunpack.c.h.b16 %v180
    %v291 = vunpack.c.l.b16 %v181
    %v292 = vunpack.c.h.b16 %v181
    %v293 = vunpack.c.l.b16 %v182
    %v294 = vunpack.c.h.b16 %v182
    %v295 = vunpack.c.l.b16 %v183
    %v296 = vunpack.c.h.b16 %v183
    %v297 = vunpack.c.l.b16 %v184
    %v298 = vunpack.c.h.b16 %v184
    %v299 = vunpack.c.l.b16 %v185
    %v300 = vunpack.c.h.b16 %v185
    %v301 = vunpack.c.l.b16 %v186
    %v302 = vunpack.c.h.b16 %v186
    %v303 = vunpack.c.l.b16 %v187
    %v304 = vunpack.c.h.b16 %v187
    %v305 = vunpack.c.l.b16 %v188
    %v306 = vunpack.c.h.b16 %v188
    %v307 = vpack.c.b16 %v247, %v243
    %v308 = vpack.c.b16 %v248, %v244
    %v309 = vpack.c.b16 %v249, %v245
    %v310 = vpack.c.b16 %v250, %v246
    %v311 = vpack.c.b16 %v255, %v251
    %v312 = vpack.c.b16 %v256, %v252
    %v313 = vpack.c.b16 %v257, %v253
    %v314 = vpack.c.b16 %v258, %v254
    %v315 = vpack.c.b16 %v263, %v259
    %v316 = vpack.c.b16 %v264, %v260
    %v317 = vpack.c.b16 %v265, %v261
    %v318 = vpack.c.b16 %v266, %v262
    %v319 = vpack.c.b16 %v271, %v267
    %v320 = vpack.c.b16 %v272, %v268
    %v321 = vpack.c.b16 %v273, %v269
    %v322 = vpack.c.b16 %v274, %v270
    %v323 = vpack.c.b16 %v279, %v275
    %v324 = vpack.c.b16 %v280, %v276
    %v325 = vpack.c.b16 %v281, %v277
    %v326 = vpack.c.b16 %v282, %v278
    %v327 = vpack.c.b16 %v287, %v283
    %v328 = vpack.c.b16 %v288, %v284
    %v329 = vpack.c.b16 %v289, %v285
    %v330 = vpack.c.b16 %v290, %v286
    %v331 = vpack.c.b16 %v295, %v291
    %v332 = vpack.c.b16 %v296, %v292
    %v333 = vpack.c.b16 %v297, %v293
    %v334 = vpack.c.b16 %v298, %v294
    %v335 = vpack.c.b16 %v303, %v299
    %v336 = vpack.c.b16 %v304, %v300
    %v337 = vpack.c.b16 %v305, %v301
    %v338 = vpack.c.b16 %v306, %v302
    %371 = vmatprep.subr.bf16.mxu0 %v308
    %372 = vmatpush1.bf16.msra.mxu0 %v307
    %373 = vmatprep.subr.bf16.mxu0 %v312
    %374 = vmatpush1.bf16.msra.mxu0 %v311
    %375 = vmatprep.subr.bf16.mxu0 %v316
    %376 = vmatpush1.bf16.msra.mxu0 %v315
    %377 = vmatprep.subr.bf16.mxu0 %v320
    %378 = vmatpush1.bf16.msra.mxu0 %v319
    %379 = vmatprep.subr.bf16.mxu0 %v324
    %380 = vmatpush1.bf16.msra.mxu0 %v323
    %381 = vmatprep.subr.bf16.mxu0 %v328
    %382 = vmatpush1.bf16.msra.mxu0 %v327
    %383 = vmatprep.subr.bf16.mxu0 %v332
    %384 = vmatpush1.bf16.msra.mxu0 %v331
    %385 = vmatprep.subr.bf16.mxu0 %v336
    %386 = vmatpush1.bf16.msra.mxu0 %v335
    %387 = vmatprep.subr.bf16.mxu0 0
    %388 = vmatpush1.bf16.msra.mxu0 0
    %389 = vmatprep.subr.bf16.mxu0 0
    %390 = vmatpush1.bf16.msra.mxu0 0
    %391 = vmatprep.subr.bf16.mxu0 0
    %392 = vmatpush1.bf16.msra.mxu0 0
    %393 = vmatprep.subr.bf16.mxu0 0
    %394 = vmatpush1.bf16.msra.mxu0 0
    %395 = vmatprep.subr.bf16.mxu0 0
    %396 = vmatpush1.bf16.msra.mxu0 0
    %397 = vmatprep.subr.bf16.mxu0 0
    %398 = vmatpush1.bf16.msra.mxu0 0
    %399 = vmatprep.subr.bf16.mxu0 0
    %400 = vmatpush1.bf16.msra.mxu0 0
    %401 = vmatprep.subr.bf16.mxu0 0
    %402 = vmatpush1.bf16.msra.mxu0 0
    %403 = vmatprep.mubr.bf16.mxu0 0
    %404 = vmatmul.mubr.bf16.gmra.mrb[0].mxu0 %v149
    %v405 = vpop.f32.mrb[0].mxu0
    %v406 = vadd.f32 %v194, %v405
    %v407 = vpop.f32.mrb[0].mxu0
    %v408 = vadd.f32 %v198, %v407
    %v409 = vpop.f32.mrb[0].mxu0
    %v410 = vadd.f32 %v194, %v409
    %v411 = vpop.f32.mrb[0].mxu0
    %v412 = vadd.f32 %v198, %v411
    %413 = vmatprep.mubr.bf16.mxu0 0
    %414 = vmatmul.mubr.bf16.gmra.mrb[0].mxu0 %v150
    %v415 = vpop.f32.mrb[0].mxu0
    %v416 = vadd.f32 %v194, %v415
    %v417 = vpop.f32.mrb[0].mxu0
    %v418 = vadd.f32 %v198, %v417
    %v419 = vpop.f32.mrb[0].mxu0
    %v420 = vadd.f32 %v194, %v419
    %v421 = vpop.f32.mrb[0].mxu0
    %v422 = vadd.f32 %v198, %v421
    %423 = vmatprep.mubr.bf16.mxu0 0
    %424 = vmatmul.mubr.bf16.gmra.mrb[0].mxu0 %v151
    %v425 = vpop.f32.mrb[0].mxu0
    %v426 = vadd.f32 %v194, %v425
    %v427 = vpop.f32.mrb[0].mxu0
    %v428 = vadd.f32 %v198, %v427
    %v429 = vpop.f32.mrb[0].mxu0
    %v430 = vadd.f32 %v194, %v429
    %v431 = vpop.f32.mrb[0].mxu0
    %v432 = vadd.f32 %v198, %v431
    %433 = vmatprep.mubr.bf16.mxu0 0
    %434 = vmatmul.mubr.bf16.gmra.mrb[0].mxu0 %v152
    %v435 = vpop.f32.mrb[0].mxu0
    %v436 = vadd.f32 %v194, %v435
    %v437 = vpop.f32.mrb[0].mxu0
    %v438 = vadd.f32 %v198, %v437
    %v439 = vpop.f32.mrb[0].mxu0
    %v440 = vadd.f32 %v194, %v439
    %v441 = vpop.f32.mrb[0].mxu0
    %v442 = vadd.f32 %v198, %v441
    %443 = vmatprep.mubr.bf16.mxu0 0
    %444 = vmatmul.mubr.bf16.gmra.mrb[0].mxu0 %v153
    %v445 = vpop.f32.mrb[0].mxu0
    %v446 = vadd.f32 %v194, %v445
    %v447 = vpop.f32.mrb[0].mxu0
    %v448 = vadd.f32 %v198, %v447
    %v449 = vpop.f32.mrb[0].mxu0
    %v450 = vadd.f32 %v194, %v449
    %v451 = vpop.f32.mrb[0].mxu0
    %v452 = vadd.f32 %v198, %v451
    %453 = vmatprep.mubr.bf16.mxu0 0
    %454 = vmatmul.mubr.bf16.gmra.mrb[0].mxu0 %v154
    %v455 = vpop.f32.mrb[0].mxu0
    %v456 = vadd.f32 %v194, %v455
    %v457 = vpop.f32.mrb[0].mxu0
    %v458 = vadd.f32 %v198, %v457
    %v459 = vpop.f32.mrb[0].mxu0
    %v460 = vadd.f32 %v194, %v459
    %v461 = vpop.f32.mrb[0].mxu0
    %v462 = vadd.f32 %v198, %v461
    %463 = vmatprep.mubr.bf16.mxu0 0
    %464 = vmatmul.mubr.bf16.gmra.mrb[0].mxu0 %v155
    %v465 = vpop.f32.mrb[0].mxu0
    %v466 = vadd.f32 %v194, %v465
    %v467 = vpop.f32.mrb[0].mxu0
    %v468 = vadd.f32 %v198, %v467
    %v469 = vpop.f32.mrb[0].mxu0
    %v470 = vadd.f32 %v194, %v469
    %v471 = vpop.f32.mrb[0].mxu0
    %v472 = vadd.f32 %v198, %v471
    %473 = vmatprep.mubr.bf16.mxu0 0
    %474 = vmatmul.mubr.bf16.gmra.mrb[0].mxu0 %v156
    %v475 = vpop.f32.mrb[0].mxu0
    %v476 = vadd.f32 %v194, %v475
    %v477 = vpop.f32.mrb[0].mxu0
    %v478 = vadd.f32 %v198, %v477
    %v479 = vpop.f32.mrb[0].mxu0
    %v480 = vadd.f32 %v194, %v479
    %v481 = vpop.f32.mrb[0].mxu0
    %v482 = vadd.f32 %v198, %v481
    %483 = vdwg.mxu0
    %484 = vmatprep.subr.bf16.mxu0 %v310
    %485 = vmatpush1.bf16.msra.mxu0 %v309
    %486 = vmatprep.subr.bf16.mxu0 %v314
    %487 = vmatpush1.bf16.msra.mxu0 %v313
    %488 = vmatprep.subr.bf16.mxu0 %v318
    %489 = vmatpush1.bf16.msra.mxu0 %v317
    %490 = vmatprep.subr.bf16.mxu0 %v322
    %491 = vmatpush1.bf16.msra.mxu0 %v321
    %492 = vmatprep.subr.bf16.mxu0 %v326
    %493 = vmatpush1.bf16.msra.mxu0 %v325
    %494 = vmatprep.subr.bf16.mxu0 %v330
    %495 = vmatpush1.bf16.msra.mxu0 %v329
    %496 = vmatprep.subr.bf16.mxu0 %v334
    %497 = vmatpush1.bf16.msra.mxu0 %v333
    %498 = vmatprep.subr.bf16.mxu0 %v338
    %499 = vmatpush1.bf16.msra.mxu0 %v337
    %500 = vmatprep.subr.bf16.mxu0 0
    %501 = vmatpush1.bf16.msra.mxu0 0
    %502 = vmatprep.subr.bf16.mxu0 0
    %503 = vmatpush1.bf16.msra.mxu0 0
    %504 = vmatprep.subr.bf16.mxu0 0
    %505 = vmatpush1.bf16.msra.mxu0 0
    %506 = vmatprep.subr.bf16.mxu0 0
    %507 = vmatpush1.bf16.msra.mxu0 0
    %508 = vmatprep.subr.bf16.mxu0 0
    %509 = vmatpush1.bf16.msra.mxu0 0
    %510 = vmatprep.subr.bf16.mxu0 0
    %511 = vmatpush1.bf16.msra.mxu0 0
    %512 = vmatprep.subr.bf16.mxu0 0
    %513 = vmatpush1.bf16.msra.mxu0 0
    %514 = vmatprep.subr.bf16.mxu0 0
    %515 = vmatpush1.bf16.msra.mxu0 0
    %516 = vmatprep.mubr.bf16.mxu0 0
    %517 = vmatmul.mubr.bf16.gmra.mrb[0].mxu0 %v149
    %v518 = vpop.f32.mrb[0].mxu0
    %v519 = vadd.f32 %v202, %v518
    %v520 = vpop.f32.mrb[0].mxu0
    %v521 = vadd.f32 %v206, %v520
    %v522 = vpop.f32.mrb[0].mxu0
    %v523 = vadd.f32 %v202, %v522
    %v524 = vpop.f32.mrb[0].mxu0
    %v525 = vadd.f32 %v206, %v524
    %526 = vmatprep.mubr.bf16.mxu0 0
    %527 = vmatmul.mubr.bf16.gmra.mrb[0].mxu0 %v150
    %v528 = vpop.f32.mrb[0].mxu0
    %v529 = vadd.f32 %v202, %v528
    %v530 = vpop.f32.mrb[0].mxu0
    %v531 = vadd.f32 %v206, %v530
    %v532 = vpop.f32.mrb[0].mxu0
    %v533 = vadd.f32 %v202, %v532
    %v534 = vpop.f32.mrb[0].mxu0
    %v535 = vadd.f32 %v206, %v534
    %536 = vmatprep.mubr.bf16.mxu0 0
    %537 = vmatmul.mubr.bf16.gmra.mrb[0].mxu0 %v151
    %v538 = vpop.f32.mrb[0].mxu0
    %v539 = vadd.f32 %v202, %v538
    %v540 = vpop.f32.mrb[0].mxu0
    %v541 = vadd.f32 %v206, %v540
    %v542 = vpop.f32.mrb[0].mxu0
    %v543 = vadd.f32 %v202, %v542
    %v544 = vpop.f32.mrb[0].mxu0
    %v545 = vadd.f32 %v206, %v544
    %546 = vmatprep.mubr.bf16.mxu0 0
    %547 = vmatmul.mubr.bf16.gmra.mrb[0].mxu0 %v152
    %v548 = vpop.f32.mrb[0].mxu0
    %v549 = vadd.f32 %v202, %v548
    %v550 = vpop.f32.mrb[0].mxu0
    %v551 = vadd.f32 %v206, %v550
    %v552 = vpop.f32.mrb[0].mxu0
    %v553 = vadd.f32 %v202, %v552
    %v554 = vpop.f32.mrb[0].mxu0
    %v555 = vadd.f32 %v206, %v554
    %556 = vmatprep.mubr.bf16.mxu0 0
    %557 = vmatmul.mubr.bf16.gmra.mrb[0].mxu0 %v153
    %v558 = vpop.f32.mrb[0].mxu0
    %v559 = vadd.f32 %v202, %v558
    %v560 = vpop.f32.mrb[0].mxu0
    %v561 = vadd.f32 %v206, %v560
    %v562 = vpop.f32.mrb[0].mxu0
    %v563 = vadd.f32 %v202, %v562
    %v564 = vpop.f32.mrb[0].mxu0
    %v565 = vadd.f32 %v206, %v564
    %566 = vmatprep.mubr.bf16.mxu0 0
    %567 = vmatmul.mubr.bf16.gmra.mrb[0].mxu0 %v154
    %v568 = vpop.f32.mrb[0].mxu0
    %v569 = vadd.f32 %v202, %v568
    %v570 = vpop.f32.mrb[0].mxu0
    %v571 = vadd.f32 %v206, %v570
    %v572 = vpop.f32.mrb[0].mxu0
    %v573 = vadd.f32 %v202, %v572
    %v574 = vpop.f32.mrb[0].mxu0
    %v575 = vadd.f32 %v206, %v574
    %576 = vmatprep.mubr.bf16.mxu0 0
    %577 = vmatmul.mubr.bf16.gmra.mrb[0].mxu0 %v155
    %v578 = vpop.f32.mrb[0].mxu0
    %v579 = vadd.f32 %v202, %v578
    %v580 = vpop.f32.mrb[0].mxu0
    %v581 = vadd.f32 %v206, %v580
    %v582 = vpop.f32.mrb[0].mxu0
    %v583 = vadd.f32 %v202, %v582
    %v584 = vpop.f32.mrb[0].mxu0
    %v585 = vadd.f32 %v206, %v584
    %586 = vmatprep.mubr.bf16.mxu0 0
    %587 = vmatmul.mubr.bf16.gmra.mrb[0].mxu0 %v156
    %v588 = vpop.f32.mrb[0].mxu0
    %v589 = vadd.f32 %v202, %v588
    %v590 = vpop.f32.mrb[0].mxu0
    %v591 = vadd.f32 %v206, %v590
    %v592 = vpop.f32.mrb[0].mxu0
    %v593 = vadd.f32 %v202, %v592
    %v594 = vpop.f32.mrb[0].mxu0
    %v595 = vadd.f32 %v206, %v594
    %596 = vdwg.mxu0
    %v597 = vpack.c.bf16 %v410, %v406
    %v598 = vpack.c.bf16 %v412, %v408
    %v599 = vpack.c.bf16 %v523, %v519
    %v600 = vpack.c.bf16 %v525, %v521
    %v601 = vpack.c.bf16 %v420, %v416
    %v602 = vpack.c.bf16 %v422, %v418
    %v603 = vpack.c.bf16 %v533, %v529
    %v604 = vpack.c.bf16 %v535, %v531
    %v605 = vpack.c.bf16 %v430, %v426
    %v606 = vpack.c.bf16 %v432, %v428
    %v607 = vpack.c.bf16 %v543, %v539
    %v608 = vpack.c.bf16 %v545, %v541
    %v609 = vpack.c.bf16 %v440, %v436
    %v610 = vpack.c.bf16 %v442, %v438
    %v611 = vpack.c.bf16 %v553, %v549
    %v612 = vpack.c.bf16 %v555, %v551
    %v613 = vpack.c.bf16 %v450, %v446
    %v614 = vpack.c.bf16 %v452, %v448
    %v615 = vpack.c.bf16 %v563, %v559
    %v616 = vpack.c.bf16 %v565, %v561
    %v617 = vpack.c.bf16 %v460, %v456
    %v618 = vpack.c.bf16 %v462, %v458
    %v619 = vpack.c.bf16 %v573, %v569
    %v620 = vpack.c.bf16 %v575, %v571
    %v621 = vpack.c.bf16 %v470, %v466
    %v622 = vpack.c.bf16 %v472, %v468
    %v623 = vpack.c.bf16 %v583, %v579
    %v624 = vpack.c.bf16 %v585, %v581
    %v625 = vpack.c.bf16 %v480, %v476
    %v626 = vpack.c.bf16 %v482, %v478
    %v627 = vpack.c.bf16 %v593, %v589
    %v628 = vpack.c.bf16 %v595, %v591
    %629 = vst [vmem:[#allocation3] sm:$0xff] %v597
    %630 = vst [vmem:[#allocation3 + $0x8] sm:$0xff] %v598
    %631 = vst [vmem:[#allocation3 + $0x10] sm:$0xff] %v599
    %632 = vst [vmem:[#allocation3 + $0x18] sm:$0xff] %v600
    %633 = vst [vmem:[#allocation3 + $0x20] sm:$0xff] %v601
    %634 = vst [vmem:[#allocation3 + $0x28] sm:$0xff] %v602
    %635 = vst [vmem:[#allocation3 + $0x30] sm:$0xff] %v603
    %636 = vst [vmem:[#allocation3 + $0x38] sm:$0xff] %v604
    %637 = vst [vmem:[#allocation3 + $0x40] sm:$0xff] %v605
    %638 = vst [vmem:[#allocation3 + $0x48] sm:$0xff] %v606
    %639 = vst [vmem:[#allocation3 + $0x50] sm:$0xff] %v607
    %640 = vst [vmem:[#allocation3 + $0x58] sm:$0xff] %v608
    %641 = vst [vmem:[#allocation3 + $0x60] sm:$0xff] %v609
    %642 = vst [vmem:[#allocation3 + $0x68] sm:$0xff] %v610
    %643 = vst [vmem:[#allocation3 + $0x70] sm:$0xff] %v611
    %644 = vst [vmem:[#allocation3 + $0x78] sm:$0xff] %v612
    %645 = vst [vmem:[#allocation3 + $0x80] sm:$0xff] %v613
    %646 = vst [vmem:[#allocation3 + $0x88] sm:$0xff] %v614
    %647 = vst [vmem:[#allocation3 + $0x90] sm:$0xff] %v615
    %648 = vst [vmem:[#allocation3 + $0x98] sm:$0xff] %v616
    %649 = vst [vmem:[#allocation3 + $0xa0] sm:$0xff] %v617
    %650 = vst [vmem:[#allocation3 + $0xa8] sm:$0xff] %v618
    %651 = vst [vmem:[#allocation3 + $0xb0] sm:$0xff] %v619
    %652 = vst [vmem:[#allocation3 + $0xb8] sm:$0xff] %v620
    %653 = vst [vmem:[#allocation3 + $0xc0] sm:$0xff] %v621
    %654 = vst [vmem:[#allocation3 + $0xc8] sm:$0xff] %v622
    %655 = vst [vmem:[#allocation3 + $0xd0] sm:$0xff] %v623
    %656 = vst [vmem:[#allocation3 + $0xd8] sm:$0xff] %v624
    %657 = vst [vmem:[#allocation3 + $0xe0] sm:$0xff] %v625
    %658 = vst [vmem:[#allocation3 + $0xe8] sm:$0xff] %v626
    %659 = vst [vmem:[#allocation3 + $0xf0] sm:$0xff] %v627
    %660 = vst [vmem:[#allocation3 + $0xf8] sm:$0xff] %v628
    %v661 = vld [vmem:[#allocation10] sm:$0xff]
    %v662 = vld [vmem:[#allocation10 + $0x8] sm:$0xff]
    %v663 = vld [vmem:[#allocation10 + $0x10] sm:$0xff]
    %v664 = vld [vmem:[#allocation10 + $0x18] sm:$0xff]
    %v665 = vld [vmem:[#allocation10 + $0x20] sm:$0xff]
    %v666 = vld [vmem:[#allocation10 + $0x28] sm:$0xff]
    %v667 = vld [vmem:[#allocation10 + $0x30] sm:$0xff]
    %v668 = vld [vmem:[#allocation10 + $0x38] sm:$0xff]
    %v669 = vld [vmem:[#allocation10 + $0x40] sm:$0xff]
    %v670 = vld [vmem:[#allocation10 + $0x48] sm:$0xff]
    %v671 = vld [vmem:[#allocation10 + $0x50] sm:$0xff]
    %v672 = vld [vmem:[#allocation10 + $0x58] sm:$0xff]
    %v673 = vld [vmem:[#allocation10 + $0x60] sm:$0xff]
    %v674 = vld [vmem:[#allocation10 + $0x68] sm:$0xff]
    %v675 = vld [vmem:[#allocation10 + $0x70] sm:$0xff]
    %v676 = vld [vmem:[#allocation10 + $0x78] sm:$0xff]
    %v677 = vld [vmem:[#allocation10 + $0x80] sm:$0xff]
    %v678 = vld [vmem:[#allocation10 + $0x88] sm:$0xff]
    %v679 = vld [vmem:[#allocation10 + $0x90] sm:$0xff]
    %v680 = vld [vmem:[#allocation10 + $0x98] sm:$0xff]
    %v681 = vld [vmem:[#allocation10 + $0xa0] sm:$0xff]
    %v682 = vld [vmem:[#allocation10 + $0xa8] sm:$0xff]
    %v683 = vld [vmem:[#allocation10 + $0xb0] sm:$0xff]
    %v684 = vld [vmem:[#allocation10 + $0xb8] sm:$0xff]
    %v685 = vld [vmem:[#allocation10 + $0xc0] sm:$0xff]
    %v686 = vld [vmem:[#allocation10 + $0xc8] sm:$0xff]
    %v687 = vld [vmem:[#allocation10 + $0xd0] sm:$0xff]
    %v688 = vld [vmem:[#allocation10 + $0xd8] sm:$0xff]
    %v689 = vld [vmem:[#allocation10 + $0xe0] sm:$0xff]
    %v690 = vld [vmem:[#allocation10 + $0xe8] sm:$0xff]
    %v691 = vld [vmem:[#allocation10 + $0xf0] sm:$0xff]
    %v692 = vld [vmem:[#allocation10 + $0xf8] sm:$0xff]
    %s693 = smul.u32 0, 4
    %s694 = smul.addr %s693, 8
    %s695 = scalar_lea.vmem [#allocation3], %s694
    %v696 = vld [vmem:[%s695] sm:$0xff]
    %v697 = vld [vmem:[%s695 + $0x8] sm:$0xff]
    %v698 = vld [vmem:[%s695 + $0x10] sm:$0xff]
    %v699 = vld [vmem:[%s695 + $0x18] sm:$0xff]
    %v700 = vunpack.c.l.bf16 %v696
    %v701 = vunpack.c.l.bf16 %v697
    %v702 = vunpack.c.l.bf16 %v698
    %v703 = vunpack.c.l.bf16 %v699
    %v704 = vunpack.c.h.bf16 %v696
    %v705 = vunpack.c.h.bf16 %v697
    %v706 = vunpack.c.h.bf16 %v698
    %v707 = vunpack.c.h.bf16 %v699
    %v740 = vunpack.c.l.b16 %v661
    %v741 = vunpack.c.h.b16 %v661
    %v742 = vunpack.c.l.b16 %v662
    %v743 = vunpack.c.h.b16 %v662
    %v744 = vunpack.c.l.b16 %v663
    %v745 = vunpack.c.h.b16 %v663
    %v746 = vunpack.c.l.b16 %v664
    %v747 = vunpack.c.h.b16 %v664
    %v748 = vunpack.c.l.b16 %v665
    %v749 = vunpack.c.h.b16 %v665
    %v750 = vunpack.c.l.b16 %v666
    %v751 = vunpack.c.h.b16 %v666
    %v752 = vunpack.c.l.b16 %v667
    %v753 = vunpack.c.h.b16 %v667
    %v754 = vunpack.c.l.b16 %v668
    %v755 = vunpack.c.h.b16 %v668
    %v756 = vunpack.c.l.b16 %v669
    %v757 = vunpack.c.h.b16 %v669
    %v758 = vunpack.c.l.b16 %v670
    %v759 = vunpack.c.h.b16 %v670
    %v760 = vunpack.c.l.b16 %v671
    %v761 = vunpack.c.h.b16 %v671
    %v762 = vunpack.c.l.b16 %v672
    %v763 = vunpack.c.h.b16 %v672
    %v764 = vunpack.c.l.b16 %v673
    %v765 = vunpack.c.h.b16 %v673
    %v766 = vunpack.c.l.b16 %v674
    %v767 = vunpack.c.h.b16 %v674
    %v768 = vunpack.c.l.b16 %v675
    %v769 = vunpack.c.h.b16 %v675
    %v770 = vunpack.c.l.b16 %v676
    %v771 = vunpack.c.h.b16 %v676
    %v772 = vunpack.c.l.b16 %v677
    %v773 = vunpack.c.h.b16 %v677
    %v774 = vunpack.c.l.b16 %v678
    %v775 = vunpack.c.h.b16 %v678
    %v776 = vunpack.c.l.b16 %v679
    %v777 = vunpack.c.h.b16 %v679
    %v778 = vunpack.c.l.b16 %v680
    %v779 = vunpack.c.h.b16 %v680
    %v780 = vunpack.c.l.b16 %v681
    %v781 = vunpack.c.h.b16 %v681
    %v782 = vunpack.c.l.b16 %v682
    %v783 = vunpack.c.h.b16 %v682
    %v784 = vunpack.c.l.b16 %v683
    %v785 = vunpack.c.h.b16 %v683
    %v786 = vunpack.c.l.b16 %v684
    %v787 = vunpack.c.h.b16 %v684
    %v788 = vunpack.c.l.b16 %v685
    %v789 = vunpack.c.h.b16 %v685
    %v790 = vunpack.c.l.b16 %v686
    %v791 = vunpack.c.h.b16 %v686
    %v792 = vunpack.c.l.b16 %v687
    %v793 = vunpack.c.h.b16 %v687
    %v794 = vunpack.c.l.b16 %v688
    %v795 = vunpack.c.h.b16 %v688
    %v796 = vunpack.c.l.b16 %v689
    %v797 = vunpack.c.h.b16 %v689
    %v798 = vunpack.c.l.b16 %v690
    %v799 = vunpack.c.h.b16 %v690
    %v800 = vunpack.c.l.b16 %v691
    %v801 = vunpack.c.h.b16 %v691
    %v802 = vunpack.c.l.b16 %v692
    %v803 = vunpack.c.h.b16 %v692
    %v804 = vpack.c.b16 %v744, %v740
    %v805 = vpack.c.b16 %v745, %v741
    %v806 = vpack.c.b16 %v746, %v742
    %v807 = vpack.c.b16 %v747, %v743
    %v808 = vpack.c.b16 %v752, %v748
    %v809 = vpack.c.b16 %v753, %v749
    %v810 = vpack.c.b16 %v754, %v750
    %v811 = vpack.c.b16 %v755, %v751
    %v812 = vpack.c.b16 %v760, %v756
    %v813 = vpack.c.b16 %v761, %v757
    %v814 = vpack.c.b16 %v762, %v758
    %v815 = vpack.c.b16 %v763, %v759
    %v816 = vpack.c.b16 %v768, %v764
    %v817 = vpack.c.b16 %v769, %v765
    %v818 = vpack.c.b16 %v770, %v766
    %v819 = vpack.c.b16 %v771, %v767
    %v820 = vpack.c.b16 %v776, %v772
    %v821 = vpack.c.b16 %v777, %v773
    %v822 = vpack.c.b16 %v778, %v774
    %v823 = vpack.c.b16 %v779, %v775
    %v824 = vpack.c.b16 %v784, %v780
    %v825 = vpack.c.b16 %v785, %v781
    %v826 = vpack.c.b16 %v786, %v782
    %v827 = vpack.c.b16 %v787, %v783
    %v828 = vpack.c.b16 %v792, %v788
    %v829 = vpack.c.b16 %v793, %v789
    %v830 = vpack.c.b16 %v794, %v790
    %v831 = vpack.c.b16 %v795, %v791
    %v832 = vpack.c.b16 %v800, %v796
    %v833 = vpack.c.b16 %v801, %v797
    %v834 = vpack.c.b16 %v802, %v798
    %v835 = vpack.c.b16 %v803, %v799
    %868 = vmatprep.subr.bf16.mxu0 %v805
    %869 = vmatpush1.bf16.msra.mxu0 %v804
    %870 = vmatprep.subr.bf16.mxu0 %v809
    %871 = vmatpush1.bf16.msra.mxu0 %v808
    %872 = vmatprep.subr.bf16.mxu0 %v813
    %873 = vmatpush1.bf16.msra.mxu0 %v812
    %874 = vmatprep.subr.bf16.mxu0 %v817
    %875 = vmatpush1.bf16.msra.mxu0 %v816
    %876 = vmatprep.subr.bf16.mxu0 %v821
    %877 = vmatpush1.bf16.msra.mxu0 %v820
    %878 = vmatprep.subr.bf16.mxu0 %v825
    %879 = vmatpush1.bf16.msra.mxu0 %v824
    %880 = vmatprep.subr.bf16.mxu0 %v829
    %881 = vmatpush1.bf16.msra.mxu0 %v828
    %882 = vmatprep.subr.bf16.mxu0 %v833
    %883 = vmatpush1.bf16.msra.mxu0 %v832
    %884 = vmatprep.subr.bf16.mxu0 0
    %885 = vmatpush1.bf16.msra.mxu0 0
    %886 = vmatprep.subr.bf16.mxu0 0
    %887 = vmatpush1.bf16.msra.mxu0 0
    %888 = vmatprep.subr.bf16.mxu0 0
    %889 = vmatpush1.bf16.msra.mxu0 0
    %890 = vmatprep.subr.bf16.mxu0 0
    %891 = vmatpush1.bf16.msra.mxu0 0
    %892 = vmatprep.subr.bf16.mxu0 0
    %893 = vmatpush1.bf16.msra.mxu0 0
    %894 = vmatprep.subr.bf16.mxu0 0
    %895 = vmatpush1.bf16.msra.mxu0 0
    %896 = vmatprep.subr.bf16.mxu0 0
    %897 = vmatpush1.bf16.msra.mxu0 0
    %898 = vmatprep.subr.bf16.mxu0 0
    %899 = vmatpush1.bf16.msra.mxu0 0
    %900 = vmatprep.mubr.bf16.mxu0 0
    %901 = vmatmul.mubr.bf16.gmra.mrb[0].mxu0 0
    %v902 = vpop.f32.mrb[0].mxu0
    %v903 = vadd.f32 0.0, %v902
    %v904 = vpop.f32.mrb[0].mxu0
    %v905 = vadd.f32 0.0, %v904
    %v906 = vpop.f32.mrb[0].mxu0
    %v907 = vadd.f32 0.0, %v906
    %v908 = vpop.f32.mrb[0].mxu0
    %v909 = vadd.f32 0.0, %v908
    %910 = vdwg.mxu0
    %911 = vmatprep.subr.bf16.mxu0 %v807
    %912 = vmatpush1.bf16.msra.mxu0 %v806
    %913 = vmatprep.subr.bf16.mxu0 %v811
    %914 = vmatpush1.bf16.msra.mxu0 %v810
    %915 = vmatprep.subr.bf16.mxu0 %v815
    %916 = vmatpush1.bf16.msra.mxu0 %v814
    %917 = vmatprep.subr.bf16.mxu0 %v819
    %918 = vmatpush1.bf16.msra.mxu0 %v818
    %919 = vmatprep.subr.bf16.mxu0 %v823
    %920 = vmatpush1.bf16.msra.mxu0 %v822
    %921 = vmatprep.subr.bf16.mxu0 %v827
    %922 = vmatpush1.bf16.msra.mxu0 %v826
    %923 = vmatprep.subr.bf16.mxu0 %v831
    %924 = vmatpush1.bf16.msra.mxu0 %v830
    %925 = vmatprep.subr.bf16.mxu0 %v835
    %926 = vmatpush1.bf16.msra.mxu0 %v834
    %927 = vmatprep.subr.bf16.mxu0 0
    %928 = vmatpush1.bf16.msra.mxu0 0
    %929 = vmatprep.subr.bf16.mxu0 0
    %930 = vmatpush1.bf16.msra.mxu0 0
    %931 = vmatprep.subr.bf16.mxu0 0
    %932 = vmatpush1.bf16.msra.mxu0 0
    %933 = vmatprep.subr.bf16.mxu0 0
    %934 = vmatpush1.bf16.msra.mxu0 0
    %935 = vmatprep.subr.bf16.mxu0 0
    %936 = vmatpush1.bf16.msra.mxu0 0
    %937 = vmatprep.subr.bf16.mxu0 0
    %938 = vmatpush1.bf16.msra.mxu0 0
    %939 = vmatprep.subr.bf16.mxu0 0
    %940 = vmatpush1.bf16.msra.mxu0 0
    %941 = vmatprep.subr.bf16.mxu0 0
    %942 = vmatpush1.bf16.msra.mxu0 0
    %943 = vmatprep.mubr.bf16.mxu0 0
    %944 = vmatmul.mubr.bf16.gmra.mrb[0].mxu0 0
    %v945 = vpop.f32.mrb[0].mxu0
    %v946 = vadd.f32 0.0, %v945
    %v947 = vpop.f32.mrb[0].mxu0
    %v948 = vadd.f32 0.0, %v947
    %v949 = vpop.f32.mrb[0].mxu0
    %v950 = vadd.f32 0.0, %v949
    %v951 = vpop.f32.mrb[0].mxu0
    %v952 = vadd.f32 0.0, %v951
    %953 = vdwg.mxu0
    %v954 = vadd.f32 %v700, %v903
    %v955 = vadd.f32 %v701, %v905
    %v956 = vadd.f32 %v702, %v946
    %v957 = vadd.f32 %v703, %v948
    %v958 = vadd.f32 %v704, %v907
    %v959 = vadd.f32 %v705, %v909
    %v960 = vadd.f32 %v706, %v950
    %v961 = vadd.f32 %v707, %v952
    %v962 = vxor.u32 %v954, 2147483648
    %v963 = vxor.u32 %v955, 2147483648
    %v964 = vxor.u32 %v956, 2147483648
    %v965 = vxor.u32 %v958, 2147483648
    %v966 = vxor.u32 %v959, 2147483648
    %v967 = vxor.u32 %v960, 2147483648
    %v968 = vmul.f32 %v962, 1.442695
    %v969 = vpow.pop %v968
    %v970 = vmul.f32 %v963, 1.442695
    %v971 = vpow.pop %v970
    %v972 = vmul.f32 %v964, 1.442695
    %v973 = vpow.pop %v972
    %v974 = vmul.f32 %v965, 1.442695
    %v975 = vpow.pop %v974
    %v976 = vmul.f32 %v966, 1.442695
    %v977 = vpow.pop %v976
    %v978 = vmul.f32 %v967, 1.442695
    %v979 = vpow.pop %v978
    %v980 = vadd.f32 %v969, 1.0
    %v981 = vadd.f32 %v971, 1.0
    %v982 = vadd.f32 %v973, 1.0
    %v983 = vadd.f32 %v975, 1.0
    %v984 = vadd.f32 %v977, 1.0
    %v985 = vadd.f32 %v979, 1.0
    %v986 = vrcp.pop %v980
    %v987 = vmul.f32 1.0, %v986
    %v988 = vrcp.pop %v981
    %v989 = vmul.f32 1.0, %v988
    %v990 = vrcp.pop %v982
    %v991 = vmul.f32 1.0, %v990
    %v992 = vrcp.pop %v983
    %v993 = vmul.f32 1.0, %v992
    %v994 = vrcp.pop %v984
    %v995 = vmul.f32 1.0, %v994
    %v996 = vrcp.pop %v985
    %v997 = vmul.f32 1.0, %v996
    %v998 = vtanh.pop %v957
    %v999 = vtanh.pop %v961
    %v1000 = vmul.f32 %v989, 0.0
    %v1001 = vmul.f32 %v995, 0.0
    %v1002 = vmul.f32 %v987, %v998
    %v1003 = vmul.f32 %v993, %v999
    %v1004 = vadd.f32 %v1000, %v1002
    %v1005 = vadd.f32 %v1001, %v1003
    %v1006 = vtanh.pop %v1004
    %v1007 = vtanh.pop %v1005
    %v1008 = vmul.f32 %v991, %v1006
    %v1009 = vmul.f32 %v997, %v1007
    %1010 = vst [vmem:[#allocation2] sm:$0xff] %v1008
    %1011 = vst [vmem:[#allocation2 + $0x8] sm:$0xff] %v1009
    %s1012 = smul.u32 1, 4
    %s1013 = smul.addr %s1012, 8
    %s1014 = scalar_lea.vmem [#allocation3], %s1013
    %v1015 = vld [vmem:[%s1014] sm:$0xff]
    %v1016 = vld [vmem:[%s1014 + $0x8] sm:$0xff]
    %v1017 = vld [vmem:[%s1014 + $0x10] sm:$0xff]
    %v1018 = vld [vmem:[%s1014 + $0x18] sm:$0xff]
    %v1019 = vunpack.c.l.bf16 %v1015
    %v1020 = vunpack.c.l.bf16 %v1016
    %v1021 = vunpack.c.l.bf16 %v1017
    %v1022 = vunpack.c.l.bf16 %v1018
    %v1023 = vunpack.c.h.bf16 %v1015
    %v1024 = vunpack.c.h.bf16 %v1016
    %v1025 = vunpack.c.h.bf16 %v1017
    %v1026 = vunpack.c.h.bf16 %v1018
    %v1027 = vpack.c.bf16 %v1009, %v1008
    %1028 = vmatprep.subr.bf16.mxu0 %v805
    %1029 = vmatpush1.bf16.msra.mxu0 %v804
    %1030 = vmatprep.subr.bf16.mxu0 %v809
    %1031 = vmatpush1.bf16.msra.mxu0 %v808
    %1032 = vmatprep.subr.bf16.mxu0 %v813
    %1033 = vmatpush1.bf16.msra.mxu0 %v812
    %1034 = vmatprep.subr.bf16.mxu0 %v817
    %1035 = vmatpush1.bf16.msra.mxu0 %v816
    %1036 = vmatprep.subr.bf16.mxu0 %v821
    %1037 = vmatpush1.bf16.msra.mxu0 %v820
    %1038 = vmatprep.subr.bf16.mxu0 %v825
    %1039 = vmatpush1.bf16.msra.mxu0 %v824
    %1040 = vmatprep.subr.bf16.mxu0 %v829
    %1041 = vmatpush1.bf16.msra.mxu0 %v828
    %1042 = vmatprep.subr.bf16.mxu0 %v833
    %1043 = vmatpush1.bf16.msra.mxu0 %v832
    %1044 = vmatprep.subr.bf16.mxu0 0
    %1045 = vmatpush1.bf16.msra.mxu0 0
    %1046 = vmatprep.subr.bf16.mxu0 0
    %1047 = vmatpush1.bf16.msra.mxu0 0
    %1048 = vmatprep.subr.bf16.mxu0 0
    %1049 = vmatpush1.bf16.msra.mxu0 0
    %1050 = vmatprep.subr.bf16.mxu0 0
    %1051 = vmatpush1.bf16.msra.mxu0 0
    %1052 = vmatprep.subr.bf16.mxu0 0
    %1053 = vmatpush1.bf16.msra.mxu0 0
    %1054 = vmatprep.subr.bf16.mxu0 0
    %1055 = vmatpush1.bf16.msra.mxu0 0
    %1056 = vmatprep.subr.bf16.mxu0 0
    %1057 = vmatpush1.bf16.msra.mxu0 0
    %1058 = vmatprep.subr.bf16.mxu0 0
    %1059 = vmatpush1.bf16.msra.mxu0 0
    %1060 = vmatprep.mubr.bf16.mxu0 0
    %1061 = vmatmul.mubr.bf16.gmra.mrb[0].mxu0 %v1027
    %v1062 = vpop.f32.mrb[0].mxu0
    %v1063 = vadd.f32 0.0, %v1062
    %v1064 = vpop.f32.mrb[0].mxu0
    %v1065 = vadd.f32 0.0, %v1064
    %v1066 = vpop.f32.mrb[0].mxu0
    %v1067 = vadd.f32 0.0, %v1066
    %v1068 = vpop.f32.mrb[0].mxu0
    %v1069 = vadd.f32 0.0, %v1068
    %1070 = vdwg.mxu0
    %1071 = vmatprep.subr.bf16.mxu0 %v807
    %1072 = vmatpush1.bf16.msra.mxu0 %v806
    %1073 = vmatprep.subr.bf16.mxu0 %v811
    %1074 = vmatpush1.bf16.msra.mxu0 %v810
    %1075 = vmatprep.subr.bf16.mxu0 %v815
    %1076 = vmatpush1.bf16.msra.mxu0 %v814
    %1077 = vmatprep.subr.bf16.mxu0 %v819
    %1078 = vmatpush1.bf16.msra.mxu0 %v818
    %1079 = vmatprep.subr.bf16.mxu0 %v823
    %1080 = vmatpush1.bf16.msra.mxu0 %v822
    %1081 = vmatprep.subr.bf16.mxu0 %v827
    %1082 = vmatpush1.bf16.msra.mxu0 %v826
    %1083 = vmatprep.subr.bf16.mxu0 %v831
    %1084 = vmatpush1.bf16.msra.mxu0 %v830
    %1085 = vmatprep.subr.bf16.mxu0 %v835
    %1086 = vmatpush1.bf16.msra.mxu0 %v834
    %1087 = vmatprep.subr.bf16.mxu0 0
    %1088 = vmatpush1.bf16.msra.mxu0 0
    %1089 = vmatprep.subr.bf16.mxu0 0
    %1090 = vmatpush1.bf16.msra.mxu0 0
    %1091 = vmatprep.subr.bf16.mxu0 0
    %1092 = vmatpush1.bf16.msra.mxu0 0
    %1093 = vmatprep.subr.bf16.mxu0 0
    %1094 = vmatpush1.bf16.msra.mxu0 0
    %1095 = vmatprep.subr.bf16.mxu0 0
    %1096 = vmatpush1.bf16.msra.mxu0 0
    %1097 = vmatprep.subr.bf16.mxu0 0
    %1098 = vmatpush1.bf16.msra.mxu0 0
    %1099 = vmatprep.subr.bf16.mxu0 0
    %1100 = vmatpush1.bf16.msra.mxu0 0
    %1101 = vmatprep.subr.bf16.mxu0 0
    %1102 = vmatpush1.bf16.msra.mxu0 0
    %1103 = vmatprep.mubr.bf16.mxu0 0
    %1104 = vmatmul.mubr.bf16.gmra.mrb[0].mxu0 %v1027
    %v1105 = vpop.f32.mrb[0].mxu0
    %v1106 = vadd.f32 0.0, %v1105
    %v1107 = vpop.f32.mrb[0].mxu0
    %v1108 = vadd.f32 0.0, %v1107
    %v1109 = vpop.f32.mrb[0].mxu0
    %v1110 = vadd.f32 0.0, %v1109
    %v1111 = vpop.f32.mrb[0].mxu0
    %v1112 = vadd.f32 0.0, %v1111
    %1113 = vdwg.mxu0
    %v1114 = vadd.f32 %v1019, %v1063
    %v1115 = vadd.f32 %v1020, %v1065
    %v1116 = vadd.f32 %v1021, %v1106
    %v1117 = vadd.f32 %v1022, %v1108
    %v1118 = vadd.f32 %v1023, %v1067
    %v1119 = vadd.f32 %v1024, %v1069
    %v1120 = vadd.f32 %v1025, %v1110
    %v1121 = vadd.f32 %v1026, %v1112
    %v1122 = vxor.u32 %v1114, 2147483648
    %v1123 = vxor.u32 %v1115, 2147483648
    %v1124 = vxor.u32 %v1116, 2147483648
    %v1125 = vxor.u32 %v1118, 2147483648
    %v1126 = vxor.u32 %v1119, 2147483648
    %v1127 = vxor.u32 %v1120, 2147483648
    %v1128 = vmul.f32 %v1122, 1.442695
    %v1129 = vpow.pop %v1128
    %v1130 = vmul.f32 %v1123, 1.442695
    %v1131 = vpow.pop %v1130
    %v1132 = vmul.f32 %v1124, 1.442695
    %v1133 = vpow.pop %v1132
    %v1134 = vmul.f32 %v1125, 1.442695
    %v1135 = vpow.pop %v1134
    %v1136 = vmul.f32 %v1126, 1.442695
    %v1137 = vpow.pop %v1136
    %v1138 = vmul.f32 %v1127, 1.442695
    %v1139 = vpow.pop %v1138
    %v1140 = vadd.f32 %v1129, 1.0
    %v1141 = vadd.f32 %v1131, 1.0
    %v1142 = vadd.f32 %v1133, 1.0
    %v1143 = vadd.f32 %v1135, 1.0
    %v1144 = vadd.f32 %v1137, 1.0
    %v1145 = vadd.f32 %v1139, 1.0
    %v1146 = vrcp.pop %v1140
    %v1147 = vmul.f32 1.0, %v1146
    %v1148 = vrcp.pop %v1141
    %v1149 = vmul.f32 1.0, %v1148
    %v1150 = vrcp.pop %v1142
    %v1151 = vmul.f32 1.0, %v1150
    %v1152 = vrcp.pop %v1143
    %v1153 = vmul.f32 1.0, %v1152
    %v1154 = vrcp.pop %v1144
    %v1155 = vmul.f32 1.0, %v1154
    %v1156 = vrcp.pop %v1145
    %v1157 = vmul.f32 1.0, %v1156
    %v1158 = vtanh.pop %v1117
    %v1159 = vtanh.pop %v1121
    %v1160 = vmul.f32 %v1149, %v1004
    %v1161 = vmul.f32 %v1155, %v1005
    %v1162 = vmul.f32 %v1147, %v1158
    %v1163 = vmul.f32 %v1153, %v1159
    %v1164 = vadd.f32 %v1160, %v1162
    %v1165 = vadd.f32 %v1161, %v1163
    %v1166 = vtanh.pop %v1164
    %v1167 = vtanh.pop %v1165
    %v1168 = vmul.f32 %v1151, %v1166
    %v1169 = vmul.f32 %v1157, %v1167
    %s1170 = scalar_lea.vmem [#allocation2], 16
    %1171 = vst [vmem:[%s1170] sm:$0xff] %v1168
    %1172 = vst [vmem:[%s1170 + $0x8] sm:$0xff] %v1169
    %s1173 = smul.u32 2, 4
    %s1174 = smul.addr %s1173, 8
    %s1175 = scalar_lea.vmem [#allocation3], %s1174
    %v1176 = vld [vmem:[%s1175] sm:$0xff]
    %v1177 = vld [vmem:[%s1175 + $0x8] sm:$0xff]
    %v1178 = vld [vmem:[%s1175 + $0x10] sm:$0xff]
    %v1179 = vld [vmem:[%s1175 + $0x18] sm:$0xff]
    %v1180 = vunpack.c.l.bf16 %v1176
    %v1181 = vunpack.c.l.bf16 %v1177
    %v1182 = vunpack.c.l.bf16 %v1178
    %v1183 = vunpack.c.l.bf16 %v1179
    %v1184 = vunpack.c.h.bf16 %v1176
    %v1185 = vunpack.c.h.bf16 %v1177
    %v1186 = vunpack.c.h.bf16 %v1178
    %v1187 = vunpack.c.h.bf16 %v1179
    %v1188 = vpack.c.bf16 %v1169, %v1168
    %1189 = vmatprep.subr.bf16.mxu0 %v805
    %1190 = vmatpush1.bf16.msra.mxu0 %v804
    %1191 = vmatprep.subr.bf16.mxu0 %v809
    %1192 = vmatpush1.bf16.msra.mxu0 %v808
    %1193 = vmatprep.subr.bf16.mxu0 %v813
    %1194 = vmatpush1.bf16.msra.mxu0 %v812
    %1195 = vmatprep.subr.bf16.mxu0 %v817
    %1196 = vmatpush1.bf16.msra.mxu0 %v816
    %1197 = vmatprep.subr.bf16.mxu0 %v821
    %1198 = vmatpush1.bf16.msra.mxu0 %v820
    %1199 = vmatprep.subr.bf16.mxu0 %v825
    %1200 = vmatpush1.bf16.msra.mxu0 %v824
    %1201 = vmatprep.subr.bf16.mxu0 %v829
    %1202 = vmatpush1.bf16.msra.mxu0 %v828
    %1203 = vmatprep.subr.bf16.mxu0 %v833
    %1204 = vmatpush1.bf16.msra.mxu0 %v832
    %1205 = vmatprep.subr.bf16.mxu0 0
    %1206 = vmatpush1.bf16.msra.mxu0 0
    %1207 = vmatprep.subr.bf16.mxu0 0
    %1208 = vmatpush1.bf16.msra.mxu0 0
    %1209 = vmatprep.subr.bf16.mxu0 0
    %1210 = vmatpush1.bf16.msra.mxu0 0
    %1211 = vmatprep.subr.bf16.mxu0 0
    %1212 = vmatpush1.bf16.msra.mxu0 0
    %1213 = vmatprep.subr.bf16.mxu0 0
    %1214 = vmatpush1.bf16.msra.mxu0 0
    %1215 = vmatprep.subr.bf16.mxu0 0
    %1216 = vmatpush1.bf16.msra.mxu0 0
    %1217 = vmatprep.subr.bf16.mxu0 0
    %1218 = vmatpush1.bf16.msra.mxu0 0
    %1219 = vmatprep.subr.bf16.mxu0 0
    %1220 = vmatpush1.bf16.msra.mxu0 0
    %1221 = vmatprep.mubr.bf16.mxu0 0
    %1222 = vmatmul.mubr.bf16.gmra.mrb[0].mxu0 %v1188
    %v1223 = vpop.f32.mrb[0].mxu0
    %v1224 = vadd.f32 0.0, %v1223
    %v1225 = vpop.f32.mrb[0].mxu0
    %v1226 = vadd.f32 0.0, %v1225
    %v1227 = vpop.f32.mrb[0].mxu0
    %v1228 = vadd.f32 0.0, %v1227
    %v1229 = vpop.f32.mrb[0].mxu0
    %v1230 = vadd.f32 0.0, %v1229
    %1231 = vdwg.mxu0
    %1232 = vmatprep.subr.bf16.mxu0 %v807
    %1233 = vmatpush1.bf16.msra.mxu0 %v806
    %1234 = vmatprep.subr.bf16.mxu0 %v811
    %1235 = vmatpush1.bf16.msra.mxu0 %v810
    %1236 = vmatprep.subr.bf16.mxu0 %v815
    %1237 = vmatpush1.bf16.msra.mxu0 %v814
    %1238 = vmatprep.subr.bf16.mxu0 %v819
    %1239 = vmatpush1.bf16.msra.mxu0 %v818
    %1240 = vmatprep.subr.bf16.mxu0 %v823
    %1241 = vmatpush1.bf16.msra.mxu0 %v822
    %1242 = vmatprep.subr.bf16.mxu0 %v827
    %1243 = vmatpush1.bf16.msra.mxu0 %v826
    %1244 = vmatprep.subr.bf16.mxu0 %v831
    %1245 = vmatpush1.bf16.msra.mxu0 %v830
    %1246 = vmatprep.subr.bf16.mxu0 %v835
    %1247 = vmatpush1.bf16.msra.mxu0 %v834
    %1248 = vmatprep.subr.bf16.mxu0 0
    %1249 = vmatpush1.bf16.msra.mxu0 0
    %1250 = vmatprep.subr.bf16.mxu0 0
    %1251 = vmatpush1.bf16.msra.mxu0 0
    %1252 = vmatprep.subr.bf16.mxu0 0
    %1253 = vmatpush1.bf16.msra.mxu0 0
    %1254 = vmatprep.subr.bf16.mxu0 0
    %1255 = vmatpush1.bf16.msra.mxu0 0
    %1256 = vmatprep.subr.bf16.mxu0 0
    %1257 = vmatpush1.bf16.msra.mxu0 0
    %1258 = vmatprep.subr.bf16.mxu0 0
    %1259 = vmatpush1.bf16.msra.mxu0 0
    %1260 = vmatprep.subr.bf16.mxu0 0
    %1261 = vmatpush1.bf16.msra.mxu0 0
    %1262 = vmatprep.subr.bf16.mxu0 0
    %1263 = vmatpush1.bf16.msra.mxu0 0
    %1264 = vmatprep.mubr.bf16.mxu0 0
    %1265 = vmatmul.mubr.bf16.gmra.mrb[0].mxu0 %v1188
    %v1266 = vpop.f32.mrb[0].mxu0
    %v1267 = vadd.f32 0.0, %v1266
    %v1268 = vpop.f32.mrb[0].mxu0
    %v1269 = vadd.f32 0.0, %v1268
    %v1270 = vpop.f32.mrb[0].mxu0
    %v1271 = vadd.f32 0.0, %v1270
    %v1272 = vpop.f32.mrb[0].mxu0
    %v1273 = vadd.f32 0.0, %v1272
    %1274 = vdwg.mxu0
    %v1275 = vadd.f32 %v1180, %v1224
    %v1276 = vadd.f32 %v1181, %v1226
    %v1277 = vadd.f32 %v1182, %v1267
    %v1278 = vadd.f32 %v1183, %v1269
    %v1279 = vadd.f32 %v1184, %v1228
    %v1280 = vadd.f32 %v1185, %v1230
    %v1281 = vadd.f32 %v1186, %v1271
    %v1282 = vadd.f32 %v1187, %v1273
    %v1283 = vxor.u32 %v1275, 2147483648
    %v1284 = vxor.u32 %v1276, 2147483648
    %v1285 = vxor.u32 %v1277, 2147483648
    %v1286 = vxor.u32 %v1279, 2147483648
    %v1287 = vxor.u32 %v1280, 2147483648
    %v1288 = vxor.u32 %v1281, 2147483648
    %v1289 = vmul.f32 %v1283, 1.442695
    %v1290 = vpow.pop %v1289
    %v1291 = vmul.f32 %v1284, 1.442695
    %v1292 = vpow.pop %v1291
    %v1293 = vmul.f32 %v1285, 1.442695
    %v1294 = vpow.pop %v1293
    %v1295 = vmul.f32 %v1286, 1.442695
    %v1296 = vpow.pop %v1295
    %v1297 = vmul.f32 %v1287, 1.442695
    %v1298 = vpow.pop %v1297
    %v1299 = vmul.f32 %v1288, 1.442695
    %v1300 = vpow.pop %v1299
    %v1301 = vadd.f32 %v1290, 1.0
    %v1302 = vadd.f32 %v1292, 1.0
    %v1303 = vadd.f32 %v1294, 1.0
    %v1304 = vadd.f32 %v1296, 1.0
    %v1305 = vadd.f32 %v1298, 1.0
    %v1306 = vadd.f32 %v1300, 1.0
    %v1307 = vrcp.pop %v1301
    %v1308 = vmul.f32 1.0, %v1307
    %v1309 = vrcp.pop %v1302
    %v1310 = vmul.f32 1.0, %v1309
    %v1311 = vrcp.pop %v1303
    %v1312 = vmul.f32 1.0, %v1311
    %v1313 = vrcp.pop %v1304
    %v1314 = vmul.f32 1.0, %v1313
    %v1315 = vrcp.pop %v1305
    %v1316 = vmul.f32 1.0, %v1315
    %v1317 = vrcp.pop %v1306
    %v1318 = vmul.f32 1.0, %v1317
    %v1319 = vtanh.pop %v1278
    %v1320 = vtanh.pop %v1282
    %v1321 = vmul.f32 %v1310, %v1164
    %v1322 = vmul.f32 %v1316, %v1165
    %v1323 = vmul.f32 %v1308, %v1319
    %v1324 = vmul.f32 %v1314, %v1320
    %v1325 = vadd.f32 %v1321, %v1323
    %v1326 = vadd.f32 %v1322, %v1324
    %v1327 = vtanh.pop %v1325
    %v1328 = vtanh.pop %v1326
    %v1329 = vmul.f32 %v1312, %v1327
    %v1330 = vmul.f32 %v1318, %v1328
    %s1331 = scalar_lea.vmem [#allocation2], 32
    %1332 = vst [vmem:[%s1331] sm:$0xff] %v1329
    %1333 = vst [vmem:[%s1331 + $0x8] sm:$0xff] %v1330
    %s1334 = smul.u32 3, 4
    %s1335 = smul.addr %s1334, 8
    %s1336 = scalar_lea.vmem [#allocation3], %s1335
    %v1337 = vld [vmem:[%s1336] sm:$0xff]
    %v1338 = vld [vmem:[%s1336 + $0x8] sm:$0xff]
    %v1339 = vld [vmem:[%s1336 + $0x10] sm:$0xff]
    %v1340 = vld [vmem:[%s1336 + $0x18] sm:$0xff]
    %v1341 = vunpack.c.l.bf16 %v1337
    %v1342 = vunpack.c.l.bf16 %v1338
    %v1343 = vunpack.c.l.bf16 %v1339
    %v1344 = vunpack.c.l.bf16 %v1340
    %v1345 = vunpack.c.h.bf16 %v1337
    %v1346 = vunpack.c.h.bf16 %v1338
    %v1347 = vunpack.c.h.bf16 %v1339
    %v1348 = vunpack.c.h.bf16 %v1340
    %v1349 = vpack.c.bf16 %v1330, %v1329
    %1350 = vmatprep.subr.bf16.mxu0 %v805
    %1351 = vmatpush1.bf16.msra.mxu0 %v804
    %1352 = vmatprep.subr.bf16.mxu0 %v809
    %1353 = vmatpush1.bf16.msra.mxu0 %v808
    %1354 = vmatprep.subr.bf16.mxu0 %v813
    %1355 = vmatpush1.bf16.msra.mxu0 %v812
    %1356 = vmatprep.subr.bf16.mxu0 %v817
    %1357 = vmatpush1.bf16.msra.mxu0 %v816
    %1358 = vmatprep.subr.bf16.mxu0 %v821
    %1359 = vmatpush1.bf16.msra.mxu0 %v820
    %1360 = vmatprep.subr.bf16.mxu0 %v825
    %1361 = vmatpush1.bf16.msra.mxu0 %v824
    %1362 = vmatprep.subr.bf16.mxu0 %v829
    %1363 = vmatpush1.bf16.msra.mxu0 %v828
    %1364 = vmatprep.subr.bf16.mxu0 %v833
    %1365 = vmatpush1.bf16.msra.mxu0 %v832
    %1366 = vmatprep.subr.bf16.mxu0 0
    %1367 = vmatpush1.bf16.msra.mxu0 0
    %1368 = vmatprep.subr.bf16.mxu0 0
    %1369 = vmatpush1.bf16.msra.mxu0 0
    %1370 = vmatprep.subr.bf16.mxu0 0
    %1371 = vmatpush1.bf16.msra.mxu0 0
    %1372 = vmatprep.subr.bf16.mxu0 0
    %1373 = vmatpush1.bf16.msra.mxu0 0
    %1374 = vmatprep.subr.bf16.mxu0 0
    %1375 = vmatpush1.bf16.msra.mxu0 0
    %1376 = vmatprep.subr.bf16.mxu0 0
    %1377 = vmatpush1.bf16.msra.mxu0 0
    %1378 = vmatprep.subr.bf16.mxu0 0
    %1379 = vmatpush1.bf16.msra.mxu0 0
    %1380 = vmatprep.subr.bf16.mxu0 0
    %1381 = vmatpush1.bf16.msra.mxu0 0
    %1382 = vmatprep.mubr.bf16.mxu0 0
    %1383 = vmatmul.mubr.bf16.gmra.mrb[0].mxu0 %v1349
    %v1384 = vpop.f32.mrb[0].mxu0
    %v1385 = vadd.f32 0.0, %v1384
    %v1386 = vpop.f32.mrb[0].mxu0
    %v1387 = vadd.f32 0.0, %v1386
    %v1388 = vpop.f32.mrb[0].mxu0
    %v1389 = vadd.f32 0.0, %v1388
    %v1390 = vpop.f32.mrb[0].mxu0
    %v1391 = vadd.f32 0.0, %v1390
    %1392 = vdwg.mxu0
    %1393 = vmatprep.subr.bf16.mxu0 %v807
    %1394 = vmatpush1.bf16.msra.mxu0 %v806
    %1395 = vmatprep.subr.bf16.mxu0 %v811
    %1396 = vmatpush1.bf16.msra.mxu0 %v810
    %1397 = vmatprep.subr.bf16.mxu0 %v815
    %1398 = vmatpush1.bf16.msra.mxu0 %v814
    %1399 = vmatprep.subr.bf16.mxu0 %v819
    %1400 = vmatpush1.bf16.msra.mxu0 %v818
    %1401 = vmatprep.subr.bf16.mxu0 %v823
    %1402 = vmatpush1.bf16.msra.mxu0 %v822
    %1403 = vmatprep.subr.bf16.mxu0 %v827
    %1404 = vmatpush1.bf16.msra.mxu0 %v826
    %1405 = vmatprep.subr.bf16.mxu0 %v831
    %1406 = vmatpush1.bf16.msra.mxu0 %v830
    %1407 = vmatprep.subr.bf16.mxu0 %v835
    %1408 = vmatpush1.bf16.msra.mxu0 %v834
    %1409 = vmatprep.subr.bf16.mxu0 0
    %1410 = vmatpush1.bf16.msra.mxu0 0
    %1411 = vmatprep.subr.bf16.mxu0 0
    %1412 = vmatpush1.bf16.msra.mxu0 0
    %1413 = vmatprep.subr.bf16.mxu0 0
    %1414 = vmatpush1.bf16.msra.mxu0 0
    %1415 = vmatprep.subr.bf16.mxu0 0
    %1416 = vmatpush1.bf16.msra.mxu0 0
    %1417 = vmatprep.subr.bf16.mxu0 0
    %1418 = vmatpush1.bf16.msra.mxu0 0
    %1419 = vmatprep.subr.bf16.mxu0 0
    %1420 = vmatpush1.bf16.msra.mxu0 0
    %1421 = vmatprep.subr.bf16.mxu0 0
    %1422 = vmatpush1.bf16.msra.mxu0 0
    %1423 = vmatprep.subr.bf16.mxu0 0
    %1424 = vmatpush1.bf16.msra.mxu0 0
    %1425 = vmatprep.mubr.bf16.mxu0 0
    %1426 = vmatmul.mubr.bf16.gmra.mrb[0].mxu0 %v1349
    %v1427 = vpop.f32.mrb[0].mxu0
    %v1428 = vadd.f32 0.0, %v1427
    %v1429 = vpop.f32.mrb[0].mxu0
    %v1430 = vadd.f32 0.0, %v1429
    %v1431 = vpop.f32.mrb[0].mxu0
    %v1432 = vadd.f32 0.0, %v1431
    %v1433 = vpop.f32.mrb[0].mxu0
    %v1434 = vadd.f32 0.0, %v1433
    %1435 = vdwg.mxu0
    %v1436 = vadd.f32 %v1341, %v1385
    %v1437 = vadd.f32 %v1342, %v1387
    %v1438 = vadd.f32 %v1343, %v1428
    %v1439 = vadd.f32 %v1344, %v1430
    %v1440 = vadd.f32 %v1345, %v1389
    %v1441 = vadd.f32 %v1346, %v1391
    %v1442 = vadd.f32 %v1347, %v1432
    %v1443 = vadd.f32 %v1348, %v1434
    %v1444 = vxor.u32 %v1436, 2147483648
    %v1445 = vxor.u32 %v1437, 2147483648
    %v1446 = vxor.u32 %v1438, 2147483648
    %v1447 = vxor.u32 %v1440, 2147483648
    %v1448 = vxor.u32 %v1441, 2147483648
    %v1449 = vxor.u32 %v1442, 2147483648
    %v1450 = vmul.f32 %v1444, 1.442695
    %v1451 = vpow.pop %v1450
    %v1452 = vmul.f32 %v1445, 1.442695
    %v1453 = vpow.pop %v1452
    %v1454 = vmul.f32 %v1446, 1.442695
    %v1455 = vpow.pop %v1454
    %v1456 = vmul.f32 %v1447, 1.442695
    %v1457 = vpow.pop %v1456
    %v1458 = vmul.f32 %v1448, 1.442695
    %v1459 = vpow.pop %v1458
    %v1460 = vmul.f32 %v1449, 1.442695
    %v1461 = vpow.pop %v1460
    %v1462 = vadd.f32 %v1451, 1.0
    %v1463 = vadd.f32 %v1453, 1.0
    %v1464 = vadd.f32 %v1455, 1.0
    %v1465 = vadd.f32 %v1457, 1.0
    %v1466 = vadd.f32 %v1459, 1.0
    %v1467 = vadd.f32 %v1461, 1.0
    %v1468 = vrcp.pop %v1462
    %v1469 = vmul.f32 1.0, %v1468
    %v1470 = vrcp.pop %v1463
    %v1471 = vmul.f32 1.0, %v1470
    %v1472 = vrcp.pop %v1464
    %v1473 = vmul.f32 1.0, %v1472
    %v1474 = vrcp.pop %v1465
    %v1475 = vmul.f32 1.0, %v1474
    %v1476 = vrcp.pop %v1466
    %v1477 = vmul.f32 1.0, %v1476
    %v1478 = vrcp.pop %v1467
    %v1479 = vmul.f32 1.0, %v1478
    %v1480 = vtanh.pop %v1439
    %v1481 = vtanh.pop %v1443
    %v1482 = vmul.f32 %v1471, %v1325
    %v1483 = vmul.f32 %v1477, %v1326
    %v1484 = vmul.f32 %v1469, %v1480
    %v1485 = vmul.f32 %v1475, %v1481
    %v1486 = vadd.f32 %v1482, %v1484
    %v1487 = vadd.f32 %v1483, %v1485
    %v1488 = vtanh.pop %v1486
    %v1489 = vtanh.pop %v1487
    %v1490 = vmul.f32 %v1473, %v1488
    %v1491 = vmul.f32 %v1479, %v1489
    %s1492 = scalar_lea.vmem [#allocation2], 48
    %1493 = vst [vmem:[%s1492] sm:$0xff] %v1490
    %1494 = vst [vmem:[%s1492 + $0x8] sm:$0xff] %v1491
    %s1495 = smul.u32 4, 4
    %s1496 = smul.addr %s1495, 8
    %s1497 = scalar_lea.vmem [#allocation3], %s1496
    %v1498 = vld [vmem:[%s1497] sm:$0xff]
    %v1499 = vld [vmem:[%s1497 + $0x8] sm:$0xff]
    %v1500 = vld [vmem:[%s1497 + $0x10] sm:$0xff]
    %v1501 = vld [vmem:[%s1497 + $0x18] sm:$0xff]
    %v1502 = vunpack.c.l.bf16 %v1498
    %v1503 = vunpack.c.l.bf16 %v1499
    %v1504 = vunpack.c.l.bf16 %v1500
    %v1505 = vunpack.c.l.bf16 %v1501
    %v1506 = vunpack.c.h.bf16 %v1498
    %v1507 = vunpack.c.h.bf16 %v1499
    %v1508 = vunpack.c.h.bf16 %v1500
    %v1509 = vunpack.c.h.bf16 %v1501
    %v1510 = vpack.c.bf16 %v1491, %v1490
    %1511 = vmatprep.subr.bf16.mxu0 %v805
    %1512 = vmatpush1.bf16.msra.mxu0 %v804
    %1513 = vmatprep.subr.bf16.mxu0 %v809
    %1514 = vmatpush1.bf16.msra.mxu0 %v808
    %1515 = vmatprep.subr.bf16.mxu0 %v813
    %1516 = vmatpush1.bf16.msra.mxu0 %v812
    %1517 = vmatprep.subr.bf16.mxu0 %v817
    %1518 = vmatpush1.bf16.msra.mxu0 %v816
    %1519 = vmatprep.subr.bf16.mxu0 %v821
    %1520 = vmatpush1.bf16.msra.mxu0 %v820
    %1521 = vmatprep.subr.bf16.mxu0 %v825
    %1522 = vmatpush1.bf16.msra.mxu0 %v824
    %1523 = vmatprep.subr.bf16.mxu0 %v829
    %1524 = vmatpush1.bf16.msra.mxu0 %v828
    %1525 = vmatprep.subr.bf16.mxu0 %v833
    %1526 = vmatpush1.bf16.msra.mxu0 %v832
    %1527 = vmatprep.subr.bf16.mxu0 0
    %1528 = vmatpush1.bf16.msra.mxu0 0
    %1529 = vmatprep.subr.bf16.mxu0 0
    %1530 = vmatpush1.bf16.msra.mxu0 0
    %1531 = vmatprep.subr.bf16.mxu0 0
    %1532 = vmatpush1.bf16.msra.mxu0 0
    %1533 = vmatprep.subr.bf16.mxu0 0
    %1534 = vmatpush1.bf16.msra.mxu0 0
    %1535 = vmatprep.subr.bf16.mxu0 0
    %1536 = vmatpush1.bf16.msra.mxu0 0
    %1537 = vmatprep.subr.bf16.mxu0 0
    %1538 = vmatpush1.bf16.msra.mxu0 0
    %1539 = vmatprep.subr.bf16.mxu0 0
    %1540 = vmatpush1.bf16.msra.mxu0 0
    %1541 = vmatprep.subr.bf16.mxu0 0
    %1542 = vmatpush1.bf16.msra.mxu0 0
    %1543 = vmatprep.mubr.bf16.mxu0 0
    %1544 = vmatmul.mubr.bf16.gmra.mrb[0].mxu0 %v1510
    %v1545 = vpop.f32.mrb[0].mxu0
    %v1546 = vadd.f32 0.0, %v1545
    %v1547 = vpop.f32.mrb[0].mxu0
    %v1548 = vadd.f32 0.0, %v1547
    %v1549 = vpop.f32.mrb[0].mxu0
    %v1550 = vadd.f32 0.0, %v1549
    %v1551 = vpop.f32.mrb[0].mxu0
    %v1552 = vadd.f32 0.0, %v1551
    %1553 = vdwg.mxu0
    %1554 = vmatprep.subr.bf16.mxu0 %v807
    %1555 = vmatpush1.bf16.msra.mxu0 %v806
    %1556 = vmatprep.subr.bf16.mxu0 %v811
    %1557 = vmatpush1.bf16.msra.mxu0 %v810
    %1558 = vmatprep.subr.bf16.mxu0 %v815
    %1559 = vmatpush1.bf16.msra.mxu0 %v814
    %1560 = vmatprep.subr.bf16.mxu0 %v819
    %1561 = vmatpush1.bf16.msra.mxu0 %v818
    %1562 = vmatprep.subr.bf16.mxu0 %v823
    %1563 = vmatpush1.bf16.msra.mxu0 %v822
    %1564 = vmatprep.subr.bf16.mxu0 %v827
    %1565 = vmatpush1.bf16.msra.mxu0 %v826
    %1566 = vmatprep.subr.bf16.mxu0 %v831
    %1567 = vmatpush1.bf16.msra.mxu0 %v830
    %1568 = vmatprep.subr.bf16.mxu0 %v835
    %1569 = vmatpush1.bf16.msra.mxu0 %v834
    %1570 = vmatprep.subr.bf16.mxu0 0
    %1571 = vmatpush1.bf16.msra.mxu0 0
    %1572 = vmatprep.subr.bf16.mxu0 0
    %1573 = vmatpush1.bf16.msra.mxu0 0
    %1574 = vmatprep.subr.bf16.mxu0 0
    %1575 = vmatpush1.bf16.msra.mxu0 0
    %1576 = vmatprep.subr.bf16.mxu0 0
    %1577 = vmatpush1.bf16.msra.mxu0 0
    %1578 = vmatprep.subr.bf16.mxu0 0
    %1579 = vmatpush1.bf16.msra.mxu0 0
    %1580 = vmatprep.subr.bf16.mxu0 0
    %1581 = vmatpush1.bf16.msra.mxu0 0
    %1582 = vmatprep.subr.bf16.mxu0 0
    %1583 = vmatpush1.bf16.msra.mxu0 0
    %1584 = vmatprep.subr.bf16.mxu0 0
    %1585 = vmatpush1.bf16.msra.mxu0 0
    %1586 = vmatprep.mubr.bf16.mxu0 0
    %1587 = vmatmul.mubr.bf16.gmra.mrb[0].mxu0 %v1510
    %v1588 = vpop.f32.mrb[0].mxu0
    %v1589 = vadd.f32 0.0, %v1588
    %v1590 = vpop.f32.mrb[0].mxu0
    %v1591 = vadd.f32 0.0, %v1590
    %v1592 = vpop.f32.mrb[0].mxu0
    %v1593 = vadd.f32 0.0, %v1592
    %v1594 = vpop.f32.mrb[0].mxu0
    %v1595 = vadd.f32 0.0, %v1594
    %1596 = vdwg.mxu0
    %v1597 = vadd.f32 %v1502, %v1546
    %v1598 = vadd.f32 %v1503, %v1548
    %v1599 = vadd.f32 %v1504, %v1589
    %v1600 = vadd.f32 %v1505, %v1591
    %v1601 = vadd.f32 %v1506, %v1550
    %v1602 = vadd.f32 %v1507, %v1552
    %v1603 = vadd.f32 %v1508, %v1593
    %v1604 = vadd.f32 %v1509, %v1595
    %v1605 = vxor.u32 %v1597, 2147483648
    %v1606 = vxor.u32 %v1598, 2147483648
    %v1607 = vxor.u32 %v1599, 2147483648
    %v1608 = vxor.u32 %v1601, 2147483648
    %v1609 = vxor.u32 %v1602, 2147483648
    %v1610 = vxor.u32 %v1603, 2147483648
    %v1611 = vmul.f32 %v1605, 1.442695
    %v1612 = vpow.pop %v1611
    %v1613 = vmul.f32 %v1606, 1.442695
    %v1614 = vpow.pop %v1613
    %v1615 = vmul.f32 %v1607, 1.442695
    %v1616 = vpow.pop %v1615
    %v1617 = vmul.f32 %v1608, 1.442695
    %v1618 = vpow.pop %v1617
    %v1619 = vmul.f32 %v1609, 1.442695
    %v1620 = vpow.pop %v1619
    %v1621 = vmul.f32 %v1610, 1.442695
    %v1622 = vpow.pop %v1621
    %v1623 = vadd.f32 %v1612, 1.0
    %v1624 = vadd.f32 %v1614, 1.0
    %v1625 = vadd.f32 %v1616, 1.0
    %v1626 = vadd.f32 %v1618, 1.0
    %v1627 = vadd.f32 %v1620, 1.0
    %v1628 = vadd.f32 %v1622, 1.0
    %v1629 = vrcp.pop %v1623
    %v1630 = vmul.f32 1.0, %v1629
    %v1631 = vrcp.pop %v1624
    %v1632 = vmul.f32 1.0, %v1631
    %v1633 = vrcp.pop %v1625
    %v1634 = vmul.f32 1.0, %v1633
    %v1635 = vrcp.pop %v1626
    %v1636 = vmul.f32 1.0, %v1635
    %v1637 = vrcp.pop %v1627
    %v1638 = vmul.f32 1.0, %v1637
    %v1639 = vrcp.pop %v1628
    %v1640 = vmul.f32 1.0, %v1639
    %v1641 = vtanh.pop %v1600
    %v1642 = vtanh.pop %v1604
    %v1643 = vmul.f32 %v1632, %v1486
    %v1644 = vmul.f32 %v1638, %v1487
    %v1645 = vmul.f32 %v1630, %v1641
    %v1646 = vmul.f32 %v1636, %v1642
    %v1647 = vadd.f32 %v1643, %v1645
    %v1648 = vadd.f32 %v1644, %v1646
    %v1649 = vtanh.pop %v1647
    %v1650 = vtanh.pop %v1648
    %v1651 = vmul.f32 %v1634, %v1649
    %v1652 = vmul.f32 %v1640, %v1650
    %s1653 = scalar_lea.vmem [#allocation2], 64
    %1654 = vst [vmem:[%s1653] sm:$0xff] %v1651
    %1655 = vst [vmem:[%s1653 + $0x8] sm:$0xff] %v1652
    %s1656 = smul.u32 5, 4
    %s1657 = smul.addr %s1656, 8
    %s1658 = scalar_lea.vmem [#allocation3], %s1657
    %v1659 = vld [vmem:[%s1658] sm:$0xff]
    %v1660 = vld [vmem:[%s1658 + $0x8] sm:$0xff]
    %v1661 = vld [vmem:[%s1658 + $0x10] sm:$0xff]
    %v1662 = vld [vmem:[%s1658 + $0x18] sm:$0xff]
    %v1663 = vunpack.c.l.bf16 %v1659
    %v1664 = vunpack.c.l.bf16 %v1660
    %v1665 = vunpack.c.l.bf16 %v1661
    %v1666 = vunpack.c.l.bf16 %v1662
    %v1667 = vunpack.c.h.bf16 %v1659
    %v1668 = vunpack.c.h.bf16 %v1660
    %v1669 = vunpack.c.h.bf16 %v1661
    %v1670 = vunpack.c.h.bf16 %v1662
    %v1671 = vpack.c.bf16 %v1652, %v1651
    %1672 = vmatprep.subr.bf16.mxu0 %v805
    %1673 = vmatpush1.bf16.msra.mxu0 %v804
    %1674 = vmatprep.subr.bf16.mxu0 %v809
    %1675 = vmatpush1.bf16.msra.mxu0 %v808
    %1676 = vmatprep.subr.bf16.mxu0 %v813
    %1677 = vmatpush1.bf16.msra.mxu0 %v812
    %1678 = vmatprep.subr.bf16.mxu0 %v817
    %1679 = vmatpush1.bf16.msra.mxu0 %v816
    %1680 = vmatprep.subr.bf16.mxu0 %v821
    %1681 = vmatpush1.bf16.msra.mxu0 %v820
    %1682 = vmatprep.subr.bf16.mxu0 %v825
    %1683 = vmatpush1.bf16.msra.mxu0 %v824
    %1684 = vmatprep.subr.bf16.mxu0 %v829
    %1685 = vmatpush1.bf16.msra.mxu0 %v828
    %1686 = vmatprep.subr.bf16.mxu0 %v833
    %1687 = vmatpush1.bf16.msra.mxu0 %v832
    %1688 = vmatprep.subr.bf16.mxu0 0
    %1689 = vmatpush1.bf16.msra.mxu0 0
    %1690 = vmatprep.subr.bf16.mxu0 0
    %1691 = vmatpush1.bf16.msra.mxu0 0
    %1692 = vmatprep.subr.bf16.mxu0 0
    %1693 = vmatpush1.bf16.msra.mxu0 0
    %1694 = vmatprep.subr.bf16.mxu0 0
    %1695 = vmatpush1.bf16.msra.mxu0 0
    %1696 = vmatprep.subr.bf16.mxu0 0
    %1697 = vmatpush1.bf16.msra.mxu0 0
    %1698 = vmatprep.subr.bf16.mxu0 0
    %1699 = vmatpush1.bf16.msra.mxu0 0
    %1700 = vmatprep.subr.bf16.mxu0 0
    %1701 = vmatpush1.bf16.msra.mxu0 0
    %1702 = vmatprep.subr.bf16.mxu0 0
    %1703 = vmatpush1.bf16.msra.mxu0 0
    %1704 = vmatprep.mubr.bf16.mxu0 0
    %1705 = vmatmul.mubr.bf16.gmra.mrb[0].mxu0 %v1671
    %v1706 = vpop.f32.mrb[0].mxu0
    %v1707 = vadd.f32 0.0, %v1706
    %v1708 = vpop.f32.mrb[0].mxu0
    %v1709 = vadd.f32 0.0, %v1708
    %v1710 = vpop.f32.mrb[0].mxu0
    %v1711 = vadd.f32 0.0, %v1710
    %v1712 = vpop.f32.mrb[0].mxu0
    %v1713 = vadd.f32 0.0, %v1712
    %1714 = vdwg.mxu0
    %1715 = vmatprep.subr.bf16.mxu0 %v807
    %1716 = vmatpush1.bf16.msra.mxu0 %v806
    %1717 = vmatprep.subr.bf16.mxu0 %v811
    %1718 = vmatpush1.bf16.msra.mxu0 %v810
    %1719 = vmatprep.subr.bf16.mxu0 %v815
    %1720 = vmatpush1.bf16.msra.mxu0 %v814
    %1721 = vmatprep.subr.bf16.mxu0 %v819
    %1722 = vmatpush1.bf16.msra.mxu0 %v818
    %1723 = vmatprep.subr.bf16.mxu0 %v823
    %1724 = vmatpush1.bf16.msra.mxu0 %v822
    %1725 = vmatprep.subr.bf16.mxu0 %v827
    %1726 = vmatpush1.bf16.msra.mxu0 %v826
    %1727 = vmatprep.subr.bf16.mxu0 %v831
    %1728 = vmatpush1.bf16.msra.mxu0 %v830
    %1729 = vmatprep.subr.bf16.mxu0 %v835
    %1730 = vmatpush1.bf16.msra.mxu0 %v834
    %1731 = vmatprep.subr.bf16.mxu0 0
    %1732 = vmatpush1.bf16.msra.mxu0 0
    %1733 = vmatprep.subr.bf16.mxu0 0
    %1734 = vmatpush1.bf16.msra.mxu0 0
    %1735 = vmatprep.subr.bf16.mxu0 0
    %1736 = vmatpush1.bf16.msra.mxu0 0
    %1737 = vmatprep.subr.bf16.mxu0 0
    %1738 = vmatpush1.bf16.msra.mxu0 0
    %1739 = vmatprep.subr.bf16.mxu0 0
    %1740 = vmatpush1.bf16.msra.mxu0 0
    %1741 = vmatprep.subr.bf16.mxu0 0
    %1742 = vmatpush1.bf16.msra.mxu0 0
    %1743 = vmatprep.subr.bf16.mxu0 0
    %1744 = vmatpush1.bf16.msra.mxu0 0
    %1745 = vmatprep.subr.bf16.mxu0 0
    %1746 = vmatpush1.bf16.msra.mxu0 0
    %1747 = vmatprep.mubr.bf16.mxu0 0
    %1748 = vmatmul.mubr.bf16.gmra.mrb[0].mxu0 %v1671
    %v1749 = vpop.f32.mrb[0].mxu0
    %v1750 = vadd.f32 0.0, %v1749
    %v1751 = vpop.f32.mrb[0].mxu0
    %v1752 = vadd.f32 0.0, %v1751
    %v1753 = vpop.f32.mrb[0].mxu0
    %v1754 = vadd.f32 0.0, %v1753
    %v1755 = vpop.f32.mrb[0].mxu0
    %v1756 = vadd.f32 0.0, %v1755
    %1757 = vdwg.mxu0
    %v1758 = vadd.f32 %v1663, %v1707
    %v1759 = vadd.f32 %v1664, %v1709
    %v1760 = vadd.f32 %v1665, %v1750
    %v1761 = vadd.f32 %v1666, %v1752
    %v1762 = vadd.f32 %v1667, %v1711
    %v1763 = vadd.f32 %v1668, %v1713
    %v1764 = vadd.f32 %v1669, %v1754
    %v1765 = vadd.f32 %v1670, %v1756
    %v1766 = vxor.u32 %v1758, 2147483648
    %v1767 = vxor.u32 %v1759, 2147483648
    %v1768 = vxor.u32 %v1760, 2147483648
    %v1769 = vxor.u32 %v1762, 2147483648
    %v1770 = vxor.u32 %v1763, 2147483648
    %v1771 = vxor.u32 %v1764, 2147483648
    %v1772 = vmul.f32 %v1766, 1.442695
    %v1773 = vpow.pop %v1772
    %v1774 = vmul.f32 %v1767, 1.442695
    %v1775 = vpow.pop %v1774
    %v1776 = vmul.f32 %v1768, 1.442695
    %v1777 = vpow.pop %v1776
    %v1778 = vmul.f32 %v1769, 1.442695
    %v1779 = vpow.pop %v1778
    %v1780 = vmul.f32 %v1770, 1.442695
    %v1781 = vpow.pop %v1780
    %v1782 = vmul.f32 %v1771, 1.442695
    %v1783 = vpow.pop %v1782
    %v1784 = vadd.f32 %v1773, 1.0
    %v1785 = vadd.f32 %v1775, 1.0
    %v1786 = vadd.f32 %v1777, 1.0
    %v1787 = vadd.f32 %v1779, 1.0
    %v1788 = vadd.f32 %v1781, 1.0
    %v1789 = vadd.f32 %v1783, 1.0
    %v1790 = vrcp.pop %v1784
    %v1791 = vmul.f32 1.0, %v1790
    %v1792 = vrcp.pop %v1785
    %v1793 = vmul.f32 1.0, %v1792
    %v1794 = vrcp.pop %v1786
    %v1795 = vmul.f32 1.0, %v1794
    %v1796 = vrcp.pop %v1787
    %v1797 = vmul.f32 1.0, %v1796
    %v1798 = vrcp.pop %v1788
    %v1799 = vmul.f32 1.0, %v1798
    %v1800 = vrcp.pop %v1789
    %v1801 = vmul.f32 1.0, %v1800
    %v1802 = vtanh.pop %v1761
    %v1803 = vtanh.pop %v1765
    %v1804 = vmul.f32 %v1793, %v1647
    %v1805 = vmul.f32 %v1799, %v1648
    %v1806 = vmul.f32 %v1791, %v1802
    %v1807 = vmul.f32 %v1797, %v1803
    %v1808 = vadd.f32 %v1804, %v1806
    %v1809 = vadd.f32 %v1805, %v1807
    %v1810 = vtanh.pop %v1808
    %v1811 = vtanh.pop %v1809
    %v1812 = vmul.f32 %v1795, %v1810
    %v1813 = vmul.f32 %v1801, %v1811
    %s1814 = scalar_lea.vmem [#allocation2], 80
    %1815 = vst [vmem:[%s1814] sm:$0xff] %v1812
    %1816 = vst [vmem:[%s1814 + $0x8] sm:$0xff] %v1813
    %s1817 = smul.u32 6, 4
    %s1818 = smul.addr %s1817, 8
    %s1819 = scalar_lea.vmem [#allocation3], %s1818
    %v1820 = vld [vmem:[%s1819] sm:$0xff]
    %v1821 = vld [vmem:[%s1819 + $0x8] sm:$0xff]
    %v1822 = vld [vmem:[%s1819 + $0x10] sm:$0xff]
    %v1823 = vld [vmem:[%s1819 + $0x18] sm:$0xff]
    %v1824 = vunpack.c.l.bf16 %v1820
    %v1825 = vunpack.c.l.bf16 %v1821
    %v1826 = vunpack.c.l.bf16 %v1822
    %v1827 = vunpack.c.l.bf16 %v1823
    %v1828 = vunpack.c.h.bf16 %v1820
    %v1829 = vunpack.c.h.bf16 %v1821
    %v1830 = vunpack.c.h.bf16 %v1822
    %v1831 = vunpack.c.h.bf16 %v1823
    %v1832 = vpack.c.bf16 %v1813, %v1812
    %1833 = vmatprep.subr.bf16.mxu0 %v805
    %1834 = vmatpush1.bf16.msra.mxu0 %v804
    %1835 = vmatprep.subr.bf16.mxu0 %v809
    %1836 = vmatpush1.bf16.msra.mxu0 %v808
    %1837 = vmatprep.subr.bf16.mxu0 %v813
    %1838 = vmatpush1.bf16.msra.mxu0 %v812
    %1839 = vmatprep.subr.bf16.mxu0 %v817
    %1840 = vmatpush1.bf16.msra.mxu0 %v816
    %1841 = vmatprep.subr.bf16.mxu0 %v821
    %1842 = vmatpush1.bf16.msra.mxu0 %v820
    %1843 = vmatprep.subr.bf16.mxu0 %v825
    %1844 = vmatpush1.bf16.msra.mxu0 %v824
    %1845 = vmatprep.subr.bf16.mxu0 %v829
    %1846 = vmatpush1.bf16.msra.mxu0 %v828
    %1847 = vmatprep.subr.bf16.mxu0 %v833
    %1848 = vmatpush1.bf16.msra.mxu0 %v832
    %1849 = vmatprep.subr.bf16.mxu0 0
    %1850 = vmatpush1.bf16.msra.mxu0 0
    %1851 = vmatprep.subr.bf16.mxu0 0
    %1852 = vmatpush1.bf16.msra.mxu0 0
    %1853 = vmatprep.subr.bf16.mxu0 0
    %1854 = vmatpush1.bf16.msra.mxu0 0
    %1855 = vmatprep.subr.bf16.mxu0 0
    %1856 = vmatpush1.bf16.msra.mxu0 0
    %1857 = vmatprep.subr.bf16.mxu0 0
    %1858 = vmatpush1.bf16.msra.mxu0 0
    %1859 = vmatprep.subr.bf16.mxu0 0
    %1860 = vmatpush1.bf16.msra.mxu0 0
    %1861 = vmatprep.subr.bf16.mxu0 0
    %1862 = vmatpush1.bf16.msra.mxu0 0
    %1863 = vmatprep.subr.bf16.mxu0 0
    %1864 = vmatpush1.bf16.msra.mxu0 0
    %1865 = vmatprep.mubr.bf16.mxu0 0
    %1866 = vmatmul.mubr.bf16.gmra.mrb[0].mxu0 %v1832
    %v1867 = vpop.f32.mrb[0].mxu0
    %v1868 = vadd.f32 0.0, %v1867
    %v1869 = vpop.f32.mrb[0].mxu0
    %v1870 = vadd.f32 0.0, %v1869
    %v1871 = vpop.f32.mrb[0].mxu0
    %v1872 = vadd.f32 0.0, %v1871
    %v1873 = vpop.f32.mrb[0].mxu0
    %v1874 = vadd.f32 0.0, %v1873
    %1875 = vdwg.mxu0
    %1876 = vmatprep.subr.bf16.mxu0 %v807
    %1877 = vmatpush1.bf16.msra.mxu0 %v806
    %1878 = vmatprep.subr.bf16.mxu0 %v811
    %1879 = vmatpush1.bf16.msra.mxu0 %v810
    %1880 = vmatprep.subr.bf16.mxu0 %v815
    %1881 = vmatpush1.bf16.msra.mxu0 %v814
    %1882 = vmatprep.subr.bf16.mxu0 %v819
    %1883 = vmatpush1.bf16.msra.mxu0 %v818
    %1884 = vmatprep.subr.bf16.mxu0 %v823
    %1885 = vmatpush1.bf16.msra.mxu0 %v822
    %1886 = vmatprep.subr.bf16.mxu0 %v827
    %1887 = vmatpush1.bf16.msra.mxu0 %v826
    %1888 = vmatprep.subr.bf16.mxu0 %v831
    %1889 = vmatpush1.bf16.msra.mxu0 %v830
    %1890 = vmatprep.subr.bf16.mxu0 %v835
    %1891 = vmatpush1.bf16.msra.mxu0 %v834
    %1892 = vmatprep.subr.bf16.mxu0 0
    %1893 = vmatpush1.bf16.msra.mxu0 0
    %1894 = vmatprep.subr.bf16.mxu0 0
    %1895 = vmatpush1.bf16.msra.mxu0 0
    %1896 = vmatprep.subr.bf16.mxu0 0
    %1897 = vmatpush1.bf16.msra.mxu0 0
    %1898 = vmatprep.subr.bf16.mxu0 0
    %1899 = vmatpush1.bf16.msra.mxu0 0
    %1900 = vmatprep.subr.bf16.mxu0 0
    %1901 = vmatpush1.bf16.msra.mxu0 0
    %1902 = vmatprep.subr.bf16.mxu0 0
    %1903 = vmatpush1.bf16.msra.mxu0 0
    %1904 = vmatprep.subr.bf16.mxu0 0
    %1905 = vmatpush1.bf16.msra.mxu0 0
    %1906 = vmatprep.subr.bf16.mxu0 0
    %1907 = vmatpush1.bf16.msra.mxu0 0
    %1908 = vmatprep.mubr.bf16.mxu0 0
    %1909 = vmatmul.mubr.bf16.gmra.mrb[0].mxu0 %v1832
    %v1910 = vpop.f32.mrb[0].mxu0
    %v1911 = vadd.f32 0.0, %v1910
    %v1912 = vpop.f32.mrb[0].mxu0
    %v1913 = vadd.f32 0.0, %v1912
    %v1914 = vpop.f32.mrb[0].mxu0
    %v1915 = vadd.f32 0.0, %v1914
    %v1916 = vpop.f32.mrb[0].mxu0
    %v1917 = vadd.f32 0.0, %v1916
    %1918 = vdwg.mxu0
    %v1919 = vadd.f32 %v1824, %v1868
    %v1920 = vadd.f32 %v1825, %v1870
    %v1921 = vadd.f32 %v1826, %v1911
    %v1922 = vadd.f32 %v1827, %v1913
    %v1923 = vadd.f32 %v1828, %v1872
    %v1924 = vadd.f32 %v1829, %v1874
    %v1925 = vadd.f32 %v1830, %v1915
    %v1926 = vadd.f32 %v1831, %v1917
    %v1927 = vxor.u32 %v1919, 2147483648
    %v1928 = vxor.u32 %v1920, 2147483648
    %v1929 = vxor.u32 %v1921, 2147483648
    %v1930 = vxor.u32 %v1923, 2147483648
    %v1931 = vxor.u32 %v1924, 2147483648
    %v1932 = vxor.u32 %v1925, 2147483648
    %v1933 = vmul.f32 %v1927, 1.442695
    %v1934 = vpow.pop %v1933
    %v1935 = vmul.f32 %v1928, 1.442695
    %v1936 = vpow.pop %v1935
    %v1937 = vmul.f32 %v1929, 1.442695
    %v1938 = vpow.pop %v1937
    %v1939 = vmul.f32 %v1930, 1.442695
    %v1940 = vpow.pop %v1939
    %v1941 = vmul.f32 %v1931, 1.442695
    %v1942 = vpow.pop %v1941
    %v1943 = vmul.f32 %v1932, 1.442695
    %v1944 = vpow.pop %v1943
    %v1945 = vadd.f32 %v1934, 1.0
    %v1946 = vadd.f32 %v1936, 1.0
    %v1947 = vadd.f32 %v1938, 1.0
    %v1948 = vadd.f32 %v1940, 1.0
    %v1949 = vadd.f32 %v1942, 1.0
    %v1950 = vadd.f32 %v1944, 1.0
    %v1951 = vrcp.pop %v1945
    %v1952 = vmul.f32 1.0, %v1951
    %v1953 = vrcp.pop %v1946
    %v1954 = vmul.f32 1.0, %v1953
    %v1955 = vrcp.pop %v1947
    %v1956 = vmul.f32 1.0, %v1955
    %v1957 = vrcp.pop %v1948
    %v1958 = vmul.f32 1.0, %v1957
    %v1959 = vrcp.pop %v1949
    %v1960 = vmul.f32 1.0, %v1959
    %v1961 = vrcp.pop %v1950
    %v1962 = vmul.f32 1.0, %v1961
    %v1963 = vtanh.pop %v1922
    %v1964 = vtanh.pop %v1926
    %v1965 = vmul.f32 %v1954, %v1808
    %v1966 = vmul.f32 %v1960, %v1809
    %v1967 = vmul.f32 %v1952, %v1963
    %v1968 = vmul.f32 %v1958, %v1964
    %v1969 = vadd.f32 %v1965, %v1967
    %v1970 = vadd.f32 %v1966, %v1968
    %v1971 = vtanh.pop %v1969
    %v1972 = vtanh.pop %v1970
    %v1973 = vmul.f32 %v1956, %v1971
    %v1974 = vmul.f32 %v1962, %v1972
    %s1975 = scalar_lea.vmem [#allocation2], 96
    %1976 = vst [vmem:[%s1975] sm:$0xff] %v1973
    %1977 = vst [vmem:[%s1975 + $0x8] sm:$0xff] %v1974
    %s1978 = smul.u32 7, 4
    %s1979 = smul.addr %s1978, 8
    %s1980 = scalar_lea.vmem [#allocation3], %s1979
    %v1981 = vld [vmem:[%s1980] sm:$0xff]
    %v1982 = vld [vmem:[%s1980 + $0x8] sm:$0xff]
    %v1983 = vld [vmem:[%s1980 + $0x10] sm:$0xff]
    %v1984 = vld [vmem:[%s1980 + $0x18] sm:$0xff]
    %v1985 = vunpack.c.l.bf16 %v1981
    %v1986 = vunpack.c.l.bf16 %v1982
    %v1987 = vunpack.c.l.bf16 %v1983
    %v1988 = vunpack.c.l.bf16 %v1984
    %v1989 = vunpack.c.h.bf16 %v1981
    %v1990 = vunpack.c.h.bf16 %v1982
    %v1991 = vunpack.c.h.bf16 %v1983
    %v1992 = vunpack.c.h.bf16 %v1984
    %v1993 = vpack.c.bf16 %v1974, %v1973
    %1994 = vmatprep.subr.bf16.mxu0 %v805
    %1995 = vmatpush1.bf16.msra.mxu0 %v804
    %1996 = vmatprep.subr.bf16.mxu0 %v809
    %1997 = vmatpush1.bf16.msra.mxu0 %v808
    %1998 = vmatprep.subr.bf16.mxu0 %v813
    %1999 = vmatpush1.bf16.msra.mxu0 %v812
    %2000 = vmatprep.subr.bf16.mxu0 %v817
    %2001 = vmatpush1.bf16.msra.mxu0 %v816
    %2002 = vmatprep.subr.bf16.mxu0 %v821
    %2003 = vmatpush1.bf16.msra.mxu0 %v820
    %2004 = vmatprep.subr.bf16.mxu0 %v825
    %2005 = vmatpush1.bf16.msra.mxu0 %v824
    %2006 = vmatprep.subr.bf16.mxu0 %v829
    %2007 = vmatpush1.bf16.msra.mxu0 %v828
    %2008 = vmatprep.subr.bf16.mxu0 %v833
    %2009 = vmatpush1.bf16.msra.mxu0 %v832
    %2010 = vmatprep.subr.bf16.mxu0 0
    %2011 = vmatpush1.bf16.msra.mxu0 0
    %2012 = vmatprep.subr.bf16.mxu0 0
    %2013 = vmatpush1.bf16.msra.mxu0 0
    %2014 = vmatprep.subr.bf16.mxu0 0
    %2015 = vmatpush1.bf16.msra.mxu0 0
    %2016 = vmatprep.subr.bf16.mxu0 0
    %2017 = vmatpush1.bf16.msra.mxu0 0
    %2018 = vmatprep.subr.bf16.mxu0 0
    %2019 = vmatpush1.bf16.msra.mxu0 0
    %2020 = vmatprep.subr.bf16.mxu0 0
    %2021 = vmatpush1.bf16.msra.mxu0 0
    %2022 = vmatprep.subr.bf16.mxu0 0
    %2023 = vmatpush1.bf16.msra.mxu0 0
    %2024 = vmatprep.subr.bf16.mxu0 0
    %2025 = vmatpush1.bf16.msra.mxu0 0
    %2026 = vmatprep.mubr.bf16.mxu0 0
    %2027 = vmatmul.mubr.bf16.gmra.mrb[0].mxu0 %v1993
    %v2028 = vpop.f32.mrb[0].mxu0
    %v2029 = vadd.f32 0.0, %v2028
    %v2030 = vpop.f32.mrb[0].mxu0
    %v2031 = vadd.f32 0.0, %v2030
    %v2032 = vpop.f32.mrb[0].mxu0
    %v2033 = vadd.f32 0.0, %v2032
    %v2034 = vpop.f32.mrb[0].mxu0
    %v2035 = vadd.f32 0.0, %v2034
    %2036 = vdwg.mxu0
    %2037 = vmatprep.subr.bf16.mxu0 %v807
    %2038 = vmatpush1.bf16.msra.mxu0 %v806
    %2039 = vmatprep.subr.bf16.mxu0 %v811
    %2040 = vmatpush1.bf16.msra.mxu0 %v810
    %2041 = vmatprep.subr.bf16.mxu0 %v815
    %2042 = vmatpush1.bf16.msra.mxu0 %v814
    %2043 = vmatprep.subr.bf16.mxu0 %v819
    %2044 = vmatpush1.bf16.msra.mxu0 %v818
    %2045 = vmatprep.subr.bf16.mxu0 %v823
    %2046 = vmatpush1.bf16.msra.mxu0 %v822
    %2047 = vmatprep.subr.bf16.mxu0 %v827
    %2048 = vmatpush1.bf16.msra.mxu0 %v826
    %2049 = vmatprep.subr.bf16.mxu0 %v831
    %2050 = vmatpush1.bf16.msra.mxu0 %v830
    %2051 = vmatprep.subr.bf16.mxu0 %v835
    %2052 = vmatpush1.bf16.msra.mxu0 %v834
    %2053 = vmatprep.subr.bf16.mxu0 0
    %2054 = vmatpush1.bf16.msra.mxu0 0
    %2055 = vmatprep.subr.bf16.mxu0 0
    %2056 = vmatpush1.bf16.msra.mxu0 0
    %2057 = vmatprep.subr.bf16.mxu0 0
    %2058 = vmatpush1.bf16.msra.mxu0 0
    %2059 = vmatprep.subr.bf16.mxu0 0
    %2060 = vmatpush1.bf16.msra.mxu0 0
    %2061 = vmatprep.subr.bf16.mxu0 0
    %2062 = vmatpush1.bf16.msra.mxu0 0
    %2063 = vmatprep.subr.bf16.mxu0 0
    %2064 = vmatpush1.bf16.msra.mxu0 0
    %2065 = vmatprep.subr.bf16.mxu0 0
    %2066 = vmatpush1.bf16.msra.mxu0 0
    %2067 = vmatprep.subr.bf16.mxu0 0
    %2068 = vmatpush1.bf16.msra.mxu0 0
    %2069 = vmatprep.mubr.bf16.mxu0 0
    %2070 = vmatmul.mubr.bf16.gmra.mrb[0].mxu0 %v1993
    %v2071 = vpop.f32.mrb[0].mxu0
    %v2072 = vadd.f32 0.0, %v2071
    %v2073 = vpop.f32.mrb[0].mxu0
    %v2074 = vadd.f32 0.0, %v2073
    %v2075 = vpop.f32.mrb[0].mxu0
    %v2076 = vadd.f32 0.0, %v2075
    %v2077 = vpop.f32.mrb[0].mxu0
    %v2078 = vadd.f32 0.0, %v2077
    %2079 = vdwg.mxu0
    %v2080 = vadd.f32 %v1985, %v2029
    %v2081 = vadd.f32 %v1986, %v2031
    %v2082 = vadd.f32 %v1987, %v2072
    %v2083 = vadd.f32 %v1988, %v2074
    %v2084 = vadd.f32 %v1989, %v2033
    %v2085 = vadd.f32 %v1990, %v2035
    %v2086 = vadd.f32 %v1991, %v2076
    %v2087 = vadd.f32 %v1992, %v2078
    %v2088 = vxor.u32 %v2080, 2147483648
    %v2089 = vxor.u32 %v2081, 2147483648
    %v2090 = vxor.u32 %v2082, 2147483648
    %v2091 = vxor.u32 %v2084, 2147483648
    %v2092 = vxor.u32 %v2085, 2147483648
    %v2093 = vxor.u32 %v2086, 2147483648
    %v2094 = vmul.f32 %v2088, 1.442695
    %v2095 = vpow.pop %v2094
    %v2096 = vmul.f32 %v2089, 1.442695
    %v2097 = vpow.pop %v2096
    %v2098 = vmul.f32 %v2090, 1.442695
    %v2099 = vpow.pop %v2098
    %v2100 = vmul.f32 %v2091, 1.442695
    %v2101 = vpow.pop %v2100
    %v2102 = vmul.f32 %v2092, 1.442695
    %v2103 = vpow.pop %v2102
    %v2104 = vmul.f32 %v2093, 1.442695
    %v2105 = vpow.pop %v2104
    %v2106 = vadd.f32 %v2095, 1.0
    %v2107 = vadd.f32 %v2097, 1.0
    %v2108 = vadd.f32 %v2099, 1.0
    %v2109 = vadd.f32 %v2101, 1.0
    %v2110 = vadd.f32 %v2103, 1.0
    %v2111 = vadd.f32 %v2105, 1.0
    %v2112 = vrcp.pop %v2106
    %v2113 = vmul.f32 1.0, %v2112
    %v2114 = vrcp.pop %v2107
    %v2115 = vmul.f32 1.0, %v2114
    %v2116 = vrcp.pop %v2108
    %v2117 = vmul.f32 1.0, %v2116
    %v2118 = vrcp.pop %v2109
    %v2119 = vmul.f32 1.0, %v2118
    %v2120 = vrcp.pop %v2110
    %v2121 = vmul.f32 1.0, %v2120
    %v2122 = vrcp.pop %v2111
    %v2123 = vmul.f32 1.0, %v2122
    %v2124 = vtanh.pop %v2083
    %v2125 = vtanh.pop %v2087
    %v2126 = vmul.f32 %v2115, %v1969
    %v2127 = vmul.f32 %v2121, %v1970
    %v2128 = vmul.f32 %v2113, %v2124
    %v2129 = vmul.f32 %v2119, %v2125
    %v2130 = vadd.f32 %v2126, %v2128
    %v2131 = vadd.f32 %v2127, %v2129
    %v2132 = vtanh.pop %v2130
    %v2133 = vtanh.pop %v2131
    %v2134 = vmul.f32 %v2117, %v2132
    %v2135 = vmul.f32 %v2123, %v2133
    %s2136 = scalar_lea.vmem [#allocation2], 112
    %2137 = vst [vmem:[%s2136] sm:$0xff] %v2134
    %2138 = vst [vmem:[%s2136 + $0x8] sm:$0xff] %v2135
    %2139 = vst [vmem:[#allocation14] sm:$0xff] %v2134
    %2140 = vst [vmem:[#allocation14 + $0x8] sm:$0xff] %v2135
    %2141 = vst [vmem:[#allocation16] sm:$0xff] %v2130
    %2142 = vst [vmem:[#allocation16 + $0x8] sm:$0xff] %v2131
    %v2143 = vld [vmem:[#allocation2] sm:$0xff]
    %v2144 = vld [vmem:[#allocation2 + $0x8] sm:$0xff]
    %v2145 = vld [vmem:[#allocation2 + $0x10] sm:$0xff]
    %v2146 = vld [vmem:[#allocation2 + $0x18] sm:$0xff]
    %v2147 = vld [vmem:[#allocation2 + $0x20] sm:$0xff]
    %v2148 = vld [vmem:[#allocation2 + $0x28] sm:$0xff]
    %v2149 = vld [vmem:[#allocation2 + $0x30] sm:$0xff]
    %v2150 = vld [vmem:[#allocation2 + $0x38] sm:$0xff]
    %v2151 = vld [vmem:[#allocation2 + $0x40] sm:$0xff]
    %v2152 = vld [vmem:[#allocation2 + $0x48] sm:$0xff]
    %v2153 = vld [vmem:[#allocation2 + $0x50] sm:$0xff]
    %v2154 = vld [vmem:[#allocation2 + $0x58] sm:$0xff]
    %v2155 = vld [vmem:[#allocation2 + $0x60] sm:$0xff]
    %v2156 = vld [vmem:[#allocation2 + $0x68] sm:$0xff]
    %v2157 = vld [vmem:[#allocation2 + $0x70] sm:$0xff]
    %v2158 = vld [vmem:[#allocation2 + $0x78] sm:$0xff]
    %v2159 = vpack.c.bf16 %v2144, %v2143
    %v2160 = vpack.c.bf16 %v2146, %v2145
    %v2161 = vpack.c.bf16 %v2148, %v2147
    %v2162 = vpack.c.bf16 %v2150, %v2149
    %v2163 = vpack.c.bf16 %v2152, %v2151
    %v2164 = vpack.c.bf16 %v2154, %v2153
    %v2165 = vpack.c.bf16 %v2156, %v2155
    %v2166 = vpack.c.bf16 %v2158, %v2157
    %s2167 = scalar_lea.vmem [#allocation8], 256
    %v2168 = vld [vmem:[%s2167] sm:$0xff]
    %v2169 = vld [vmem:[%s2167 + $0x8] sm:$0xff]
    %v2170 = vld [vmem:[%s2167 + $0x10] sm:$0xff]
    %v2171 = vld [vmem:[%s2167 + $0x18] sm:$0xff]
    %v2172 = vld [vmem:[%s2167 + $0x20] sm:$0xff]
    %v2173 = vld [vmem:[%s2167 + $0x28] sm:$0xff]
    %v2174 = vld [vmem:[%s2167 + $0x30] sm:$0xff]
    %v2175 = vld [vmem:[%s2167 + $0x38] sm:$0xff]
    %v2176 = vld [vmem:[%s2167 + $0x40] sm:$0xff]
    %v2177 = vld [vmem:[%s2167 + $0x48] sm:$0xff]
    %v2178 = vld [vmem:[%s2167 + $0x50] sm:$0xff]
    %v2179 = vld [vmem:[%s2167 + $0x58] sm:$0xff]
    %v2180 = vld [vmem:[%s2167 + $0x60] sm:$0xff]
    %v2181 = vld [vmem:[%s2167 + $0x68] sm:$0xff]
    %v2182 = vld [vmem:[%s2167 + $0x70] sm:$0xff]
    %v2183 = vld [vmem:[%s2167 + $0x78] sm:$0xff]
    %v2184 = vld [vmem:[%s2167 + $0x80] sm:$0xff]
    %v2185 = vld [vmem:[%s2167 + $0x88] sm:$0xff]
    %v2186 = vld [vmem:[%s2167 + $0x90] sm:$0xff]
    %v2187 = vld [vmem:[%s2167 + $0x98] sm:$0xff]
    %v2188 = vld [vmem:[%s2167 + $0xa0] sm:$0xff]
    %v2189 = vld [vmem:[%s2167 + $0xa8] sm:$0xff]
    %v2190 = vld [vmem:[%s2167 + $0xb0] sm:$0xff]
    %v2191 = vld [vmem:[%s2167 + $0xb8] sm:$0xff]
    %v2192 = vld [vmem:[%s2167 + $0xc0] sm:$0xff]
    %v2193 = vld [vmem:[%s2167 + $0xc8] sm:$0xff]
    %v2194 = vld [vmem:[%s2167 + $0xd0] sm:$0xff]
    %v2195 = vld [vmem:[%s2167 + $0xd8] sm:$0xff]
    %v2196 = vld [vmem:[%s2167 + $0xe0] sm:$0xff]
    %v2197 = vld [vmem:[%s2167 + $0xe8] sm:$0xff]
    %v2198 = vld [vmem:[%s2167 + $0xf0] sm:$0xff]
    %v2199 = vld [vmem:[%s2167 + $0xf8] sm:$0xff]
    %s2200 = scalar_lea.vmem %s3, 4
    %v2201 = vld [vmem:[%s2200] sm:$0xf]
    %v2203 = vlaneseq
    %v2204 = vshrl.u32 %v2203, 7
    %v2205 = vsub.s32 0, %v2204
    %v2206 = vrot.slane %v2201, %v2205
    %v2207 = vlaneseq
    %v2208 = vshrl.u32 %v2207, 7
    %v2209 = vsub.s32 1, %v2208
    %v2210 = vrot.slane %v2201, %v2209
    %v2211 = vlaneseq
    %v2212 = vshrl.u32 %v2211, 7
    %v2213 = vsub.s32 2, %v2212
    %v2214 = vrot.slane %v2201, %v2213
    %v2215 = vlaneseq
    %v2216 = vshrl.u32 %v2215, 7
    %v2217 = vsub.s32 3, %v2216
    %v2218 = vrot.slane %v2201, %v2217
    %v2255 = vunpack.c.l.b16 %v2168
    %v2256 = vunpack.c.h.b16 %v2168
    %v2257 = vunpack.c.l.b16 %v2169
    %v2258 = vunpack.c.h.b16 %v2169
    %v2259 = vunpack.c.l.b16 %v2170
    %v2260 = vunpack.c.h.b16 %v2170
    %v2261 = vunpack.c.l.b16 %v2171
    %v2262 = vunpack.c.h.b16 %v2171
    %v2263 = vunpack.c.l.b16 %v2172
    %v2264 = vunpack.c.h.b16 %v2172
    %v2265 = vunpack.c.l.b16 %v2173
    %v2266 = vunpack.c.h.b16 %v2173
    %v2267 = vunpack.c.l.b16 %v2174
    %v2268 = vunpack.c.h.b16 %v2174
    %v2269 = vunpack.c.l.b16 %v2175
    %v2270 = vunpack.c.h.b16 %v2175
    %v2271 = vunpack.c.l.b16 %v2176
    %v2272 = vunpack.c.h.b16 %v2176
    %v2273 = vunpack.c.l.b16 %v2177
    %v2274 = vunpack.c.h.b16 %v2177
    %v2275 = vunpack.c.l.b16 %v2178
    %v2276 = vunpack.c.h.b16 %v2178
    %v2277 = vunpack.c.l.b16 %v2179
    %v2278 = vunpack.c.h.b16 %v2179
    %v2279 = vunpack.c.l.b16 %v2180
    %v2280 = vunpack.c.h.b16 %v2180
    %v2281 = vunpack.c.l.b16 %v2181
    %v2282 = vunpack.c.h.b16 %v2181
    %v2283 = vunpack.c.l.b16 %v2182
    %v2284 = vunpack.c.h.b16 %v2182
    %v2285 = vunpack.c.l.b16 %v2183
    %v2286 = vunpack.c.h.b16 %v2183
    %v2287 = vunpack.c.l.b16 %v2184
    %v2288 = vunpack.c.h.b16 %v2184
    %v2289 = vunpack.c.l.b16 %v2185
    %v2290 = vunpack.c.h.b16 %v2185
    %v2291 = vunpack.c.l.b16 %v2186
    %v2292 = vunpack.c.h.b16 %v2186
    %v2293 = vunpack.c.l.b16 %v2187
    %v2294 = vunpack.c.h.b16 %v2187
    %v2295 = vunpack.c.l.b16 %v2188
    %v2296 = vunpack.c.h.b16 %v2188
    %v2297 = vunpack.c.l.b16 %v2189
    %v2298 = vunpack.c.h.b16 %v2189
    %v2299 = vunpack.c.l.b16 %v2190
    %v2300 = vunpack.c.h.b16 %v2190
    %v2301 = vunpack.c.l.b16 %v2191
    %v2302 = vunpack.c.h.b16 %v2191
    %v2303 = vunpack.c.l.b16 %v2192
    %v2304 = vunpack.c.h.b16 %v2192
    %v2305 = vunpack.c.l.b16 %v2193
    %v2306 = vunpack.c.h.b16 %v2193
    %v2307 = vunpack.c.l.b16 %v2194
    %v2308 = vunpack.c.h.b16 %v2194
    %v2309 = vunpack.c.l.b16 %v2195
    %v2310 = vunpack.c.h.b16 %v2195
    %v2311 = vunpack.c.l.b16 %v2196
    %v2312 = vunpack.c.h.b16 %v2196
    %v2313 = vunpack.c.l.b16 %v2197
    %v2314 = vunpack.c.h.b16 %v2197
    %v2315 = vunpack.c.l.b16 %v2198
    %v2316 = vunpack.c.h.b16 %v2198
    %v2317 = vunpack.c.l.b16 %v2199
    %v2318 = vunpack.c.h.b16 %v2199
    %v2319 = vpack.c.b16 %v2259, %v2255
    %v2320 = vpack.c.b16 %v2260, %v2256
    %v2321 = vpack.c.b16 %v2261, %v2257
    %v2322 = vpack.c.b16 %v2262, %v2258
    %v2323 = vpack.c.b16 %v2267, %v2263
    %v2324 = vpack.c.b16 %v2268, %v2264
    %v2325 = vpack.c.b16 %v2269, %v2265
    %v2326 = vpack.c.b16 %v2270, %v2266
    %v2327 = vpack.c.b16 %v2275, %v2271
    %v2328 = vpack.c.b16 %v2276, %v2272
    %v2329 = vpack.c.b16 %v2277, %v2273
    %v2330 = vpack.c.b16 %v2278, %v2274
    %v2331 = vpack.c.b16 %v2283, %v2279
    %v2332 = vpack.c.b16 %v2284, %v2280
    %v2333 = vpack.c.b16 %v2285, %v2281
    %v2334 = vpack.c.b16 %v2286, %v2282
    %v2335 = vpack.c.b16 %v2291, %v2287
    %v2336 = vpack.c.b16 %v2292, %v2288
    %v2337 = vpack.c.b16 %v2293, %v2289
    %v2338 = vpack.c.b16 %v2294, %v2290
    %v2339 = vpack.c.b16 %v2299, %v2295
    %v2340 = vpack.c.b16 %v2300, %v2296
    %v2341 = vpack.c.b16 %v2301, %v2297
    %v2342 = vpack.c.b16 %v2302, %v2298
    %v2343 = vpack.c.b16 %v2307, %v2303
    %v2344 = vpack.c.b16 %v2308, %v2304
    %v2345 = vpack.c.b16 %v2309, %v2305
    %v2346 = vpack.c.b16 %v2310, %v2306
    %v2347 = vpack.c.b16 %v2315, %v2311
    %v2348 = vpack.c.b16 %v2316, %v2312
    %v2349 = vpack.c.b16 %v2317, %v2313
    %v2350 = vpack.c.b16 %v2318, %v2314
    %2383 = vmatprep.subr.bf16.mxu0 %v2320
    %2384 = vmatpush1.bf16.msra.mxu0 %v2319
    %2385 = vmatprep.subr.bf16.mxu0 %v2324
    %2386 = vmatpush1.bf16.msra.mxu0 %v2323
    %2387 = vmatprep.subr.bf16.mxu0 %v2328
    %2388 = vmatpush1.bf16.msra.mxu0 %v2327
    %2389 = vmatprep.subr.bf16.mxu0 %v2332
    %2390 = vmatpush1.bf16.msra.mxu0 %v2331
    %2391 = vmatprep.subr.bf16.mxu0 %v2336
    %2392 = vmatpush1.bf16.msra.mxu0 %v2335
    %2393 = vmatprep.subr.bf16.mxu0 %v2340
    %2394 = vmatpush1.bf16.msra.mxu0 %v2339
    %2395 = vmatprep.subr.bf16.mxu0 %v2344
    %2396 = vmatpush1.bf16.msra.mxu0 %v2343
    %2397 = vmatprep.subr.bf16.mxu0 %v2348
    %2398 = vmatpush1.bf16.msra.mxu0 %v2347
    %2399 = vmatprep.subr.bf16.mxu0 0
    %2400 = vmatpush1.bf16.msra.mxu0 0
    %2401 = vmatprep.subr.bf16.mxu0 0
    %2402 = vmatpush1.bf16.msra.mxu0 0
    %2403 = vmatprep.subr.bf16.mxu0 0
    %2404 = vmatpush1.bf16.msra.mxu0 0
    %2405 = vmatprep.subr.bf16.mxu0 0
    %2406 = vmatpush1.bf16.msra.mxu0 0
    %2407 = vmatprep.subr.bf16.mxu0 0
    %2408 = vmatpush1.bf16.msra.mxu0 0
    %2409 = vmatprep.subr.bf16.mxu0 0
    %2410 = vmatpush1.bf16.msra.mxu0 0
    %2411 = vmatprep.subr.bf16.mxu0 0
    %2412 = vmatpush1.bf16.msra.mxu0 0
    %2413 = vmatprep.subr.bf16.mxu0 0
    %2414 = vmatpush1.bf16.msra.mxu0 0
    %2415 = vmatprep.mubr.bf16.mxu0 0
    %2416 = vmatmul.mubr.bf16.gmra.mrb[0].mxu0 %v2159
    %v2417 = vpop.f32.mrb[0].mxu0
    %v2418 = vadd.f32 %v2206, %v2417
    %v2419 = vpop.f32.mrb[0].mxu0
    %v2420 = vadd.f32 %v2210, %v2419
    %v2421 = vpop.f32.mrb[0].mxu0
    %v2422 = vadd.f32 %v2206, %v2421
    %v2423 = vpop.f32.mrb[0].mxu0
    %v2424 = vadd.f32 %v2210, %v2423
    %2425 = vmatprep.mubr.bf16.mxu0 0
    %2426 = vmatmul.mubr.bf16.gmra.mrb[0].mxu0 %v2160
    %v2427 = vpop.f32.mrb[0].mxu0
    %v2428 = vadd.f32 %v2206, %v2427
    %v2429 = vpop.f32.mrb[0].mxu0
    %v2430 = vadd.f32 %v2210, %v2429
    %v2431 = vpop.f32.mrb[0].mxu0
    %v2432 = vadd.f32 %v2206, %v2431
    %v2433 = vpop.f32.mrb[0].mxu0
    %v2434 = vadd.f32 %v2210, %v2433
    %2435 = vmatprep.mubr.bf16.mxu0 0
    %2436 = vmatmul.mubr.bf16.gmra.mrb[0].mxu0 %v2161
    %v2437 = vpop.f32.mrb[0].mxu0
    %v2438 = vadd.f32 %v2206, %v2437
    %v2439 = vpop.f32.mrb[0].mxu0
    %v2440 = vadd.f32 %v2210, %v2439
    %v2441 = vpop.f32.mrb[0].mxu0
    %v2442 = vadd.f32 %v2206, %v2441
    %v2443 = vpop.f32.mrb[0].mxu0
    %v2444 = vadd.f32 %v2210, %v2443
    %2445 = vmatprep.mubr.bf16.mxu0 0
    %2446 = vmatmul.mubr.bf16.gmra.mrb[0].mxu0 %v2162
    %v2447 = vpop.f32.mrb[0].mxu0
    %v2448 = vadd.f32 %v2206, %v2447
    %v2449 = vpop.f32.mrb[0].mxu0
    %v2450 = vadd.f32 %v2210, %v2449
    %v2451 = vpop.f32.mrb[0].mxu0
    %v2452 = vadd.f32 %v2206, %v2451
    %v2453 = vpop.f32.mrb[0].mxu0
    %v2454 = vadd.f32 %v2210, %v2453
    %2455 = vmatprep.mubr.bf16.mxu0 0
    %2456 = vmatmul.mubr.bf16.gmra.mrb[0].mxu0 %v2163
    %v2457 = vpop.f32.mrb[0].mxu0
    %v2458 = vadd.f32 %v2206, %v2457
    %v2459 = vpop.f32.mrb[0].mxu0
    %v2460 = vadd.f32 %v2210, %v2459
    %v2461 = vpop.f32.mrb[0].mxu0
    %v2462 = vadd.f32 %v2206, %v2461
    %v2463 = vpop.f32.mrb[0].mxu0
    %v2464 = vadd.f32 %v2210, %v2463
    %2465 = vmatprep.mubr.bf16.mxu0 0
    %2466 = vmatmul.mubr.bf16.gmra.mrb[0].mxu0 %v2164
    %v2467 = vpop.f32.mrb[0].mxu0
    %v2468 = vadd.f32 %v2206, %v2467
    %v2469 = vpop.f32.mrb[0].mxu0
    %v2470 = vadd.f32 %v2210, %v2469
    %v2471 = vpop.f32.mrb[0].mxu0
    %v2472 = vadd.f32 %v2206, %v2471
    %v2473 = vpop.f32.mrb[0].mxu0
    %v2474 = vadd.f32 %v2210, %v2473
    %2475 = vmatprep.mubr.bf16.mxu0 0
    %2476 = vmatmul.mubr.bf16.gmra.mrb[0].mxu0 %v2165
    %v2477 = vpop.f32.mrb[0].mxu0
    %v2478 = vadd.f32 %v2206, %v2477
    %v2479 = vpop.f32.mrb[0].mxu0
    %v2480 = vadd.f32 %v2210, %v2479
    %v2481 = vpop.f32.mrb[0].mxu0
    %v2482 = vadd.f32 %v2206, %v2481
    %v2483 = vpop.f32.mrb[0].mxu0
    %v2484 = vadd.f32 %v2210, %v2483
    %2485 = vmatprep.mubr.bf16.mxu0 0
    %2486 = vmatmul.mubr.bf16.gmra.mrb[0].mxu0 %v2166
    %v2487 = vpop.f32.mrb[0].mxu0
    %v2488 = vadd.f32 %v2206, %v2487
    %v2489 = vpop.f32.mrb[0].mxu0
    %v2490 = vadd.f32 %v2210, %v2489
    %v2491 = vpop.f32.mrb[0].mxu0
    %v2492 = vadd.f32 %v2206, %v2491
    %v2493 = vpop.f32.mrb[0].mxu0
    %v2494 = vadd.f32 %v2210, %v2493
    %2495 = vdwg.mxu0
    %2496 = vmatprep.subr.bf16.mxu0 %v2322
    %2497 = vmatpush1.bf16.msra.mxu0 %v2321
    %2498 = vmatprep.subr.bf16.mxu0 %v2326
    %2499 = vmatpush1.bf16.msra.mxu0 %v2325
    %2500 = vmatprep.subr.bf16.mxu0 %v2330
    %2501 = vmatpush1.bf16.msra.mxu0 %v2329
    %2502 = vmatprep.subr.bf16.mxu0 %v2334
    %2503 = vmatpush1.bf16.msra.mxu0 %v2333
    %2504 = vmatprep.subr.bf16.mxu0 %v2338
    %2505 = vmatpush1.bf16.msra.mxu0 %v2337
    %2506 = vmatprep.subr.bf16.mxu0 %v2342
    %2507 = vmatpush1.bf16.msra.mxu0 %v2341
    %2508 = vmatprep.subr.bf16.mxu0 %v2346
    %2509 = vmatpush1.bf16.msra.mxu0 %v2345
    %2510 = vmatprep.subr.bf16.mxu0 %v2350
    %2511 = vmatpush1.bf16.msra.mxu0 %v2349
    %2512 = vmatprep.subr.bf16.mxu0 0
    %2513 = vmatpush1.bf16.msra.mxu0 0
    %2514 = vmatprep.subr.bf16.mxu0 0
    %2515 = vmatpush1.bf16.msra.mxu0 0
    %2516 = vmatprep.subr.bf16.mxu0 0
    %2517 = vmatpush1.bf16.msra.mxu0 0
    %2518 = vmatprep.subr.bf16.mxu0 0
    %2519 = vmatpush1.bf16.msra.mxu0 0
    %2520 = vmatprep.subr.bf16.mxu0 0
    %2521 = vmatpush1.bf16.msra.mxu0 0
    %2522 = vmatprep.subr.bf16.mxu0 0
    %2523 = vmatpush1.bf16.msra.mxu0 0
    %2524 = vmatprep.subr.bf16.mxu0 0
    %2525 = vmatpush1.bf16.msra.mxu0 0
    %2526 = vmatprep.subr.bf16.mxu0 0
    %2527 = vmatpush1.bf16.msra.mxu0 0
    %2528 = vmatprep.mubr.bf16.mxu0 0
    %2529 = vmatmul.mubr.bf16.gmra.mrb[0].mxu0 %v2159
    %v2530 = vpop.f32.mrb[0].mxu0
    %v2531 = vadd.f32 %v2214, %v2530
    %v2532 = vpop.f32.mrb[0].mxu0
    %v2533 = vadd.f32 %v2218, %v2532
    %v2534 = vpop.f32.mrb[0].mxu0
    %v2535 = vadd.f32 %v2214, %v2534
    %v2536 = vpop.f32.mrb[0].mxu0
    %v2537 = vadd.f32 %v2218, %v2536
    %2538 = vmatprep.mubr.bf16.mxu0 0
    %2539 = vmatmul.mubr.bf16.gmra.mrb[0].mxu0 %v2160
    %v2540 = vpop.f32.mrb[0].mxu0
    %v2541 = vadd.f32 %v2214, %v2540
    %v2542 = vpop.f32.mrb[0].mxu0
    %v2543 = vadd.f32 %v2218, %v2542
    %v2544 = vpop.f32.mrb[0].mxu0
    %v2545 = vadd.f32 %v2214, %v2544
    %v2546 = vpop.f32.mrb[0].mxu0
    %v2547 = vadd.f32 %v2218, %v2546
    %2548 = vmatprep.mubr.bf16.mxu0 0
    %2549 = vmatmul.mubr.bf16.gmra.mrb[0].mxu0 %v2161
    %v2550 = vpop.f32.mrb[0].mxu0
    %v2551 = vadd.f32 %v2214, %v2550
    %v2552 = vpop.f32.mrb[0].mxu0
    %v2553 = vadd.f32 %v2218, %v2552
    %v2554 = vpop.f32.mrb[0].mxu0
    %v2555 = vadd.f32 %v2214, %v2554
    %v2556 = vpop.f32.mrb[0].mxu0
    %v2557 = vadd.f32 %v2218, %v2556
    %2558 = vmatprep.mubr.bf16.mxu0 0
    %2559 = vmatmul.mubr.bf16.gmra.mrb[0].mxu0 %v2162
    %v2560 = vpop.f32.mrb[0].mxu0
    %v2561 = vadd.f32 %v2214, %v2560
    %v2562 = vpop.f32.mrb[0].mxu0
    %v2563 = vadd.f32 %v2218, %v2562
    %v2564 = vpop.f32.mrb[0].mxu0
    %v2565 = vadd.f32 %v2214, %v2564
    %v2566 = vpop.f32.mrb[0].mxu0
    %v2567 = vadd.f32 %v2218, %v2566
    %2568 = vmatprep.mubr.bf16.mxu0 0
    %2569 = vmatmul.mubr.bf16.gmra.mrb[0].mxu0 %v2163
    %v2570 = vpop.f32.mrb[0].mxu0
    %v2571 = vadd.f32 %v2214, %v2570
    %v2572 = vpop.f32.mrb[0].mxu0
    %v2573 = vadd.f32 %v2218, %v2572
    %v2574 = vpop.f32.mrb[0].mxu0
    %v2575 = vadd.f32 %v2214, %v2574
    %v2576 = vpop.f32.mrb[0].mxu0
    %v2577 = vadd.f32 %v2218, %v2576
    %2578 = vmatprep.mubr.bf16.mxu0 0
    %2579 = vmatmul.mubr.bf16.gmra.mrb[0].mxu0 %v2164
    %v2580 = vpop.f32.mrb[0].mxu0
    %v2581 = vadd.f32 %v2214, %v2580
    %v2582 = vpop.f32.mrb[0].mxu0
    %v2583 = vadd.f32 %v2218, %v2582
    %v2584 = vpop.f32.mrb[0].mxu0
    %v2585 = vadd.f32 %v2214, %v2584
    %v2586 = vpop.f32.mrb[0].mxu0
    %v2587 = vadd.f32 %v2218, %v2586
    %2588 = vmatprep.mubr.bf16.mxu0 0
    %2589 = vmatmul.mubr.bf16.gmra.mrb[0].mxu0 %v2165
    %v2590 = vpop.f32.mrb[0].mxu0
    %v2591 = vadd.f32 %v2214, %v2590
    %v2592 = vpop.f32.mrb[0].mxu0
    %v2593 = vadd.f32 %v2218, %v2592
    %v2594 = vpop.f32.mrb[0].mxu0
    %v2595 = vadd.f32 %v2214, %v2594
    %v2596 = vpop.f32.mrb[0].mxu0
    %v2597 = vadd.f32 %v2218, %v2596
    %2598 = vmatprep.mubr.bf16.mxu0 0
    %2599 = vmatmul.mubr.bf16.gmra.mrb[0].mxu0 %v2166
    %v2600 = vpop.f32.mrb[0].mxu0
    %v2601 = vadd.f32 %v2214, %v2600
    %v2602 = vpop.f32.mrb[0].mxu0
    %v2603 = vadd.f32 %v2218, %v2602
    %v2604 = vpop.f32.mrb[0].mxu0
    %v2605 = vadd.f32 %v2214, %v2604
    %v2606 = vpop.f32.mrb[0].mxu0
    %v2607 = vadd.f32 %v2218, %v2606
    %2608 = vdwg.mxu0
    %v2609 = vpack.c.bf16 %v2422, %v2418
    %v2610 = vpack.c.bf16 %v2424, %v2420
    %v2611 = vpack.c.bf16 %v2535, %v2531
    %v2612 = vpack.c.bf16 %v2537, %v2533
    %v2613 = vpack.c.bf16 %v2432, %v2428
    %v2614 = vpack.c.bf16 %v2434, %v2430
    %v2615 = vpack.c.bf16 %v2545, %v2541
    %v2616 = vpack.c.bf16 %v2547, %v2543
    %v2617 = vpack.c.bf16 %v2442, %v2438
    %v2618 = vpack.c.bf16 %v2444, %v2440
    %v2619 = vpack.c.bf16 %v2555, %v2551
    %v2620 = vpack.c.bf16 %v2557, %v2553
    %v2621 = vpack.c.bf16 %v2452, %v2448
    %v2622 = vpack.c.bf16 %v2454, %v2450
    %v2623 = vpack.c.bf16 %v2565, %v2561
    %v2624 = vpack.c.bf16 %v2567, %v2563
    %v2625 = vpack.c.bf16 %v2462, %v2458
    %v2626 = vpack.c.bf16 %v2464, %v2460
    %v2627 = vpack.c.bf16 %v2575, %v2571
    %v2628 = vpack.c.bf16 %v2577, %v2573
    %v2629 = vpack.c.bf16 %v2472, %v2468
    %v2630 = vpack.c.bf16 %v2474, %v2470
    %v2631 = vpack.c.bf16 %v2585, %v2581
    %v2632 = vpack.c.bf16 %v2587, %v2583
    %v2633 = vpack.c.bf16 %v2482, %v2478
    %v2634 = vpack.c.bf16 %v2484, %v2480
    %v2635 = vpack.c.bf16 %v2595, %v2591
    %v2636 = vpack.c.bf16 %v2597, %v2593
    %v2637 = vpack.c.bf16 %v2492, %v2488
    %v2638 = vpack.c.bf16 %v2494, %v2490
    %v2639 = vpack.c.bf16 %v2605, %v2601
    %v2640 = vpack.c.bf16 %v2607, %v2603
    %2641 = vst [vmem:[#allocation3] sm:$0xff] %v2609
    %2642 = vst [vmem:[#allocation3 + $0x8] sm:$0xff] %v2610
    %2643 = vst [vmem:[#allocation3 + $0x10] sm:$0xff] %v2611
    %2644 = vst [vmem:[#allocation3 + $0x18] sm:$0xff] %v2612
    %2645 = vst [vmem:[#allocation3 + $0x20] sm:$0xff] %v2613
    %2646 = vst [vmem:[#allocation3 + $0x28] sm:$0xff] %v2614
    %2647 = vst [vmem:[#allocation3 + $0x30] sm:$0xff] %v2615
    %2648 = vst [vmem:[#allocation3 + $0x38] sm:$0xff] %v2616
    %2649 = vst [vmem:[#allocation3 + $0x40] sm:$0xff] %v2617
    %2650 = vst [vmem:[#allocation3 + $0x48] sm:$0xff] %v2618
    %2651 = vst [vmem:[#allocation3 + $0x50] sm:$0xff] %v2619
    %2652 = vst [vmem:[#allocation3 + $0x58] sm:$0xff] %v2620
    %2653 = vst [vmem:[#allocation3 + $0x60] sm:$0xff] %v2621
    %2654 = vst [vmem:[#allocation3 + $0x68] sm:$0xff] %v2622
    %2655 = vst [vmem:[#allocation3 + $0x70] sm:$0xff] %v2623
    %2656 = vst [vmem:[#allocation3 + $0x78] sm:$0xff] %v2624
    %2657 = vst [vmem:[#allocation3 + $0x80] sm:$0xff] %v2625
    %2658 = vst [vmem:[#allocation3 + $0x88] sm:$0xff] %v2626
    %2659 = vst [vmem:[#allocation3 + $0x90] sm:$0xff] %v2627
    %2660 = vst [vmem:[#allocation3 + $0x98] sm:$0xff] %v2628
    %2661 = vst [vmem:[#allocation3 + $0xa0] sm:$0xff] %v2629
    %2662 = vst [vmem:[#allocation3 + $0xa8] sm:$0xff] %v2630
    %2663 = vst [vmem:[#allocation3 + $0xb0] sm:$0xff] %v2631
    %2664 = vst [vmem:[#allocation3 + $0xb8] sm:$0xff] %v2632
    %2665 = vst [vmem:[#allocation3 + $0xc0] sm:$0xff] %v2633
    %2666 = vst [vmem:[#allocation3 + $0xc8] sm:$0xff] %v2634
    %2667 = vst [vmem:[#allocation3 + $0xd0] sm:$0xff] %v2635
    %2668 = vst [vmem:[#allocation3 + $0xd8] sm:$0xff] %v2636
    %2669 = vst [vmem:[#allocation3 + $0xe0] sm:$0xff] %v2637
    %2670 = vst [vmem:[#allocation3 + $0xe8] sm:$0xff] %v2638
    %2671 = vst [vmem:[#allocation3 + $0xf0] sm:$0xff] %v2639
    %2672 = vst [vmem:[#allocation3 + $0xf8] sm:$0xff] %v2640
    %s2673 = scalar_lea.vmem [#allocation10], 256
    %v2674 = vld [vmem:[%s2673] sm:$0xff]
    %v2675 = vld [vmem:[%s2673 + $0x8] sm:$0xff]
    %v2676 = vld [vmem:[%s2673 + $0x10] sm:$0xff]
    %v2677 = vld [vmem:[%s2673 + $0x18] sm:$0xff]
    %v2678 = vld [vmem:[%s2673 + $0x20] sm:$0xff]
    %v2679 = vld [vmem:[%s2673 + $0x28] sm:$0xff]
    %v2680 = vld [vmem:[%s2673 + $0x30] sm:$0xff]
    %v2681 = vld [vmem:[%s2673 + $0x38] sm:$0xff]
    %v2682 = vld [vmem:[%s2673 + $0x40] sm:$0xff]
    %v2683 = vld [vmem:[%s2673 + $0x48] sm:$0xff]
    %v2684 = vld [vmem:[%s2673 + $0x50] sm:$0xff]
    %v2685 = vld [vmem:[%s2673 + $0x58] sm:$0xff]
    %v2686 = vld [vmem:[%s2673 + $0x60] sm:$0xff]
    %v2687 = vld [vmem:[%s2673 + $0x68] sm:$0xff]
    %v2688 = vld [vmem:[%s2673 + $0x70] sm:$0xff]
    %v2689 = vld [vmem:[%s2673 + $0x78] sm:$0xff]
    %v2690 = vld [vmem:[%s2673 + $0x80] sm:$0xff]
    %v2691 = vld [vmem:[%s2673 + $0x88] sm:$0xff]
    %v2692 = vld [vmem:[%s2673 + $0x90] sm:$0xff]
    %v2693 = vld [vmem:[%s2673 + $0x98] sm:$0xff]
    %v2694 = vld [vmem:[%s2673 + $0xa0] sm:$0xff]
    %v2695 = vld [vmem:[%s2673 + $0xa8] sm:$0xff]
    %v2696 = vld [vmem:[%s2673 + $0xb0] sm:$0xff]
    %v2697 = vld [vmem:[%s2673 + $0xb8] sm:$0xff]
    %v2698 = vld [vmem:[%s2673 + $0xc0] sm:$0xff]
    %v2699 = vld [vmem:[%s2673 + $0xc8] sm:$0xff]
    %v2700 = vld [vmem:[%s2673 + $0xd0] sm:$0xff]
    %v2701 = vld [vmem:[%s2673 + $0xd8] sm:$0xff]
    %v2702 = vld [vmem:[%s2673 + $0xe0] sm:$0xff]
    %v2703 = vld [vmem:[%s2673 + $0xe8] sm:$0xff]
    %v2704 = vld [vmem:[%s2673 + $0xf0] sm:$0xff]
    %v2705 = vld [vmem:[%s2673 + $0xf8] sm:$0xff]
    %v2706 = vld [vmem:[%s695] sm:$0xff]
    %v2707 = vld [vmem:[%s695 + $0x8] sm:$0xff]
    %v2708 = vld [vmem:[%s695 + $0x10] sm:$0xff]
    %v2709 = vld [vmem:[%s695 + $0x18] sm:$0xff]
    %v2710 = vunpack.c.l.bf16 %v2706
    %v2711 = vunpack.c.l.bf16 %v2707
    %v2712 = vunpack.c.l.bf16 %v2708
    %v2713 = vunpack.c.l.bf16 %v2709
    %v2714 = vunpack.c.h.bf16 %v2706
    %v2715 = vunpack.c.h.bf16 %v2707
    %v2716 = vunpack.c.h.bf16 %v2708
    %v2717 = vunpack.c.h.bf16 %v2709
    %v2750 = vunpack.c.l.b16 %v2674
    %v2751 = vunpack.c.h.b16 %v2674
    %v2752 = vunpack.c.l.b16 %v2675
    %v2753 = vunpack.c.h.b16 %v2675
    %v2754 = vunpack.c.l.b16 %v2676
    %v2755 = vunpack.c.h.b16 %v2676
    %v2756 = vunpack.c.l.b16 %v2677
    %v2757 = vunpack.c.h.b16 %v2677
    %v2758 = vunpack.c.l.b16 %v2678
    %v2759 = vunpack.c.h.b16 %v2678
    %v2760 = vunpack.c.l.b16 %v2679
    %v2761 = vunpack.c.h.b16 %v2679
    %v2762 = vunpack.c.l.b16 %v2680
    %v2763 = vunpack.c.h.b16 %v2680
    %v2764 = vunpack.c.l.b16 %v2681
    %v2765 = vunpack.c.h.b16 %v2681
    %v2766 = vunpack.c.l.b16 %v2682
    %v2767 = vunpack.c.h.b16 %v2682
    %v2768 = vunpack.c.l.b16 %v2683
    %v2769 = vunpack.c.h.b16 %v2683
    %v2770 = vunpack.c.l.b16 %v2684
    %v2771 = vunpack.c.h.b16 %v2684
    %v2772 = vunpack.c.l.b16 %v2685
    %v2773 = vunpack.c.h.b16 %v2685
    %v2774 = vunpack.c.l.b16 %v2686
    %v2775 = vunpack.c.h.b16 %v2686
    %v2776 = vunpack.c.l.b16 %v2687
    %v2777 = vunpack.c.h.b16 %v2687
    %v2778 = vunpack.c.l.b16 %v2688
    %v2779 = vunpack.c.h.b16 %v2688
    %v2780 = vunpack.c.l.b16 %v2689
    %v2781 = vunpack.c.h.b16 %v2689
    %v2782 = vunpack.c.l.b16 %v2690
    %v2783 = vunpack.c.h.b16 %v2690
    %v2784 = vunpack.c.l.b16 %v2691
    %v2785 = vunpack.c.h.b16 %v2691
    %v2786 = vunpack.c.l.b16 %v2692
    %v2787 = vunpack.c.h.b16 %v2692
    %v2788 = vunpack.c.l.b16 %v2693
    %v2789 = vunpack.c.h.b16 %v2693
    %v2790 = vunpack.c.l.b16 %v2694
    %v2791 = vunpack.c.h.b16 %v2694
    %v2792 = vunpack.c.l.b16 %v2695
    %v2793 = vunpack.c.h.b16 %v2695
    %v2794 = vunpack.c.l.b16 %v2696
    %v2795 = vunpack.c.h.b16 %v2696
    %v2796 = vunpack.c.l.b16 %v2697
    %v2797 = vunpack.c.h.b16 %v2697
    %v2798 = vunpack.c.l.b16 %v2698
    %v2799 = vunpack.c.h.b16 %v2698
    %v2800 = vunpack.c.l.b16 %v2699
    %v2801 = vunpack.c.h.b16 %v2699
    %v2802 = vunpack.c.l.b16 %v2700
    %v2803 = vunpack.c.h.b16 %v2700
    %v2804 = vunpack.c.l.b16 %v2701
    %v2805 = vunpack.c.h.b16 %v2701
    %v2806 = vunpack.c.l.b16 %v2702
    %v2807 = vunpack.c.h.b16 %v2702
    %v2808 = vunpack.c.l.b16 %v2703
    %v2809 = vunpack.c.h.b16 %v2703
    %v2810 = vunpack.c.l.b16 %v2704
    %v2811 = vunpack.c.h.b16 %v2704
    %v2812 = vunpack.c.l.b16 %v2705
    %v2813 = vunpack.c.h.b16 %v2705
    %v2814 = vpack.c.b16 %v2754, %v2750
    %v2815 = vpack.c.b16 %v2755, %v2751
    %v2816 = vpack.c.b16 %v2756, %v2752
    %v2817 = vpack.c.b16 %v2757, %v2753
    %v2818 = vpack.c.b16 %v2762, %v2758
    %v2819 = vpack.c.b16 %v2763, %v2759
    %v2820 = vpack.c.b16 %v2764, %v2760
    %v2821 = vpack.c.b16 %v2765, %v2761
    %v2822 = vpack.c.b16 %v2770, %v2766
    %v2823 = vpack.c.b16 %v2771, %v2767
    %v2824 = vpack.c.b16 %v2772, %v2768
    %v2825 = vpack.c.b16 %v2773, %v2769
    %v2826 = vpack.c.b16 %v2778, %v2774
    %v2827 = vpack.c.b16 %v2779, %v2775
    %v2828 = vpack.c.b16 %v2780, %v2776
    %v2829 = vpack.c.b16 %v2781, %v2777
    %v2830 = vpack.c.b16 %v2786, %v2782
    %v2831 = vpack.c.b16 %v2787, %v2783
    %v2832 = vpack.c.b16 %v2788, %v2784
    %v2833 = vpack.c.b16 %v2789, %v2785
    %v2834 = vpack.c.b16 %v2794, %v2790
    %v2835 = vpack.c.b16 %v2795, %v2791
    %v2836 = vpack.c.b16 %v2796, %v2792
    %v2837 = vpack.c.b16 %v2797, %v2793
    %v2838 = vpack.c.b16 %v2802, %v2798
    %v2839 = vpack.c.b16 %v2803, %v2799
    %v2840 = vpack.c.b16 %v2804, %v2800
    %v2841 = vpack.c.b16 %v2805, %v2801
    %v2842 = vpack.c.b16 %v2810, %v2806
    %v2843 = vpack.c.b16 %v2811, %v2807
    %v2844 = vpack.c.b16 %v2812, %v2808
    %v2845 = vpack.c.b16 %v2813, %v2809
    %2878 = vmatprep.subr.bf16.mxu0 %v2815
    %2879 = vmatpush1.bf16.msra.mxu0 %v2814
    %2880 = vmatprep.subr.bf16.mxu0 %v2819
    %2881 = vmatpush1.bf16.msra.mxu0 %v2818
    %2882 = vmatprep.subr.bf16.mxu0 %v2823
    %2883 = vmatpush1.bf16.msra.mxu0 %v2822
    %2884 = vmatprep.subr.bf16.mxu0 %v2827
    %2885 = vmatpush1.bf16.msra.mxu0 %v2826
    %2886 = vmatprep.subr.bf16.mxu0 %v2831
    %2887 = vmatpush1.bf16.msra.mxu0 %v2830
    %2888 = vmatprep.subr.bf16.mxu0 %v2835
    %2889 = vmatpush1.bf16.msra.mxu0 %v2834
    %2890 = vmatprep.subr.bf16.mxu0 %v2839
    %2891 = vmatpush1.bf16.msra.mxu0 %v2838
    %2892 = vmatprep.subr.bf16.mxu0 %v2843
    %2893 = vmatpush1.bf16.msra.mxu0 %v2842
    %2894 = vmatprep.subr.bf16.mxu0 0
    %2895 = vmatpush1.bf16.msra.mxu0 0
    %2896 = vmatprep.subr.bf16.mxu0 0
    %2897 = vmatpush1.bf16.msra.mxu0 0
    %2898 = vmatprep.subr.bf16.mxu0 0
    %2899 = vmatpush1.bf16.msra.mxu0 0
    %2900 = vmatprep.subr.bf16.mxu0 0
    %2901 = vmatpush1.bf16.msra.mxu0 0
    %2902 = vmatprep.subr.bf16.mxu0 0
    %2903 = vmatpush1.bf16.msra.mxu0 0
    %2904 = vmatprep.subr.bf16.mxu0 0
    %2905 = vmatpush1.bf16.msra.mxu0 0
    %2906 = vmatprep.subr.bf16.mxu0 0
    %2907 = vmatpush1.bf16.msra.mxu0 0
    %2908 = vmatprep.subr.bf16.mxu0 0
    %2909 = vmatpush1.bf16.msra.mxu0 0
    %2910 = vmatprep.mubr.bf16.mxu0 0
    %2911 = vmatmul.mubr.bf16.gmra.mrb[0].mxu0 0
    %v2912 = vpop.f32.mrb[0].mxu0
    %v2913 = vadd.f32 0.0, %v2912
    %v2914 = vpop.f32.mrb[0].mxu0
    %v2915 = vadd.f32 0.0, %v2914
    %v2916 = vpop.f32.mrb[0].mxu0
    %v2917 = vadd.f32 0.0, %v2916
    %v2918 = vpop.f32.mrb[0].mxu0
    %v2919 = vadd.f32 0.0, %v2918
    %2920 = vdwg.mxu0
    %2921 = vmatprep.subr.bf16.mxu0 %v2817
    %2922 = vmatpush1.bf16.msra.mxu0 %v2816
    %2923 = vmatprep.subr.bf16.mxu0 %v2821
    %2924 = vmatpush1.bf16.msra.mxu0 %v2820
    %2925 = vmatprep.subr.bf16.mxu0 %v2825
    %2926 = vmatpush1.bf16.msra.mxu0 %v2824
    %2927 = vmatprep.subr.bf16.mxu0 %v2829
    %2928 = vmatpush1.bf16.msra.mxu0 %v2828
    %2929 = vmatprep.subr.bf16.mxu0 %v2833
    %2930 = vmatpush1.bf16.msra.mxu0 %v2832
    %2931 = vmatprep.subr.bf16.mxu0 %v2837
    %2932 = vmatpush1.bf16.msra.mxu0 %v2836
    %2933 = vmatprep.subr.bf16.mxu0 %v2841
    %2934 = vmatpush1.bf16.msra.mxu0 %v2840
    %2935 = vmatprep.subr.bf16.mxu0 %v2845
    %2936 = vmatpush1.bf16.msra.mxu0 %v2844
    %2937 = vmatprep.subr.bf16.mxu0 0
    %2938 = vmatpush1.bf16.msra.mxu0 0
    %2939 = vmatprep.subr.bf16.mxu0 0
    %2940 = vmatpush1.bf16.msra.mxu0 0
    %2941 = vmatprep.subr.bf16.mxu0 0
    %2942 = vmatpush1.bf16.msra.mxu0 0
    %2943 = vmatprep.subr.bf16.mxu0 0
    %2944 = vmatpush1.bf16.msra.mxu0 0
    %2945 = vmatprep.subr.bf16.mxu0 0
    %2946 = vmatpush1.bf16.msra.mxu0 0
    %2947 = vmatprep.subr.bf16.mxu0 0
    %2948 = vmatpush1.bf16.msra.mxu0 0
    %2949 = vmatprep.subr.bf16.mxu0 0
    %2950 = vmatpush1.bf16.msra.mxu0 0
    %2951 = vmatprep.subr.bf16.mxu0 0
    %2952 = vmatpush1.bf16.msra.mxu0 0
    %2953 = vmatprep.mubr.bf16.mxu0 0
    %2954 = vmatmul.mubr.bf16.gmra.mrb[0].mxu0 0
    %v2955 = vpop.f32.mrb[0].mxu0
    %v2956 = vadd.f32 0.0, %v2955
    %v2957 = vpop.f32.mrb[0].mxu0
    %v2958 = vadd.f32 0.0, %v2957
    %v2959 = vpop.f32.mrb[0].mxu0
    %v2960 = vadd.f32 0.0, %v2959
    %v2961 = vpop.f32.mrb[0].mxu0
    %v2962 = vadd.f32 0.0, %v2961
    %2963 = vdwg.mxu0
    %v2964 = vadd.f32 %v2710, %v2913
    %v2965 = vadd.f32 %v2711, %v2915
    %v2966 = vadd.f32 %v2712, %v2956
    %v2967 = vadd.f32 %v2713, %v2958
    %v2968 = vadd.f32 %v2714, %v2917
    %v2969 = vadd.f32 %v2715, %v2919
    %v2970 = vadd.f32 %v2716, %v2960
    %v2971 = vadd.f32 %v2717, %v2962
    %v2972 = vxor.u32 %v2964, 2147483648
    %v2973 = vxor.u32 %v2965, 2147483648
    %v2974 = vxor.u32 %v2966, 2147483648
    %v2975 = vxor.u32 %v2968, 2147483648
    %v2976 = vxor.u32 %v2969, 2147483648
    %v2977 = vxor.u32 %v2970, 2147483648
    %v2978 = vmul.f32 %v2972, 1.442695
    %v2979 = vpow.pop %v2978
    %v2980 = vmul.f32 %v2973, 1.442695
    %v2981 = vpow.pop %v2980
    %v2982 = vmul.f32 %v2974, 1.442695
    %v2983 = vpow.pop %v2982
    %v2984 = vmul.f32 %v2975, 1.442695
    %v2985 = vpow.pop %v2984
    %v2986 = vmul.f32 %v2976, 1.442695
    %v2987 = vpow.pop %v2986
    %v2988 = vmul.f32 %v2977, 1.442695
    %v2989 = vpow.pop %v2988
    %v2990 = vadd.f32 %v2979, 1.0
    %v2991 = vadd.f32 %v2981, 1.0
    %v2992 = vadd.f32 %v2983, 1.0
    %v2993 = vadd.f32 %v2985, 1.0
    %v2994 = vadd.f32 %v2987, 1.0
    %v2995 = vadd.f32 %v2989, 1.0
    %v2996 = vrcp.pop %v2990
    %v2997 = vmul.f32 1.0, %v2996
    %v2998 = vrcp.pop %v2991
    %v2999 = vmul.f32 1.0, %v2998
    %v3000 = vrcp.pop %v2992
    %v3001 = vmul.f32 1.0, %v3000
    %v3002 = vrcp.pop %v2993
    %v3003 = vmul.f32 1.0, %v3002
    %v3004 = vrcp.pop %v2994
    %v3005 = vmul.f32 1.0, %v3004
    %v3006 = vrcp.pop %v2995
    %v3007 = vmul.f32 1.0, %v3006
    %v3008 = vtanh.pop %v2967
    %v3009 = vtanh.pop %v2971
    %v3010 = vmul.f32 %v2999, 0.0
    %v3011 = vmul.f32 %v3005, 0.0
    %v3012 = vmul.f32 %v2997, %v3008
    %v3013 = vmul.f32 %v3003, %v3009
    %v3014 = vadd.f32 %v3010, %v3012
    %v3015 = vadd.f32 %v3011, %v3013
    %v3016 = vtanh.pop %v3014
    %v3017 = vtanh.pop %v3015
    %v3018 = vmul.f32 %v3001, %v3016
    %v3019 = vmul.f32 %v3007, %v3017
    %3020 = vst [vmem:[#allocation2] sm:$0xff] %v3018
    %3021 = vst [vmem:[#allocation2 + $0x8] sm:$0xff] %v3019
    %v3022 = vld [vmem:[%s1014] sm:$0xff]
    %v3023 = vld [vmem:[%s1014 + $0x8] sm:$0xff]
    %v3024 = vld [vmem:[%s1014 + $0x10] sm:$0xff]
    %v3025 = vld [vmem:[%s1014 + $0x18] sm:$0xff]
    %v3026 = vunpack.c.l.bf16 %v3022
    %v3027 = vunpack.c.l.bf16 %v3023
    %v3028 = vunpack.c.l.bf16 %v3024
    %v3029 = vunpack.c.l.bf16 %v3025
    %v3030 = vunpack.c.h.bf16 %v3022
    %v3031 = vunpack.c.h.bf16 %v3023
    %v3032 = vunpack.c.h.bf16 %v3024
    %v3033 = vunpack.c.h.bf16 %v3025
    %v3034 = vpack.c.bf16 %v3019, %v3018
    %3035 = vmatprep.subr.bf16.mxu0 %v2815
    %3036 = vmatpush1.bf16.msra.mxu0 %v2814
    %3037 = vmatprep.subr.bf16.mxu0 %v2819
    %3038 = vmatpush1.bf16.msra.mxu0 %v2818
    %3039 = vmatprep.subr.bf16.mxu0 %v2823
    %3040 = vmatpush1.bf16.msra.mxu0 %v2822
    %3041 = vmatprep.subr.bf16.mxu0 %v2827
    %3042 = vmatpush1.bf16.msra.mxu0 %v2826
    %3043 = vmatprep.subr.bf16.mxu0 %v2831
    %3044 = vmatpush1.bf16.msra.mxu0 %v2830
    %3045 = vmatprep.subr.bf16.mxu0 %v2835
    %3046 = vmatpush1.bf16.msra.mxu0 %v2834
    %3047 = vmatprep.subr.bf16.mxu0 %v2839
    %3048 = vmatpush1.bf16.msra.mxu0 %v2838
    %3049 = vmatprep.subr.bf16.mxu0 %v2843
    %3050 = vmatpush1.bf16.msra.mxu0 %v2842
    %3051 = vmatprep.subr.bf16.mxu0 0
    %3052 = vmatpush1.bf16.msra.mxu0 0
    %3053 = vmatprep.subr.bf16.mxu0 0
    %3054 = vmatpush1.bf16.msra.mxu0 0
    %3055 = vmatprep.subr.bf16.mxu0 0
    %3056 = vmatpush1.bf16.msra.mxu0 0
    %3057 = vmatprep.subr.bf16.mxu0 0
    %3058 = vmatpush1.bf16.msra.mxu0 0
    %3059 = vmatprep.subr.bf16.mxu0 0
    %3060 = vmatpush1.bf16.msra.mxu0 0
    %3061 = vmatprep.subr.bf16.mxu0 0
    %3062 = vmatpush1.bf16.msra.mxu0 0
    %3063 = vmatprep.subr.bf16.mxu0 0
    %3064 = vmatpush1.bf16.msra.mxu0 0
    %3065 = vmatprep.subr.bf16.mxu0 0
    %3066 = vmatpush1.bf16.msra.mxu0 0
    %3067 = vmatprep.mubr.bf16.mxu0 0
    %3068 = vmatmul.mubr.bf16.gmra.mrb[0].mxu0 %v3034
    %v3069 = vpop.f32.mrb[0].mxu0
    %v3070 = vadd.f32 0.0, %v3069
    %v3071 = vpop.f32.mrb[0].mxu0
    %v3072 = vadd.f32 0.0, %v3071
    %v3073 = vpop.f32.mrb[0].mxu0
    %v3074 = vadd.f32 0.0, %v3073
    %v3075 = vpop.f32.mrb[0].mxu0
    %v3076 = vadd.f32 0.0, %v3075
    %3077 = vdwg.mxu0
    %3078 = vmatprep.subr.bf16.mxu0 %v2817
    %3079 = vmatpush1.bf16.msra.mxu0 %v2816
    %3080 = vmatprep.subr.bf16.mxu0 %v2821
    %3081 = vmatpush1.bf16.msra.mxu0 %v2820
    %3082 = vmatprep.subr.bf16.mxu0 %v2825
    %3083 = vmatpush1.bf16.msra.mxu0 %v2824
    %3084 = vmatprep.subr.bf16.mxu0 %v2829
    %3085 = vmatpush1.bf16.msra.mxu0 %v2828
    %3086 = vmatprep.subr.bf16.mxu0 %v2833
    %3087 = vmatpush1.bf16.msra.mxu0 %v2832
    %3088 = vmatprep.subr.bf16.mxu0 %v2837
    %3089 = vmatpush1.bf16.msra.mxu0 %v2836
    %3090 = vmatprep.subr.bf16.mxu0 %v2841
    %3091 = vmatpush1.bf16.msra.mxu0 %v2840
    %3092 = vmatprep.subr.bf16.mxu0 %v2845
    %3093 = vmatpush1.bf16.msra.mxu0 %v2844
    %3094 = vmatprep.subr.bf16.mxu0 0
    %3095 = vmatpush1.bf16.msra.mxu0 0
    %3096 = vmatprep.subr.bf16.mxu0 0
    %3097 = vmatpush1.bf16.msra.mxu0 0
    %3098 = vmatprep.subr.bf16.mxu0 0
    %3099 = vmatpush1.bf16.msra.mxu0 0
    %3100 = vmatprep.subr.bf16.mxu0 0
    %3101 = vmatpush1.bf16.msra.mxu0 0
    %3102 = vmatprep.subr.bf16.mxu0 0
    %3103 = vmatpush1.bf16.msra.mxu0 0
    %3104 = vmatprep.subr.bf16.mxu0 0
    %3105 = vmatpush1.bf16.msra.mxu0 0
    %3106 = vmatprep.subr.bf16.mxu0 0
    %3107 = vmatpush1.bf16.msra.mxu0 0
    %3108 = vmatprep.subr.bf16.mxu0 0
    %3109 = vmatpush1.bf16.msra.mxu0 0
    %3110 = vmatprep.mubr.bf16.mxu0 0
    %3111 = vmatmul.mubr.bf16.gmra.mrb[0].mxu0 %v3034
    %v3112 = vpop.f32.mrb[0].mxu0
    %v3113 = vadd.f32 0.0, %v3112
    %v3114 = vpop.f32.mrb[0].mxu0
    %v3115 = vadd.f32 0.0, %v3114
    %v3116 = vpop.f32.mrb[0].mxu0
    %v3117 = vadd.f32 0.0, %v3116
    %v3118 = vpop.f32.mrb[0].mxu0
    %v3119 = vadd.f32 0.0, %v3118
    %3120 = vdwg.mxu0
    %v3121 = vadd.f32 %v3026, %v3070
    %v3122 = vadd.f32 %v3027, %v3072
    %v3123 = vadd.f32 %v3028, %v3113
    %v3124 = vadd.f32 %v3029, %v3115
    %v3125 = vadd.f32 %v3030, %v3074
    %v3126 = vadd.f32 %v3031, %v3076
    %v3127 = vadd.f32 %v3032, %v3117
    %v3128 = vadd.f32 %v3033, %v3119
    %v3129 = vxor.u32 %v3121, 2147483648
    %v3130 = vxor.u32 %v3122, 2147483648
    %v3131 = vxor.u32 %v3123, 2147483648
    %v3132 = vxor.u32 %v3125, 2147483648
    %v3133 = vxor.u32 %v3126, 2147483648
    %v3134 = vxor.u32 %v3127, 2147483648
    %v3135 = vmul.f32 %v3129, 1.442695
    %v3136 = vpow.pop %v3135
    %v3137 = vmul.f32 %v3130, 1.442695
    %v3138 = vpow.pop %v3137
    %v3139 = vmul.f32 %v3131, 1.442695
    %v3140 = vpow.pop %v3139
    %v3141 = vmul.f32 %v3132, 1.442695
    %v3142 = vpow.pop %v3141
    %v3143 = vmul.f32 %v3133, 1.442695
    %v3144 = vpow.pop %v3143
    %v3145 = vmul.f32 %v3134, 1.442695
    %v3146 = vpow.pop %v3145
    %v3147 = vadd.f32 %v3136, 1.0
    %v3148 = vadd.f32 %v3138, 1.0
    %v3149 = vadd.f32 %v3140, 1.0
    %v3150 = vadd.f32 %v3142, 1.0
    %v3151 = vadd.f32 %v3144, 1.0
    %v3152 = vadd.f32 %v3146, 1.0
    %v3153 = vrcp.pop %v3147
    %v3154 = vmul.f32 1.0, %v3153
    %v3155 = vrcp.pop %v3148
    %v3156 = vmul.f32 1.0, %v3155
    %v3157 = vrcp.pop %v3149
    %v3158 = vmul.f32 1.0, %v3157
    %v3159 = vrcp.pop %v3150
    %v3160 = vmul.f32 1.0, %v3159
    %v3161 = vrcp.pop %v3151
    %v3162 = vmul.f32 1.0, %v3161
    %v3163 = vrcp.pop %v3152
    %v3164 = vmul.f32 1.0, %v3163
    %v3165 = vtanh.pop %v3124
    %v3166 = vtanh.pop %v3128
    %v3167 = vmul.f32 %v3156, %v3014
    %v3168 = vmul.f32 %v3162, %v3015
    %v3169 = vmul.f32 %v3154, %v3165
    %v3170 = vmul.f32 %v3160, %v3166
    %v3171 = vadd.f32 %v3167, %v3169
    %v3172 = vadd.f32 %v3168, %v3170
    %v3173 = vtanh.pop %v3171
    %v3174 = vtanh.pop %v3172
    %v3175 = vmul.f32 %v3158, %v3173
    %v3176 = vmul.f32 %v3164, %v3174
    %3177 = vst [vmem:[%s1170] sm:$0xff] %v3175
    %3178 = vst [vmem:[%s1170 + $0x8] sm:$0xff] %v3176
    %v3179 = vld [vmem:[%s1175] sm:$0xff]
    %v3180 = vld [vmem:[%s1175 + $0x8] sm:$0xff]
    %v3181 = vld [vmem:[%s1175 + $0x10] sm:$0xff]
    %v3182 = vld [vmem:[%s1175 + $0x18] sm:$0xff]
    %v3183 = vunpack.c.l.bf16 %v3179
    %v3184 = vunpack.c.l.bf16 %v3180
    %v3185 = vunpack.c.l.bf16 %v3181
    %v3186 = vunpack.c.l.bf16 %v3182
    %v3187 = vunpack.c.h.bf16 %v3179
    %v3188 = vunpack.c.h.bf16 %v3180
    %v3189 = vunpack.c.h.bf16 %v3181
    %v3190 = vunpack.c.h.bf16 %v3182
    %v3191 = vpack.c.bf16 %v3176, %v3175
    %3192 = vmatprep.subr.bf16.mxu0 %v2815
    %3193 = vmatpush1.bf16.msra.mxu0 %v2814
    %3194 = vmatprep.subr.bf16.mxu0 %v2819
    %3195 = vmatpush1.bf16.msra.mxu0 %v2818
    %3196 = vmatprep.subr.bf16.mxu0 %v2823
    %3197 = vmatpush1.bf16.msra.mxu0 %v2822
    %3198 = vmatprep.subr.bf16.mxu0 %v2827
    %3199 = vmatpush1.bf16.msra.mxu0 %v2826
    %3200 = vmatprep.subr.bf16.mxu0 %v2831
    %3201 = vmatpush1.bf16.msra.mxu0 %v2830
    %3202 = vmatprep.subr.bf16.mxu0 %v2835
    %3203 = vmatpush1.bf16.msra.mxu0 %v2834
    %3204 = vmatprep.subr.bf16.mxu0 %v2839
    %3205 = vmatpush1.bf16.msra.mxu0 %v2838
    %3206 = vmatprep.subr.bf16.mxu0 %v2843
    %3207 = vmatpush1.bf16.msra.mxu0 %v2842
    %3208 = vmatprep.subr.bf16.mxu0 0
    %3209 = vmatpush1.bf16.msra.mxu0 0
    %3210 = vmatprep.subr.bf16.mxu0 0
    %3211 = vmatpush1.bf16.msra.mxu0 0
    %3212 = vmatprep.subr.bf16.mxu0 0
    %3213 = vmatpush1.bf16.msra.mxu0 0
    %3214 = vmatprep.subr.bf16.mxu0 0
    %3215 = vmatpush1.bf16.msra.mxu0 0
    %3216 = vmatprep.subr.bf16.mxu0 0
    %3217 = vmatpush1.bf16.msra.mxu0 0
    %3218 = vmatprep.subr.bf16.mxu0 0
    %3219 = vmatpush1.bf16.msra.mxu0 0
    %3220 = vmatprep.subr.bf16.mxu0 0
    %3221 = vmatpush1.bf16.msra.mxu0 0
    %3222 = vmatprep.subr.bf16.mxu0 0
    %3223 = vmatpush1.bf16.msra.mxu0 0
    %3224 = vmatprep.mubr.bf16.mxu0 0
    %3225 = vmatmul.mubr.bf16.gmra.mrb[0].mxu0 %v3191
    %v3226 = vpop.f32.mrb[0].mxu0
    %v3227 = vadd.f32 0.0, %v3226
    %v3228 = vpop.f32.mrb[0].mxu0
    %v3229 = vadd.f32 0.0, %v3228
    %v3230 = vpop.f32.mrb[0].mxu0
    %v3231 = vadd.f32 0.0, %v3230
    %v3232 = vpop.f32.mrb[0].mxu0
    %v3233 = vadd.f32 0.0, %v3232
    %3234 = vdwg.mxu0
    %3235 = vmatprep.subr.bf16.mxu0 %v2817
    %3236 = vmatpush1.bf16.msra.mxu0 %v2816
    %3237 = vmatprep.subr.bf16.mxu0 %v2821
    %3238 = vmatpush1.bf16.msra.mxu0 %v2820
    %3239 = vmatprep.subr.bf16.mxu0 %v2825
    %3240 = vmatpush1.bf16.msra.mxu0 %v2824
    %3241 = vmatprep.subr.bf16.mxu0 %v2829
    %3242 = vmatpush1.bf16.msra.mxu0 %v2828
    %3243 = vmatprep.subr.bf16.mxu0 %v2833
    %3244 = vmatpush1.bf16.msra.mxu0 %v2832
    %3245 = vmatprep.subr.bf16.mxu0 %v2837
    %3246 = vmatpush1.bf16.msra.mxu0 %v2836
    %3247 = vmatprep.subr.bf16.mxu0 %v2841
    %3248 = vmatpush1.bf16.msra.mxu0 %v2840
    %3249 = vmatprep.subr.bf16.mxu0 %v2845
    %3250 = vmatpush1.bf16.msra.mxu0 %v2844
    %3251 = vmatprep.subr.bf16.mxu0 0
    %3252 = vmatpush1.bf16.msra.mxu0 0
    %3253 = vmatprep.subr.bf16.mxu0 0
    %3254 = vmatpush1.bf16.msra.mxu0 0
    %3255 = vmatprep.subr.bf16.mxu0 0
    %3256 = vmatpush1.bf16.msra.mxu0 0
    %3257 = vmatprep.subr.bf16.mxu0 0
    %3258 = vmatpush1.bf16.msra.mxu0 0
    %3259 = vmatprep.subr.bf16.mxu0 0
    %3260 = vmatpush1.bf16.msra.mxu0 0
    %3261 = vmatprep.subr.bf16.mxu0 0
    %3262 = vmatpush1.bf16.msra.mxu0 0
    %3263 = vmatprep.subr.bf16.mxu0 0
    %3264 = vmatpush1.bf16.msra.mxu0 0
    %3265 = vmatprep.subr.bf16.mxu0 0
    %3266 = vmatpush1.bf16.msra.mxu0 0
    %3267 = vmatprep.mubr.bf16.mxu0 0
    %3268 = vmatmul.mubr.bf16.gmra.mrb[0].mxu0 %v3191
    %v3269 = vpop.f32.mrb[0].mxu0
    %v3270 = vadd.f32 0.0, %v3269
    %v3271 = vpop.f32.mrb[0].mxu0
    %v3272 = vadd.f32 0.0, %v3271
    %v3273 = vpop.f32.mrb[0].mxu0
    %v3274 = vadd.f32 0.0, %v3273
    %v3275 = vpop.f32.mrb[0].mxu0
    %v3276 = vadd.f32 0.0, %v3275
    %3277 = vdwg.mxu0
    %v3278 = vadd.f32 %v3183, %v3227
    %v3279 = vadd.f32 %v3184, %v3229
    %v3280 = vadd.f32 %v3185, %v3270
    %v3281 = vadd.f32 %v3186, %v3272
    %v3282 = vadd.f32 %v3187, %v3231
    %v3283 = vadd.f32 %v3188, %v3233
    %v3284 = vadd.f32 %v3189, %v3274
    %v3285 = vadd.f32 %v3190, %v3276
    %v3286 = vxor.u32 %v3278, 2147483648
    %v3287 = vxor.u32 %v3279, 2147483648
    %v3288 = vxor.u32 %v3280, 2147483648
    %v3289 = vxor.u32 %v3282, 2147483648
    %v3290 = vxor.u32 %v3283, 2147483648
    %v3291 = vxor.u32 %v3284, 2147483648
    %v3292 = vmul.f32 %v3286, 1.442695
    %v3293 = vpow.pop %v3292
    %v3294 = vmul.f32 %v3287, 1.442695
    %v3295 = vpow.pop %v3294
    %v3296 = vmul.f32 %v3288, 1.442695
    %v3297 = vpow.pop %v3296
    %v3298 = vmul.f32 %v3289, 1.442695
    %v3299 = vpow.pop %v3298
    %v3300 = vmul.f32 %v3290, 1.442695
    %v3301 = vpow.pop %v3300
    %v3302 = vmul.f32 %v3291, 1.442695
    %v3303 = vpow.pop %v3302
    %v3304 = vadd.f32 %v3293, 1.0
    %v3305 = vadd.f32 %v3295, 1.0
    %v3306 = vadd.f32 %v3297, 1.0
    %v3307 = vadd.f32 %v3299, 1.0
    %v3308 = vadd.f32 %v3301, 1.0
    %v3309 = vadd.f32 %v3303, 1.0
    %v3310 = vrcp.pop %v3304
    %v3311 = vmul.f32 1.0, %v3310
    %v3312 = vrcp.pop %v3305
    %v3313 = vmul.f32 1.0, %v3312
    %v3314 = vrcp.pop %v3306
    %v3315 = vmul.f32 1.0, %v3314
    %v3316 = vrcp.pop %v3307
    %v3317 = vmul.f32 1.0, %v3316
    %v3318 = vrcp.pop %v3308
    %v3319 = vmul.f32 1.0, %v3318
    %v3320 = vrcp.pop %v3309
    %v3321 = vmul.f32 1.0, %v3320
    %v3322 = vtanh.pop %v3281
    %v3323 = vtanh.pop %v3285
    %v3324 = vmul.f32 %v3313, %v3171
    %v3325 = vmul.f32 %v3319, %v3172
    %v3326 = vmul.f32 %v3311, %v3322
    %v3327 = vmul.f32 %v3317, %v3323
    %v3328 = vadd.f32 %v3324, %v3326
    %v3329 = vadd.f32 %v3325, %v3327
    %v3330 = vtanh.pop %v3328
    %v3331 = vtanh.pop %v3329
    %v3332 = vmul.f32 %v3315, %v3330
    %v3333 = vmul.f32 %v3321, %v3331
    %3334 = vst [vmem:[%s1331] sm:$0xff] %v3332
    %3335 = vst [vmem:[%s1331 + $0x8] sm:$0xff] %v3333
    %v3336 = vld [vmem:[%s1336] sm:$0xff]
    %v3337 = vld [vmem:[%s1336 + $0x8] sm:$0xff]
    %v3338 = vld [vmem:[%s1336 + $0x10] sm:$0xff]
    %v3339 = vld [vmem:[%s1336 + $0x18] sm:$0xff]
    %v3340 = vunpack.c.l.bf16 %v3336
    %v3341 = vunpack.c.l.bf16 %v3337
    %v3342 = vunpack.c.l.bf16 %v3338
    %v3343 = vunpack.c.l.bf16 %v3339
    %v3344 = vunpack.c.h.bf16 %v3336
    %v3345 = vunpack.c.h.bf16 %v3337
    %v3346 = vunpack.c.h.bf16 %v3338
    %v3347 = vunpack.c.h.bf16 %v3339
    %v3348 = vpack.c.bf16 %v3333, %v3332
    %3349 = vmatprep.subr.bf16.mxu0 %v2815
    %3350 = vmatpush1.bf16.msra.mxu0 %v2814
    %3351 = vmatprep.subr.bf16.mxu0 %v2819
    %3352 = vmatpush1.bf16.msra.mxu0 %v2818
    %3353 = vmatprep.subr.bf16.mxu0 %v2823
    %3354 = vmatpush1.bf16.msra.mxu0 %v2822
    %3355 = vmatprep.subr.bf16.mxu0 %v2827
    %3356 = vmatpush1.bf16.msra.mxu0 %v2826
    %3357 = vmatprep.subr.bf16.mxu0 %v2831
    %3358 = vmatpush1.bf16.msra.mxu0 %v2830
    %3359 = vmatprep.subr.bf16.mxu0 %v2835
    %3360 = vmatpush1.bf16.msra.mxu0 %v2834
    %3361 = vmatprep.subr.bf16.mxu0 %v2839
    %3362 = vmatpush1.bf16.msra.mxu0 %v2838
    %3363 = vmatprep.subr.bf16.mxu0 %v2843
    %3364 = vmatpush1.bf16.msra.mxu0 %v2842
    %3365 = vmatprep.subr.bf16.mxu0 0
    %3366 = vmatpush1.bf16.msra.mxu0 0
    %3367 = vmatprep.subr.bf16.mxu0 0
    %3368 = vmatpush1.bf16.msra.mxu0 0
    %3369 = vmatprep.subr.bf16.mxu0 0
    %3370 = vmatpush1.bf16.msra.mxu0 0
    %3371 = vmatprep.subr.bf16.mxu0 0
    %3372 = vmatpush1.bf16.msra.mxu0 0
    %3373 = vmatprep.subr.bf16.mxu0 0
    %3374 = vmatpush1.bf16.msra.mxu0 0
    %3375 = vmatprep.subr.bf16.mxu0 0
    %3376 = vmatpush1.bf16.msra.mxu0 0
    %3377 = vmatprep.subr.bf16.mxu0 0
    %3378 = vmatpush1.bf16.msra.mxu0 0
    %3379 = vmatprep.subr.bf16.mxu0 0
    %3380 = vmatpush1.bf16.msra.mxu0 0
    %3381 = vmatprep.mubr.bf16.mxu0 0
    %3382 = vmatmul.mubr.bf16.gmra.mrb[0].mxu0 %v3348
    %v3383 = vpop.f32.mrb[0].mxu0
    %v3384 = vadd.f32 0.0, %v3383
    %v3385 = vpop.f32.mrb[0].mxu0
    %v3386 = vadd.f32 0.0, %v3385
    %v3387 = vpop.f32.mrb[0].mxu0
    %v3388 = vadd.f32 0.0, %v3387
    %v3389 = vpop.f32.mrb[0].mxu0
    %v3390 = vadd.f32 0.0, %v3389
    %3391 = vdwg.mxu0
    %3392 = vmatprep.subr.bf16.mxu0 %v2817
    %3393 = vmatpush1.bf16.msra.mxu0 %v2816
    %3394 = vmatprep.subr.bf16.mxu0 %v2821
    %3395 = vmatpush1.bf16.msra.mxu0 %v2820
    %3396 = vmatprep.subr.bf16.mxu0 %v2825
    %3397 = vmatpush1.bf16.msra.mxu0 %v2824
    %3398 = vmatprep.subr.bf16.mxu0 %v2829
    %3399 = vmatpush1.bf16.msra.mxu0 %v2828
    %3400 = vmatprep.subr.bf16.mxu0 %v2833
    %3401 = vmatpush1.bf16.msra.mxu0 %v2832
    %3402 = vmatprep.subr.bf16.mxu0 %v2837
    %3403 = vmatpush1.bf16.msra.mxu0 %v2836
    %3404 = vmatprep.subr.bf16.mxu0 %v2841
    %3405 = vmatpush1.bf16.msra.mxu0 %v2840
    %3406 = vmatprep.subr.bf16.mxu0 %v2845
    %3407 = vmatpush1.bf16.msra.mxu0 %v2844
    %3408 = vmatprep.subr.bf16.mxu0 0
    %3409 = vmatpush1.bf16.msra.mxu0 0
    %3410 = vmatprep.subr.bf16.mxu0 0
    %3411 = vmatpush1.bf16.msra.mxu0 0
    %3412 = vmatprep.subr.bf16.mxu0 0
    %3413 = vmatpush1.bf16.msra.mxu0 0
    %3414 = vmatprep.subr.bf16.mxu0 0
    %3415 = vmatpush1.bf16.msra.mxu0 0
    %3416 = vmatprep.subr.bf16.mxu0 0
    %3417 = vmatpush1.bf16.msra.mxu0 0
    %3418 = vmatprep.subr.bf16.mxu0 0
    %3419 = vmatpush1.bf16.msra.mxu0 0
    %3420 = vmatprep.subr.bf16.mxu0 0
    %3421 = vmatpush1.bf16.msra.mxu0 0
    %3422 = vmatprep.subr.bf16.mxu0 0
    %3423 = vmatpush1.bf16.msra.mxu0 0
    %3424 = vmatprep.mubr.bf16.mxu0 0
    %3425 = vmatmul.mubr.bf16.gmra.mrb[0].mxu0 %v3348
    %v3426 = vpop.f32.mrb[0].mxu0
    %v3427 = vadd.f32 0.0, %v3426
    %v3428 = vpop.f32.mrb[0].mxu0
    %v3429 = vadd.f32 0.0, %v3428
    %v3430 = vpop.f32.mrb[0].mxu0
    %v3431 = vadd.f32 0.0, %v3430
    %v3432 = vpop.f32.mrb[0].mxu0
    %v3433 = vadd.f32 0.0, %v3432
    %3434 = vdwg.mxu0
    %v3435 = vadd.f32 %v3340, %v3384
    %v3436 = vadd.f32 %v3341, %v3386
    %v3437 = vadd.f32 %v3342, %v3427
    %v3438 = vadd.f32 %v3343, %v3429
    %v3439 = vadd.f32 %v3344, %v3388
    %v3440 = vadd.f32 %v3345, %v3390
    %v3441 = vadd.f32 %v3346, %v3431
    %v3442 = vadd.f32 %v3347, %v3433
    %v3443 = vxor.u32 %v3435, 2147483648
    %v3444 = vxor.u32 %v3436, 2147483648
    %v3445 = vxor.u32 %v3437, 2147483648
    %v3446 = vxor.u32 %v3439, 2147483648
    %v3447 = vxor.u32 %v3440, 2147483648
    %v3448 = vxor.u32 %v3441, 2147483648
    %v3449 = vmul.f32 %v3443, 1.442695
    %v3450 = vpow.pop %v3449
    %v3451 = vmul.f32 %v3444, 1.442695
    %v3452 = vpow.pop %v3451
    %v3453 = vmul.f32 %v3445, 1.442695
    %v3454 = vpow.pop %v3453
    %v3455 = vmul.f32 %v3446, 1.442695
    %v3456 = vpow.pop %v3455
    %v3457 = vmul.f32 %v3447, 1.442695
    %v3458 = vpow.pop %v3457
    %v3459 = vmul.f32 %v3448, 1.442695
    %v3460 = vpow.pop %v3459
    %v3461 = vadd.f32 %v3450, 1.0
    %v3462 = vadd.f32 %v3452, 1.0
    %v3463 = vadd.f32 %v3454, 1.0
    %v3464 = vadd.f32 %v3456, 1.0
    %v3465 = vadd.f32 %v3458, 1.0
    %v3466 = vadd.f32 %v3460, 1.0
    %v3467 = vrcp.pop %v3461
    %v3468 = vmul.f32 1.0, %v3467
    %v3469 = vrcp.pop %v3462
    %v3470 = vmul.f32 1.0, %v3469
    %v3471 = vrcp.pop %v3463
    %v3472 = vmul.f32 1.0, %v3471
    %v3473 = vrcp.pop %v3464
    %v3474 = vmul.f32 1.0, %v3473
    %v3475 = vrcp.pop %v3465
    %v3476 = vmul.f32 1.0, %v3475
    %v3477 = vrcp.pop %v3466
    %v3478 = vmul.f32 1.0, %v3477
    %v3479 = vtanh.pop %v3438
    %v3480 = vtanh.pop %v3442
    %v3481 = vmul.f32 %v3470, %v3328
    %v3482 = vmul.f32 %v3476, %v3329
    %v3483 = vmul.f32 %v3468, %v3479
    %v3484 = vmul.f32 %v3474, %v3480
    %v3485 = vadd.f32 %v3481, %v3483
    %v3486 = vadd.f32 %v3482, %v3484
    %v3487 = vtanh.pop %v3485
    %v3488 = vtanh.pop %v3486
    %v3489 = vmul.f32 %v3472, %v3487
    %v3490 = vmul.f32 %v3478, %v3488
    %3491 = vst [vmem:[%s1492] sm:$0xff] %v3489
    %3492 = vst [vmem:[%s1492 + $0x8] sm:$0xff] %v3490
    %v3493 = vld [vmem:[%s1497] sm:$0xff]
    %v3494 = vld [vmem:[%s1497 + $0x8] sm:$0xff]
    %v3495 = vld [vmem:[%s1497 + $0x10] sm:$0xff]
    %v3496 = vld [vmem:[%s1497 + $0x18] sm:$0xff]
    %v3497 = vunpack.c.l.bf16 %v3493
    %v3498 = vunpack.c.l.bf16 %v3494
    %v3499 = vunpack.c.l.bf16 %v3495
    %v3500 = vunpack.c.l.bf16 %v3496
    %v3501 = vunpack.c.h.bf16 %v3493
    %v3502 = vunpack.c.h.bf16 %v3494
    %v3503 = vunpack.c.h.bf16 %v3495
    %v3504 = vunpack.c.h.bf16 %v3496
    %v3505 = vpack.c.bf16 %v3490, %v3489
    %3506 = vmatprep.subr.bf16.mxu0 %v2815
    %3507 = vmatpush1.bf16.msra.mxu0 %v2814
    %3508 = vmatprep.subr.bf16.mxu0 %v2819
    %3509 = vmatpush1.bf16.msra.mxu0 %v2818
    %3510 = vmatprep.subr.bf16.mxu0 %v2823
    %3511 = vmatpush1.bf16.msra.mxu0 %v2822
    %3512 = vmatprep.subr.bf16.mxu0 %v2827
    %3513 = vmatpush1.bf16.msra.mxu0 %v2826
    %3514 = vmatprep.subr.bf16.mxu0 %v2831
    %3515 = vmatpush1.bf16.msra.mxu0 %v2830
    %3516 = vmatprep.subr.bf16.mxu0 %v2835
    %3517 = vmatpush1.bf16.msra.mxu0 %v2834
    %3518 = vmatprep.subr.bf16.mxu0 %v2839
    %3519 = vmatpush1.bf16.msra.mxu0 %v2838
    %3520 = vmatprep.subr.bf16.mxu0 %v2843
    %3521 = vmatpush1.bf16.msra.mxu0 %v2842
    %3522 = vmatprep.subr.bf16.mxu0 0
    %3523 = vmatpush1.bf16.msra.mxu0 0
    %3524 = vmatprep.subr.bf16.mxu0 0
    %3525 = vmatpush1.bf16.msra.mxu0 0
    %3526 = vmatprep.subr.bf16.mxu0 0
    %3527 = vmatpush1.bf16.msra.mxu0 0
    %3528 = vmatprep.subr.bf16.mxu0 0
    %3529 = vmatpush1.bf16.msra.mxu0 0
    %3530 = vmatprep.subr.bf16.mxu0 0
    %3531 = vmatpush1.bf16.msra.mxu0 0
    %3532 = vmatprep.subr.bf16.mxu0 0
    %3533 = vmatpush1.bf16.msra.mxu0 0
    %3534 = vmatprep.subr.bf16.mxu0 0
    %3535 = vmatpush1.bf16.msra.mxu0 0
    %3536 = vmatprep.subr.bf16.mxu0 0
    %3537 = vmatpush1.bf16.msra.mxu0 0
    %3538 = vmatprep.mubr.bf16.mxu0 0
    %3539 = vmatmul.mubr.bf16.gmra.mrb[0].mxu0 %v3505
    %v3540 = vpop.f32.mrb[0].mxu0
    %v3541 = vadd.f32 0.0, %v3540
    %v3542 = vpop.f32.mrb[0].mxu0
    %v3543 = vadd.f32 0.0, %v3542
    %v3544 = vpop.f32.mrb[0].mxu0
    %v3545 = vadd.f32 0.0, %v3544
    %v3546 = vpop.f32.mrb[0].mxu0
    %v3547 = vadd.f32 0.0, %v3546
    %3548 = vdwg.mxu0
    %3549 = vmatprep.subr.bf16.mxu0 %v2817
    %3550 = vmatpush1.bf16.msra.mxu0 %v2816
    %3551 = vmatprep.subr.bf16.mxu0 %v2821
    %3552 = vmatpush1.bf16.msra.mxu0 %v2820
    %3553 = vmatprep.subr.bf16.mxu0 %v2825
    %3554 = vmatpush1.bf16.msra.mxu0 %v2824
    %3555 = vmatprep.subr.bf16.mxu0 %v2829
    %3556 = vmatpush1.bf16.msra.mxu0 %v2828
    %3557 = vmatprep.subr.bf16.mxu0 %v2833
    %3558 = vmatpush1.bf16.msra.mxu0 %v2832
    %3559 = vmatprep.subr.bf16.mxu0 %v2837
    %3560 = vmatpush1.bf16.msra.mxu0 %v2836
    %3561 = vmatprep.subr.bf16.mxu0 %v2841
    %3562 = vmatpush1.bf16.msra.mxu0 %v2840
    %3563 = vmatprep.subr.bf16.mxu0 %v2845
    %3564 = vmatpush1.bf16.msra.mxu0 %v2844
    %3565 = vmatprep.subr.bf16.mxu0 0
    %3566 = vmatpush1.bf16.msra.mxu0 0
    %3567 = vmatprep.subr.bf16.mxu0 0
    %3568 = vmatpush1.bf16.msra.mxu0 0
    %3569 = vmatprep.subr.bf16.mxu0 0
    %3570 = vmatpush1.bf16.msra.mxu0 0
    %3571 = vmatprep.subr.bf16.mxu0 0
    %3572 = vmatpush1.bf16.msra.mxu0 0
    %3573 = vmatprep.subr.bf16.mxu0 0
    %3574 = vmatpush1.bf16.msra.mxu0 0
    %3575 = vmatprep.subr.bf16.mxu0 0
    %3576 = vmatpush1.bf16.msra.mxu0 0
    %3577 = vmatprep.subr.bf16.mxu0 0
    %3578 = vmatpush1.bf16.msra.mxu0 0
    %3579 = vmatprep.subr.bf16.mxu0 0
    %3580 = vmatpush1.bf16.msra.mxu0 0
    %3581 = vmatprep.mubr.bf16.mxu0 0
    %3582 = vmatmul.mubr.bf16.gmra.mrb[0].mxu0 %v3505
    %v3583 = vpop.f32.mrb[0].mxu0
    %v3584 = vadd.f32 0.0, %v3583
    %v3585 = vpop.f32.mrb[0].mxu0
    %v3586 = vadd.f32 0.0, %v3585
    %v3587 = vpop.f32.mrb[0].mxu0
    %v3588 = vadd.f32 0.0, %v3587
    %v3589 = vpop.f32.mrb[0].mxu0
    %v3590 = vadd.f32 0.0, %v3589
    %3591 = vdwg.mxu0
    %v3592 = vadd.f32 %v3497, %v3541
    %v3593 = vadd.f32 %v3498, %v3543
    %v3594 = vadd.f32 %v3499, %v3584
    %v3595 = vadd.f32 %v3500, %v3586
    %v3596 = vadd.f32 %v3501, %v3545
    %v3597 = vadd.f32 %v3502, %v3547
    %v3598 = vadd.f32 %v3503, %v3588
    %v3599 = vadd.f32 %v3504, %v3590
    %v3600 = vxor.u32 %v3592, 2147483648
    %v3601 = vxor.u32 %v3593, 2147483648
    %v3602 = vxor.u32 %v3594, 2147483648
    %v3603 = vxor.u32 %v3596, 2147483648
    %v3604 = vxor.u32 %v3597, 2147483648
    %v3605 = vxor.u32 %v3598, 2147483648
    %v3606 = vmul.f32 %v3600, 1.442695
    %v3607 = vpow.pop %v3606
    %v3608 = vmul.f32 %v3601, 1.442695
    %v3609 = vpow.pop %v3608
    %v3610 = vmul.f32 %v3602, 1.442695
    %v3611 = vpow.pop %v3610
    %v3612 = vmul.f32 %v3603, 1.442695
    %v3613 = vpow.pop %v3612
    %v3614 = vmul.f32 %v3604, 1.442695
    %v3615 = vpow.pop %v3614
    %v3616 = vmul.f32 %v3605, 1.442695
    %v3617 = vpow.pop %v3616
    %v3618 = vadd.f32 %v3607, 1.0
    %v3619 = vadd.f32 %v3609, 1.0
    %v3620 = vadd.f32 %v3611, 1.0
    %v3621 = vadd.f32 %v3613, 1.0
    %v3622 = vadd.f32 %v3615, 1.0
    %v3623 = vadd.f32 %v3617, 1.0
    %v3624 = vrcp.pop %v3618
    %v3625 = vmul.f32 1.0, %v3624
    %v3626 = vrcp.pop %v3619
    %v3627 = vmul.f32 1.0, %v3626
    %v3628 = vrcp.pop %v3620
    %v3629 = vmul.f32 1.0, %v3628
    %v3630 = vrcp.pop %v3621
    %v3631 = vmul.f32 1.0, %v3630
    %v3632 = vrcp.pop %v3622
    %v3633 = vmul.f32 1.0, %v3632
    %v3634 = vrcp.pop %v3623
    %v3635 = vmul.f32 1.0, %v3634
    %v3636 = vtanh.pop %v3595
    %v3637 = vtanh.pop %v3599
    %v3638 = vmul.f32 %v3627, %v3485
    %v3639 = vmul.f32 %v3633, %v3486
    %v3640 = vmul.f32 %v3625, %v3636
    %v3641 = vmul.f32 %v3631, %v3637
    %v3642 = vadd.f32 %v3638, %v3640
    %v3643 = vadd.f32 %v3639, %v3641
    %v3644 = vtanh.pop %v3642
    %v3645 = vtanh.pop %v3643
    %v3646 = vmul.f32 %v3629, %v3644
    %v3647 = vmul.f32 %v3635, %v3645
    %3648 = vst [vmem:[%s1653] sm:$0xff] %v3646
    %3649 = vst [vmem:[%s1653 + $0x8] sm:$0xff] %v3647
    %v3650 = vld [vmem:[%s1658] sm:$0xff]
    %v3651 = vld [vmem:[%s1658 + $0x8] sm:$0xff]
    %v3652 = vld [vmem:[%s1658 + $0x10] sm:$0xff]
    %v3653 = vld [vmem:[%s1658 + $0x18] sm:$0xff]
    %v3654 = vunpack.c.l.bf16 %v3650
    %v3655 = vunpack.c.l.bf16 %v3651
    %v3656 = vunpack.c.l.bf16 %v3652
    %v3657 = vunpack.c.l.bf16 %v3653
    %v3658 = vunpack.c.h.bf16 %v3650
    %v3659 = vunpack.c.h.bf16 %v3651
    %v3660 = vunpack.c.h.bf16 %v3652
    %v3661 = vunpack.c.h.bf16 %v3653
    %v3662 = vpack.c.bf16 %v3647, %v3646
    %3663 = vmatprep.subr.bf16.mxu0 %v2815
    %3664 = vmatpush1.bf16.msra.mxu0 %v2814
    %3665 = vmatprep.subr.bf16.mxu0 %v2819
    %3666 = vmatpush1.bf16.msra.mxu0 %v2818
    %3667 = vmatprep.subr.bf16.mxu0 %v2823
    %3668 = vmatpush1.bf16.msra.mxu0 %v2822
    %3669 = vmatprep.subr.bf16.mxu0 %v2827
    %3670 = vmatpush1.bf16.msra.mxu0 %v2826
    %3671 = vmatprep.subr.bf16.mxu0 %v2831
    %3672 = vmatpush1.bf16.msra.mxu0 %v2830
    %3673 = vmatprep.subr.bf16.mxu0 %v2835
    %3674 = vmatpush1.bf16.msra.mxu0 %v2834
    %3675 = vmatprep.subr.bf16.mxu0 %v2839
    %3676 = vmatpush1.bf16.msra.mxu0 %v2838
    %3677 = vmatprep.subr.bf16.mxu0 %v2843
    %3678 = vmatpush1.bf16.msra.mxu0 %v2842
    %3679 = vmatprep.subr.bf16.mxu0 0
    %3680 = vmatpush1.bf16.msra.mxu0 0
    %3681 = vmatprep.subr.bf16.mxu0 0
    %3682 = vmatpush1.bf16.msra.mxu0 0
    %3683 = vmatprep.subr.bf16.mxu0 0
    %3684 = vmatpush1.bf16.msra.mxu0 0
    %3685 = vmatprep.subr.bf16.mxu0 0
    %3686 = vmatpush1.bf16.msra.mxu0 0
    %3687 = vmatprep.subr.bf16.mxu0 0
    %3688 = vmatpush1.bf16.msra.mxu0 0
    %3689 = vmatprep.subr.bf16.mxu0 0
    %3690 = vmatpush1.bf16.msra.mxu0 0
    %3691 = vmatprep.subr.bf16.mxu0 0
    %3692 = vmatpush1.bf16.msra.mxu0 0
    %3693 = vmatprep.subr.bf16.mxu0 0
    %3694 = vmatpush1.bf16.msra.mxu0 0
    %3695 = vmatprep.mubr.bf16.mxu0 0
    %3696 = vmatmul.mubr.bf16.gmra.mrb[0].mxu0 %v3662
    %v3697 = vpop.f32.mrb[0].mxu0
    %v3698 = vadd.f32 0.0, %v3697
    %v3699 = vpop.f32.mrb[0].mxu0
    %v3700 = vadd.f32 0.0, %v3699
    %v3701 = vpop.f32.mrb[0].mxu0
    %v3702 = vadd.f32 0.0, %v3701
    %v3703 = vpop.f32.mrb[0].mxu0
    %v3704 = vadd.f32 0.0, %v3703
    %3705 = vdwg.mxu0
    %3706 = vmatprep.subr.bf16.mxu0 %v2817
    %3707 = vmatpush1.bf16.msra.mxu0 %v2816
    %3708 = vmatprep.subr.bf16.mxu0 %v2821
    %3709 = vmatpush1.bf16.msra.mxu0 %v2820
    %3710 = vmatprep.subr.bf16.mxu0 %v2825
    %3711 = vmatpush1.bf16.msra.mxu0 %v2824
    %3712 = vmatprep.subr.bf16.mxu0 %v2829
    %3713 = vmatpush1.bf16.msra.mxu0 %v2828
    %3714 = vmatprep.subr.bf16.mxu0 %v2833
    %3715 = vmatpush1.bf16.msra.mxu0 %v2832
    %3716 = vmatprep.subr.bf16.mxu0 %v2837
    %3717 = vmatpush1.bf16.msra.mxu0 %v2836
    %3718 = vmatprep.subr.bf16.mxu0 %v2841
    %3719 = vmatpush1.bf16.msra.mxu0 %v2840
    %3720 = vmatprep.subr.bf16.mxu0 %v2845
    %3721 = vmatpush1.bf16.msra.mxu0 %v2844
    %3722 = vmatprep.subr.bf16.mxu0 0
    %3723 = vmatpush1.bf16.msra.mxu0 0
    %3724 = vmatprep.subr.bf16.mxu0 0
    %3725 = vmatpush1.bf16.msra.mxu0 0
    %3726 = vmatprep.subr.bf16.mxu0 0
    %3727 = vmatpush1.bf16.msra.mxu0 0
    %3728 = vmatprep.subr.bf16.mxu0 0
    %3729 = vmatpush1.bf16.msra.mxu0 0
    %3730 = vmatprep.subr.bf16.mxu0 0
    %3731 = vmatpush1.bf16.msra.mxu0 0
    %3732 = vmatprep.subr.bf16.mxu0 0
    %3733 = vmatpush1.bf16.msra.mxu0 0
    %3734 = vmatprep.subr.bf16.mxu0 0
    %3735 = vmatpush1.bf16.msra.mxu0 0
    %3736 = vmatprep.subr.bf16.mxu0 0
    %3737 = vmatpush1.bf16.msra.mxu0 0
    %3738 = vmatprep.mubr.bf16.mxu0 0
    %3739 = vmatmul.mubr.bf16.gmra.mrb[0].mxu0 %v3662
    %v3740 = vpop.f32.mrb[0].mxu0
    %v3741 = vadd.f32 0.0, %v3740
    %v3742 = vpop.f32.mrb[0].mxu0
    %v3743 = vadd.f32 0.0, %v3742
    %v3744 = vpop.f32.mrb[0].mxu0
    %v3745 = vadd.f32 0.0, %v3744
    %v3746 = vpop.f32.mrb[0].mxu0
    %v3747 = vadd.f32 0.0, %v3746
    %3748 = vdwg.mxu0
    %v3749 = vadd.f32 %v3654, %v3698
    %v3750 = vadd.f32 %v3655, %v3700
    %v3751 = vadd.f32 %v3656, %v3741
    %v3752 = vadd.f32 %v3657, %v3743
    %v3753 = vadd.f32 %v3658, %v3702
    %v3754 = vadd.f32 %v3659, %v3704
    %v3755 = vadd.f32 %v3660, %v3745
    %v3756 = vadd.f32 %v3661, %v3747
    %v3757 = vxor.u32 %v3749, 2147483648
    %v3758 = vxor.u32 %v3750, 2147483648
    %v3759 = vxor.u32 %v3751, 2147483648
    %v3760 = vxor.u32 %v3753, 2147483648
    %v3761 = vxor.u32 %v3754, 2147483648
    %v3762 = vxor.u32 %v3755, 2147483648
    %v3763 = vmul.f32 %v3757, 1.442695
    %v3764 = vpow.pop %v3763
    %v3765 = vmul.f32 %v3758, 1.442695
    %v3766 = vpow.pop %v3765
    %v3767 = vmul.f32 %v3759, 1.442695
    %v3768 = vpow.pop %v3767
    %v3769 = vmul.f32 %v3760, 1.442695
    %v3770 = vpow.pop %v3769
    %v3771 = vmul.f32 %v3761, 1.442695
    %v3772 = vpow.pop %v3771
    %v3773 = vmul.f32 %v3762, 1.442695
    %v3774 = vpow.pop %v3773
    %v3775 = vadd.f32 %v3764, 1.0
    %v3776 = vadd.f32 %v3766, 1.0
    %v3777 = vadd.f32 %v3768, 1.0
    %v3778 = vadd.f32 %v3770, 1.0
    %v3779 = vadd.f32 %v3772, 1.0
    %v3780 = vadd.f32 %v3774, 1.0
    %v3781 = vrcp.pop %v3775
    %v3782 = vmul.f32 1.0, %v3781
    %v3783 = vrcp.pop %v3776
    %v3784 = vmul.f32 1.0, %v3783
    %v3785 = vrcp.pop %v3777
    %v3786 = vmul.f32 1.0, %v3785
    %v3787 = vrcp.pop %v3778
    %v3788 = vmul.f32 1.0, %v3787
    %v3789 = vrcp.pop %v3779
    %v3790 = vmul.f32 1.0, %v3789
    %v3791 = vrcp.pop %v3780
    %v3792 = vmul.f32 1.0, %v3791
    %v3793 = vtanh.pop %v3752
    %v3794 = vtanh.pop %v3756
    %v3795 = vmul.f32 %v3784, %v3642
    %v3796 = vmul.f32 %v3790, %v3643
    %v3797 = vmul.f32 %v3782, %v3793
    %v3798 = vmul.f32 %v3788, %v3794
    %v3799 = vadd.f32 %v3795, %v3797
    %v3800 = vadd.f32 %v3796, %v3798
    %v3801 = vtanh.pop %v3799
    %v3802 = vtanh.pop %v3800
    %v3803 = vmul.f32 %v3786, %v3801
    %v3804 = vmul.f32 %v3792, %v3802
    %3805 = vst [vmem:[%s1814] sm:$0xff] %v3803
    %3806 = vst [vmem:[%s1814 + $0x8] sm:$0xff] %v3804
    %v3807 = vld [vmem:[%s1819] sm:$0xff]
    %v3808 = vld [vmem:[%s1819 + $0x8] sm:$0xff]
    %v3809 = vld [vmem:[%s1819 + $0x10] sm:$0xff]
    %v3810 = vld [vmem:[%s1819 + $0x18] sm:$0xff]
    %v3811 = vunpack.c.l.bf16 %v3807
    %v3812 = vunpack.c.l.bf16 %v3808
    %v3813 = vunpack.c.l.bf16 %v3809
    %v3814 = vunpack.c.l.bf16 %v3810
    %v3815 = vunpack.c.h.bf16 %v3807
    %v3816 = vunpack.c.h.bf16 %v3808
    %v3817 = vunpack.c.h.bf16 %v3809
    %v3818 = vunpack.c.h.bf16 %v3810
    %v3819 = vpack.c.bf16 %v3804, %v3803
    %3820 = vmatprep.subr.bf16.mxu0 %v2815
    %3821 = vmatpush1.bf16.msra.mxu0 %v2814
    %3822 = vmatprep.subr.bf16.mxu0 %v2819
    %3823 = vmatpush1.bf16.msra.mxu0 %v2818
    %3824 = vmatprep.subr.bf16.mxu0 %v2823
    %3825 = vmatpush1.bf16.msra.mxu0 %v2822
    %3826 = vmatprep.subr.bf16.mxu0 %v2827
    %3827 = vmatpush1.bf16.msra.mxu0 %v2826
    %3828 = vmatprep.subr.bf16.mxu0 %v2831
    %3829 = vmatpush1.bf16.msra.mxu0 %v2830
    %3830 = vmatprep.subr.bf16.mxu0 %v2835
    %3831 = vmatpush1.bf16.msra.mxu0 %v2834
    %3832 = vmatprep.subr.bf16.mxu0 %v2839
    %3833 = vmatpush1.bf16.msra.mxu0 %v2838
    %3834 = vmatprep.subr.bf16.mxu0 %v2843
    %3835 = vmatpush1.bf16.msra.mxu0 %v2842
    %3836 = vmatprep.subr.bf16.mxu0 0
    %3837 = vmatpush1.bf16.msra.mxu0 0
    %3838 = vmatprep.subr.bf16.mxu0 0
    %3839 = vmatpush1.bf16.msra.mxu0 0
    %3840 = vmatprep.subr.bf16.mxu0 0
    %3841 = vmatpush1.bf16.msra.mxu0 0
    %3842 = vmatprep.subr.bf16.mxu0 0
    %3843 = vmatpush1.bf16.msra.mxu0 0
    %3844 = vmatprep.subr.bf16.mxu0 0
    %3845 = vmatpush1.bf16.msra.mxu0 0
    %3846 = vmatprep.subr.bf16.mxu0 0
    %3847 = vmatpush1.bf16.msra.mxu0 0
    %3848 = vmatprep.subr.bf16.mxu0 0
    %3849 = vmatpush1.bf16.msra.mxu0 0
    %3850 = vmatprep.subr.bf16.mxu0 0
    %3851 = vmatpush1.bf16.msra.mxu0 0
    %3852 = vmatprep.mubr.bf16.mxu0 0
    %3853 = vmatmul.mubr.bf16.gmra.mrb[0].mxu0 %v3819
    %v3854 = vpop.f32.mrb[0].mxu0
    %v3855 = vadd.f32 0.0, %v3854
    %v3856 = vpop.f32.mrb[0].mxu0
    %v3857 = vadd.f32 0.0, %v3856
    %v3858 = vpop.f32.mrb[0].mxu0
    %v3859 = vadd.f32 0.0, %v3858
    %v3860 = vpop.f32.mrb[0].mxu0
    %v3861 = vadd.f32 0.0, %v3860
    %3862 = vdwg.mxu0
    %3863 = vmatprep.subr.bf16.mxu0 %v2817
    %3864 = vmatpush1.bf16.msra.mxu0 %v2816
    %3865 = vmatprep.subr.bf16.mxu0 %v2821
    %3866 = vmatpush1.bf16.msra.mxu0 %v2820
    %3867 = vmatprep.subr.bf16.mxu0 %v2825
    %3868 = vmatpush1.bf16.msra.mxu0 %v2824
    %3869 = vmatprep.subr.bf16.mxu0 %v2829
    %3870 = vmatpush1.bf16.msra.mxu0 %v2828
    %3871 = vmatprep.subr.bf16.mxu0 %v2833
    %3872 = vmatpush1.bf16.msra.mxu0 %v2832
    %3873 = vmatprep.subr.bf16.mxu0 %v2837
    %3874 = vmatpush1.bf16.msra.mxu0 %v2836
    %3875 = vmatprep.subr.bf16.mxu0 %v2841
    %3876 = vmatpush1.bf16.msra.mxu0 %v2840
    %3877 = vmatprep.subr.bf16.mxu0 %v2845
    %3878 = vmatpush1.bf16.msra.mxu0 %v2844
    %3879 = vmatprep.subr.bf16.mxu0 0
    %3880 = vmatpush1.bf16.msra.mxu0 0
    %3881 = vmatprep.subr.bf16.mxu0 0
    %3882 = vmatpush1.bf16.msra.mxu0 0
    %3883 = vmatprep.subr.bf16.mxu0 0
    %3884 = vmatpush1.bf16.msra.mxu0 0
    %3885 = vmatprep.subr.bf16.mxu0 0
    %3886 = vmatpush1.bf16.msra.mxu0 0
    %3887 = vmatprep.subr.bf16.mxu0 0
    %3888 = vmatpush1.bf16.msra.mxu0 0
    %3889 = vmatprep.subr.bf16.mxu0 0
    %3890 = vmatpush1.bf16.msra.mxu0 0
    %3891 = vmatprep.subr.bf16.mxu0 0
    %3892 = vmatpush1.bf16.msra.mxu0 0
    %3893 = vmatprep.subr.bf16.mxu0 0
    %3894 = vmatpush1.bf16.msra.mxu0 0
    %3895 = vmatprep.mubr.bf16.mxu0 0
    %3896 = vmatmul.mubr.bf16.gmra.mrb[0].mxu0 %v3819
    %v3897 = vpop.f32.mrb[0].mxu0
    %v3898 = vadd.f32 0.0, %v3897
    %v3899 = vpop.f32.mrb[0].mxu0
    %v3900 = vadd.f32 0.0, %v3899
    %v3901 = vpop.f32.mrb[0].mxu0
    %v3902 = vadd.f32 0.0, %v3901
    %v3903 = vpop.f32.mrb[0].mxu0
    %v3904 = vadd.f32 0.0, %v3903
    %3905 = vdwg.mxu0
    %v3906 = vadd.f32 %v3811, %v3855
    %v3907 = vadd.f32 %v3812, %v3857
    %v3908 = vadd.f32 %v3813, %v3898
    %v3909 = vadd.f32 %v3814, %v3900
    %v3910 = vadd.f32 %v3815, %v3859
    %v3911 = vadd.f32 %v3816, %v3861
    %v3912 = vadd.f32 %v3817, %v3902
    %v3913 = vadd.f32 %v3818, %v3904
    %v3914 = vxor.u32 %v3906, 2147483648
    %v3915 = vxor.u32 %v3907, 2147483648
    %v3916 = vxor.u32 %v3908, 2147483648
    %v3917 = vxor.u32 %v3910, 2147483648
    %v3918 = vxor.u32 %v3911, 2147483648
    %v3919 = vxor.u32 %v3912, 2147483648
    %v3920 = vmul.f32 %v3914, 1.442695
    %v3921 = vpow.pop %v3920
    %v3922 = vmul.f32 %v3915, 1.442695
    %v3923 = vpow.pop %v3922
    %v3924 = vmul.f32 %v3916, 1.442695
    %v3925 = vpow.pop %v3924
    %v3926 = vmul.f32 %v3917, 1.442695
    %v3927 = vpow.pop %v3926
    %v3928 = vmul.f32 %v3918, 1.442695
    %v3929 = vpow.pop %v3928
    %v3930 = vmul.f32 %v3919, 1.442695
    %v3931 = vpow.pop %v3930
    %v3932 = vadd.f32 %v3921, 1.0
    %v3933 = vadd.f32 %v3923, 1.0
    %v3934 = vadd.f32 %v3925, 1.0
    %v3935 = vadd.f32 %v3927, 1.0
    %v3936 = vadd.f32 %v3929, 1.0
    %v3937 = vadd.f32 %v3931, 1.0
    %v3938 = vrcp.pop %v3932
    %v3939 = vmul.f32 1.0, %v3938
    %v3940 = vrcp.pop %v3933
    %v3941 = vmul.f32 1.0, %v3940
    %v3942 = vrcp.pop %v3934
    %v3943 = vmul.f32 1.0, %v3942
    %v3944 = vrcp.pop %v3935
    %v3945 = vmul.f32 1.0, %v3944
    %v3946 = vrcp.pop %v3936
    %v3947 = vmul.f32 1.0, %v3946
    %v3948 = vrcp.pop %v3937
    %v3949 = vmul.f32 1.0, %v3948
    %v3950 = vtanh.pop %v3909
    %v3951 = vtanh.pop %v3913
    %v3952 = vmul.f32 %v3941, %v3799
    %v3953 = vmul.f32 %v3947, %v3800
    %v3954 = vmul.f32 %v3939, %v3950
    %v3955 = vmul.f32 %v3945, %v3951
    %v3956 = vadd.f32 %v3952, %v3954
    %v3957 = vadd.f32 %v3953, %v3955
    %v3958 = vtanh.pop %v3956
    %v3959 = vtanh.pop %v3957
    %v3960 = vmul.f32 %v3943, %v3958
    %v3961 = vmul.f32 %v3949, %v3959
    %3962 = vst [vmem:[%s1975] sm:$0xff] %v3960
    %3963 = vst [vmem:[%s1975 + $0x8] sm:$0xff] %v3961
    %v3964 = vld [vmem:[%s1980] sm:$0xff]
    %v3965 = vld [vmem:[%s1980 + $0x8] sm:$0xff]
    %v3966 = vld [vmem:[%s1980 + $0x10] sm:$0xff]
    %v3967 = vld [vmem:[%s1980 + $0x18] sm:$0xff]
    %v3968 = vunpack.c.l.bf16 %v3964
    %v3969 = vunpack.c.l.bf16 %v3965
    %v3970 = vunpack.c.l.bf16 %v3966
    %v3971 = vunpack.c.l.bf16 %v3967
    %v3972 = vunpack.c.h.bf16 %v3964
    %v3973 = vunpack.c.h.bf16 %v3965
    %v3974 = vunpack.c.h.bf16 %v3966
    %v3975 = vunpack.c.h.bf16 %v3967
    %v3976 = vpack.c.bf16 %v3961, %v3960
    %3977 = vmatprep.subr.bf16.mxu0 %v2815
    %3978 = vmatpush1.bf16.msra.mxu0 %v2814
    %3979 = vmatprep.subr.bf16.mxu0 %v2819
    %3980 = vmatpush1.bf16.msra.mxu0 %v2818
    %3981 = vmatprep.subr.bf16.mxu0 %v2823
    %3982 = vmatpush1.bf16.msra.mxu0 %v2822
    %3983 = vmatprep.subr.bf16.mxu0 %v2827
    %3984 = vmatpush1.bf16.msra.mxu0 %v2826
    %3985 = vmatprep.subr.bf16.mxu0 %v2831
    %3986 = vmatpush1.bf16.msra.mxu0 %v2830
    %3987 = vmatprep.subr.bf16.mxu0 %v2835
    %3988 = vmatpush1.bf16.msra.mxu0 %v2834
    %3989 = vmatprep.subr.bf16.mxu0 %v2839
    %3990 = vmatpush1.bf16.msra.mxu0 %v2838
    %3991 = vmatprep.subr.bf16.mxu0 %v2843
    %3992 = vmatpush1.bf16.msra.mxu0 %v2842
    %3993 = vmatprep.subr.bf16.mxu0 0
    %3994 = vmatpush1.bf16.msra.mxu0 0
    %3995 = vmatprep.subr.bf16.mxu0 0
    %3996 = vmatpush1.bf16.msra.mxu0 0
    %3997 = vmatprep.subr.bf16.mxu0 0
    %3998 = vmatpush1.bf16.msra.mxu0 0
    %3999 = vmatprep.subr.bf16.mxu0 0
    %4000 = vmatpush1.bf16.msra.mxu0 0
    %4001 = vmatprep.subr.bf16.mxu0 0
    %4002 = vmatpush1.bf16.msra.mxu0 0
    %4003 = vmatprep.subr.bf16.mxu0 0
    %4004 = vmatpush1.bf16.msra.mxu0 0
    %4005 = vmatprep.subr.bf16.mxu0 0
    %4006 = vmatpush1.bf16.msra.mxu0 0
    %4007 = vmatprep.subr.bf16.mxu0 0
    %4008 = vmatpush1.bf16.msra.mxu0 0
    %4009 = vmatprep.mubr.bf16.mxu0 0
    %4010 = vmatmul.mubr.bf16.gmra.mrb[0].mxu0 %v3976
    %v4011 = vpop.f32.mrb[0].mxu0
    %v4012 = vadd.f32 0.0, %v4011
    %v4013 = vpop.f32.mrb[0].mxu0
    %v4014 = vadd.f32 0.0, %v4013
    %v4015 = vpop.f32.mrb[0].mxu0
    %v4016 = vadd.f32 0.0, %v4015
    %v4017 = vpop.f32.mrb[0].mxu0
    %v4018 = vadd.f32 0.0, %v4017
    %4019 = vdwg.mxu0
    %4020 = vmatprep.subr.bf16.mxu0 %v2817
    %4021 = vmatpush1.bf16.msra.mxu0 %v2816
    %4022 = vmatprep.subr.bf16.mxu0 %v2821
    %4023 = vmatpush1.bf16.msra.mxu0 %v2820
    %4024 = vmatprep.subr.bf16.mxu0 %v2825
    %4025 = vmatpush1.bf16.msra.mxu0 %v2824
    %4026 = vmatprep.subr.bf16.mxu0 %v2829
    %4027 = vmatpush1.bf16.msra.mxu0 %v2828
    %4028 = vmatprep.subr.bf16.mxu0 %v2833
    %4029 = vmatpush1.bf16.msra.mxu0 %v2832
    %4030 = vmatprep.subr.bf16.mxu0 %v2837
    %4031 = vmatpush1.bf16.msra.mxu0 %v2836
    %4032 = vmatprep.subr.bf16.mxu0 %v2841
    %4033 = vmatpush1.bf16.msra.mxu0 %v2840
    %4034 = vmatprep.subr.bf16.mxu0 %v2845
    %4035 = vmatpush1.bf16.msra.mxu0 %v2844
    %4036 = vmatprep.subr.bf16.mxu0 0
    %4037 = vmatpush1.bf16.msra.mxu0 0
    %4038 = vmatprep.subr.bf16.mxu0 0
    %4039 = vmatpush1.bf16.msra.mxu0 0
    %4040 = vmatprep.subr.bf16.mxu0 0
    %4041 = vmatpush1.bf16.msra.mxu0 0
    %4042 = vmatprep.subr.bf16.mxu0 0
    %4043 = vmatpush1.bf16.msra.mxu0 0
    %4044 = vmatprep.subr.bf16.mxu0 0
    %4045 = vmatpush1.bf16.msra.mxu0 0
    %4046 = vmatprep.subr.bf16.mxu0 0
    %4047 = vmatpush1.bf16.msra.mxu0 0
    %4048 = vmatprep.subr.bf16.mxu0 0
    %4049 = vmatpush1.bf16.msra.mxu0 0
    %4050 = vmatprep.subr.bf16.mxu0 0
    %4051 = vmatpush1.bf16.msra.mxu0 0
    %4052 = vmatprep.mubr.bf16.mxu0 0
    %4053 = vmatmul.mubr.bf16.gmra.mrb[0].mxu0 %v3976
    %v4054 = vpop.f32.mrb[0].mxu0
    %v4055 = vadd.f32 0.0, %v4054
    %v4056 = vpop.f32.mrb[0].mxu0
    %v4057 = vadd.f32 0.0, %v4056
    %v4058 = vpop.f32.mrb[0].mxu0
    %v4059 = vadd.f32 0.0, %v4058
    %v4060 = vpop.f32.mrb[0].mxu0
    %v4061 = vadd.f32 0.0, %v4060
    %4062 = vdwg.mxu0
    %v4063 = vadd.f32 %v3968, %v4012
    %v4064 = vadd.f32 %v3969, %v4014
    %v4065 = vadd.f32 %v3970, %v4055
    %v4066 = vadd.f32 %v3971, %v4057
    %v4067 = vadd.f32 %v3972, %v4016
    %v4068 = vadd.f32 %v3973, %v4018
    %v4069 = vadd.f32 %v3974, %v4059
    %v4070 = vadd.f32 %v3975, %v4061
    %v4071 = vxor.u32 %v4063, 2147483648
    %v4072 = vxor.u32 %v4064, 2147483648
    %v4073 = vxor.u32 %v4065, 2147483648
    %v4074 = vxor.u32 %v4067, 2147483648
    %v4075 = vxor.u32 %v4068, 2147483648
    %v4076 = vxor.u32 %v4069, 2147483648
    %v4077 = vmul.f32 %v4071, 1.442695
    %v4078 = vpow.pop %v4077
    %v4079 = vmul.f32 %v4072, 1.442695
    %v4080 = vpow.pop %v4079
    %v4081 = vmul.f32 %v4073, 1.442695
    %v4082 = vpow.pop %v4081
    %v4083 = vmul.f32 %v4074, 1.442695
    %v4084 = vpow.pop %v4083
    %v4085 = vmul.f32 %v4075, 1.442695
    %v4086 = vpow.pop %v4085
    %v4087 = vmul.f32 %v4076, 1.442695
    %v4088 = vpow.pop %v4087
    %v4089 = vadd.f32 %v4078, 1.0
    %v4090 = vadd.f32 %v4080, 1.0
    %v4091 = vadd.f32 %v4082, 1.0
    %v4092 = vadd.f32 %v4084, 1.0
    %v4093 = vadd.f32 %v4086, 1.0
    %v4094 = vadd.f32 %v4088, 1.0
    %v4095 = vrcp.pop %v4089
    %v4096 = vmul.f32 1.0, %v4095
    %v4097 = vrcp.pop %v4090
    %v4098 = vmul.f32 1.0, %v4097
    %v4099 = vrcp.pop %v4091
    %v4100 = vmul.f32 1.0, %v4099
    %v4101 = vrcp.pop %v4092
    %v4102 = vmul.f32 1.0, %v4101
    %v4103 = vrcp.pop %v4093
    %v4104 = vmul.f32 1.0, %v4103
    %v4105 = vrcp.pop %v4094
    %v4106 = vmul.f32 1.0, %v4105
    %v4107 = vtanh.pop %v4066
    %v4108 = vtanh.pop %v4070
    %v4109 = vmul.f32 %v4098, %v3956
    %v4110 = vmul.f32 %v4104, %v3957
    %v4111 = vmul.f32 %v4096, %v4107
    %v4112 = vmul.f32 %v4102, %v4108
    %v4113 = vadd.f32 %v4109, %v4111
    %v4114 = vadd.f32 %v4110, %v4112
    %v4115 = vtanh.pop %v4113
    %v4116 = vtanh.pop %v4114
    %v4117 = vmul.f32 %v4100, %v4115
    %v4118 = vmul.f32 %v4106, %v4116
    %4119 = vst [vmem:[%s2136] sm:$0xff] %v4117
    %4120 = vst [vmem:[%s2136 + $0x8] sm:$0xff] %v4118
    %s4121 = scalar_lea.vmem [#allocation14], 16
    %4122 = vst [vmem:[%s4121] sm:$0xff] %v4117
    %4123 = vst [vmem:[%s4121 + $0x8] sm:$0xff] %v4118
    %s4124 = scalar_lea.vmem [#allocation16], 16
    %4125 = vst [vmem:[%s4124] sm:$0xff] %v4113
    %4126 = vst [vmem:[%s4124 + $0x8] sm:$0xff] %v4114
    %v4127 = vld [vmem:[#allocation2] sm:$0xff]
    %v4128 = vld [vmem:[#allocation2 + $0x8] sm:$0xff]
    %v4129 = vld [vmem:[#allocation2 + $0x10] sm:$0xff]
    %v4130 = vld [vmem:[#allocation2 + $0x18] sm:$0xff]
    %v4131 = vld [vmem:[#allocation2 + $0x20] sm:$0xff]
    %v4132 = vld [vmem:[#allocation2 + $0x28] sm:$0xff]
    %v4133 = vld [vmem:[#allocation2 + $0x30] sm:$0xff]
    %v4134 = vld [vmem:[#allocation2 + $0x38] sm:$0xff]
    %v4135 = vld [vmem:[#allocation2 + $0x40] sm:$0xff]
    %v4136 = vld [vmem:[#allocation2 + $0x48] sm:$0xff]
    %v4137 = vld [vmem:[#allocation2 + $0x50] sm:$0xff]
    %v4138 = vld [vmem:[#allocation2 + $0x58] sm:$0xff]
    %v4139 = vld [vmem:[#allocation2 + $0x60] sm:$0xff]
    %v4140 = vld [vmem:[#allocation2 + $0x68] sm:$0xff]
    %v4141 = vld [vmem:[#allocation2 + $0x70] sm:$0xff]
    %v4142 = vld [vmem:[#allocation2 + $0x78] sm:$0xff]
    %v4143 = vmul.f32 %v4127, %v4127
    %v4144 = vmul.f32 %v4128, %v4128
    %v4145 = vmul.f32 %v4129, %v4129
    %v4146 = vmul.f32 %v4130, %v4130
    %v4147 = vmul.f32 %v4131, %v4131
    %v4148 = vmul.f32 %v4132, %v4132
    %v4149 = vmul.f32 %v4133, %v4133
    %v4150 = vmul.f32 %v4134, %v4134
    %v4151 = vmul.f32 %v4135, %v4135
    %v4152 = vmul.f32 %v4136, %v4136
    %v4153 = vmul.f32 %v4137, %v4137
    %v4154 = vmul.f32 %v4138, %v4138
    %v4155 = vmul.f32 %v4139, %v4139
    %v4156 = vmul.f32 %v4140, %v4140
    %v4157 = vmul.f32 %v4141, %v4141
    %v4158 = vmul.f32 %v4142, %v4142
    %4159 = vadd.xlane.f32.xlu0 %v4143
    %v4160 = vpop.xlane.xlu0 %4159
    %4161 = vadd.xlane.f32.xlu0 %v4144
    %v4162 = vpop.xlane.xlu0 %4161
    %4163 = vadd.xlane.f32.xlu0 %v4145
    %v4164 = vpop.xlane.xlu0 %4163
    %4165 = vadd.xlane.f32.xlu0 %v4146
    %v4166 = vpop.xlane.xlu0 %4165
    %4167 = vadd.xlane.f32.xlu0 %v4147
    %v4168 = vpop.xlane.xlu0 %4167
    %4169 = vadd.xlane.f32.xlu0 %v4148
    %v4170 = vpop.xlane.xlu0 %4169
    %4171 = vadd.xlane.f32.xlu0 %v4149
    %v4172 = vpop.xlane.xlu0 %4171
    %4173 = vadd.xlane.f32.xlu0 %v4150
    %v4174 = vpop.xlane.xlu0 %4173
    %4175 = vadd.xlane.f32.xlu0 %v4151
    %v4176 = vpop.xlane.xlu0 %4175
    %4177 = vadd.xlane.f32.xlu0 %v4152
    %v4178 = vpop.xlane.xlu0 %4177
    %4179 = vadd.xlane.f32.xlu0 %v4153
    %v4180 = vpop.xlane.xlu0 %4179
    %4181 = vadd.xlane.f32.xlu0 %v4154
    %v4182 = vpop.xlane.xlu0 %4181
    %4183 = vadd.xlane.f32.xlu0 %v4155
    %v4184 = vpop.xlane.xlu0 %4183
    %4185 = vadd.xlane.f32.xlu0 %v4156
    %v4186 = vpop.xlane.xlu0 %4185
    %4187 = vadd.xlane.f32.xlu0 %v4157
    %v4188 = vpop.xlane.xlu0 %4187
    %4189 = vadd.xlane.f32.xlu0 %v4158
    %v4190 = vpop.xlane.xlu0 %4189
    %v4191 = vmax.f32 %v4160, 1e-24
    %v4192 = vmax.f32 %v4162, 1e-24
    %v4193 = vmax.f32 %v4164, 1e-24
    %v4194 = vmax.f32 %v4166, 1e-24
    %v4195 = vmax.f32 %v4168, 1e-24
    %v4196 = vmax.f32 %v4170, 1e-24
    %v4197 = vmax.f32 %v4172, 1e-24
    %v4198 = vmax.f32 %v4174, 1e-24
    %v4199 = vmax.f32 %v4176, 1e-24
    %v4200 = vmax.f32 %v4178, 1e-24
    %v4201 = vmax.f32 %v4180, 1e-24
    %v4202 = vmax.f32 %v4182, 1e-24
    %v4203 = vmax.f32 %v4184, 1e-24
    %v4204 = vmax.f32 %v4186, 1e-24
    %v4205 = vmax.f32 %v4188, 1e-24
    %v4206 = vmax.f32 %v4190, 1e-24
    %v4207 = vrsqrt.pop %v4191
    %v4208 = vrsqrt.pop %v4192
    %v4209 = vrsqrt.pop %v4193
    %v4210 = vrsqrt.pop %v4194
    %v4211 = vrsqrt.pop %v4195
    %v4212 = vrsqrt.pop %v4196
    %v4213 = vrsqrt.pop %v4197
    %v4214 = vrsqrt.pop %v4198
    %v4215 = vrsqrt.pop %v4199
    %v4216 = vrsqrt.pop %v4200
    %v4217 = vrsqrt.pop %v4201
    %v4218 = vrsqrt.pop %v4202
    %v4219 = vrsqrt.pop %v4203
    %v4220 = vrsqrt.pop %v4204
    %v4221 = vrsqrt.pop %v4205
    %v4222 = vrsqrt.pop %v4206
    %v4223 = vmul.f32 %v4127, %v4207
    %v4224 = vmul.f32 %v4128, %v4208
    %v4225 = vmul.f32 %v4129, %v4209
    %v4226 = vmul.f32 %v4130, %v4210
    %v4227 = vmul.f32 %v4131, %v4211
    %v4228 = vmul.f32 %v4132, %v4212
    %v4229 = vmul.f32 %v4133, %v4213
    %v4230 = vmul.f32 %v4134, %v4214
    %v4231 = vmul.f32 %v4135, %v4215
    %v4232 = vmul.f32 %v4136, %v4216
    %v4233 = vmul.f32 %v4137, %v4217
    %v4234 = vmul.f32 %v4138, %v4218
    %v4235 = vmul.f32 %v4139, %v4219
    %v4236 = vmul.f32 %v4140, %v4220
    %v4237 = vmul.f32 %v4141, %v4221
    %v4238 = vmul.f32 %v4142, %v4222
    %4239 = vst [vmem:[#allocation13] sm:$0xff] %v4223
    %4240 = vst [vmem:[#allocation13 + $0x8] sm:$0xff] %v4224
    %4241 = vst [vmem:[#allocation13 + $0x10] sm:$0xff] %v4225
    %4242 = vst [vmem:[#allocation13 + $0x18] sm:$0xff] %v4226
    %4243 = vst [vmem:[#allocation13 + $0x20] sm:$0xff] %v4227
    %4244 = vst [vmem:[#allocation13 + $0x28] sm:$0xff] %v4228
    %4245 = vst [vmem:[#allocation13 + $0x30] sm:$0xff] %v4229
    %4246 = vst [vmem:[#allocation13 + $0x38] sm:$0xff] %v4230
    %4247 = vst [vmem:[#allocation13 + $0x40] sm:$0xff] %v4231
    %4248 = vst [vmem:[#allocation13 + $0x48] sm:$0xff] %v4232
    %4249 = vst [vmem:[#allocation13 + $0x50] sm:$0xff] %v4233
    %4250 = vst [vmem:[#allocation13 + $0x58] sm:$0xff] %v4234
    %4251 = vst [vmem:[#allocation13 + $0x60] sm:$0xff] %v4235
    %4252 = vst [vmem:[#allocation13 + $0x68] sm:$0xff] %v4236
    %4253 = vst [vmem:[#allocation13 + $0x70] sm:$0xff] %v4237
    %4254 = vst [vmem:[#allocation13 + $0x78] sm:$0xff] %v4238
    %v4255 = vadd.f32 %v4223, %v4225
    %v4256 = vadd.f32 %v4255, %v4227
    %v4257 = vadd.f32 %v4256, %v4229
    %v4258 = vadd.f32 %v4257, %v4231
    %v4259 = vadd.f32 %v4258, %v4233
    %v4260 = vadd.f32 %v4259, %v4235
    %v4261 = vadd.f32 %v4260, %v4237
    %v4262 = vadd.f32 %v4224, %v4226
    %v4263 = vadd.f32 %v4262, %v4228
    %v4264 = vadd.f32 %v4263, %v4230
    %v4265 = vadd.f32 %v4264, %v4232
    %v4266 = vadd.f32 %v4265, %v4234
    %v4267 = vadd.f32 %v4266, %v4236
    %v4268 = vadd.f32 %v4267, %v4238
    %v4269 = vrcp.pop 8.0
    %v4270 = vmul.f32 %v4261, %v4269
    %v4271 = vmul.f32 %v4268, %v4269
    %v4272 = vmul.f32 %v4270, %v4270
    %v4273 = vmul.f32 %v4271, %v4271
    %4274 = vadd.xlane.f32.xlu0 %v4272
    %v4275 = vpop.xlane.xlu0 %4274
    %4276 = vadd.xlane.f32.xlu0 %v4273
    %v4277 = vpop.xlane.xlu0 %4276
    %v4278 = vmax.f32 %v4275, 1e-24
    %v4279 = vmax.f32 %v4277, 1e-24
    %v4280 = vrsqrt.pop %v4278
    %v4281 = vrsqrt.pop %v4279
    %v4282 = vmul.f32 %v4270, %v4280
    %v4283 = vmul.f32 %v4271, %v4281
    %4284 = vst [vmem:[#allocation17] sm:$0xff] %v4282
    %4285 = vst [vmem:[#allocation17 + $0x8] sm:$0xff] %v4283
    %v4286 = vpack.c.bf16 %v4283, %v4282
    %v4287 = vld [vmem:[%s4] sm:$0xf]
    %v4288 = vld [vmem:[%s4 + $0x4] sm:$0xf]
    %v4289 = vld [vmem:[%s4 + $0x8] sm:$0xf]
    %v4290 = vld [vmem:[%s4 + $0xc] sm:$0xf]
    %v4291 = vld [vmem:[%s4 + $0x10] sm:$0xf]
    %v4292 = vld [vmem:[%s4 + $0x14] sm:$0xf]
    %v4293 = vld [vmem:[%s4 + $0x18] sm:$0xf]
    %v4294 = vld [vmem:[%s4 + $0x1c] sm:$0xf]
    %v4295 = vld [vmem:[%s4 + $0x20] sm:$0xf]
    %v4296 = vld [vmem:[%s4 + $0x24] sm:$0xf]
    %v4297 = vld [vmem:[%s4 + $0x28] sm:$0xf]
    %v4298 = vld [vmem:[%s4 + $0x2c] sm:$0xf]
    %v4299 = vld [vmem:[%s4 + $0x30] sm:$0xf]
    %v4300 = vld [vmem:[%s4 + $0x34] sm:$0xf]
    %v4301 = vld [vmem:[%s4 + $0x38] sm:$0xf]
    %v4302 = vld [vmem:[%s4 + $0x3c] sm:$0xf]
    %v4303 = vld [vmem:[%s5] sm:$0x1]
    %v4305 = vlaneseq
    %v4306 = vshrl.u32 %v4305, 7
    %v4307 = vsub.s32 0, %v4306
    %v4308 = vrot.slane %v4303, %v4307
    %v4326 = vunpack.c.l.b16 %v4287
    %v4327 = vunpack.c.l.b16 %v4288
    %v4328 = vunpack.c.l.b16 %v4289
    %v4329 = vunpack.c.l.b16 %v4290
    %v4330 = vunpack.c.l.b16 %v4291
    %v4331 = vunpack.c.l.b16 %v4292
    %v4332 = vunpack.c.l.b16 %v4293
    %v4333 = vunpack.c.l.b16 %v4294
    %v4334 = vunpack.c.l.b16 %v4295
    %v4335 = vunpack.c.l.b16 %v4296
    %v4336 = vunpack.c.l.b16 %v4297
    %v4337 = vunpack.c.l.b16 %v4298
    %v4338 = vunpack.c.l.b16 %v4299
    %v4339 = vunpack.c.l.b16 %v4300
    %v4340 = vunpack.c.l.b16 %v4301
    %v4341 = vunpack.c.l.b16 %v4302
    %v4342 = vpack.c.b16 %v4327, %v4326
    %v4343 = vpack.c.b16 %v4329, %v4328
    %v4344 = vpack.c.b16 %v4331, %v4330
    %v4345 = vpack.c.b16 %v4333, %v4332
    %v4346 = vpack.c.b16 %v4335, %v4334
    %v4347 = vpack.c.b16 %v4337, %v4336
    %v4348 = vpack.c.b16 %v4339, %v4338
    %v4349 = vpack.c.b16 %v4341, %v4340
    %4358 = vmatprep.subr.bf16.mxu0 0
    %4359 = vmatpush1.bf16.msra.mxu0 %v4342
    %4360 = vmatprep.subr.bf16.mxu0 0
    %4361 = vmatpush1.bf16.msra.mxu0 %v4343
    %4362 = vmatprep.subr.bf16.mxu0 0
    %4363 = vmatpush1.bf16.msra.mxu0 %v4344
    %4364 = vmatprep.subr.bf16.mxu0 0
    %4365 = vmatpush1.bf16.msra.mxu0 %v4345
    %4366 = vmatprep.subr.bf16.mxu0 0
    %4367 = vmatpush1.bf16.msra.mxu0 %v4346
    %4368 = vmatprep.subr.bf16.mxu0 0
    %4369 = vmatpush1.bf16.msra.mxu0 %v4347
    %4370 = vmatprep.subr.bf16.mxu0 0
    %4371 = vmatpush1.bf16.msra.mxu0 %v4348
    %4372 = vmatprep.subr.bf16.mxu0 0
    %4373 = vmatpush1.bf16.msra.mxu0 %v4349
    %4374 = vmatprep.subr.bf16.mxu0 0
    %4375 = vmatpush1.bf16.msra.mxu0 0
    %4376 = vmatprep.subr.bf16.mxu0 0
    %4377 = vmatpush1.bf16.msra.mxu0 0
    %4378 = vmatprep.subr.bf16.mxu0 0
    %4379 = vmatpush1.bf16.msra.mxu0 0
    %4380 = vmatprep.subr.bf16.mxu0 0
    %4381 = vmatpush1.bf16.msra.mxu0 0
    %4382 = vmatprep.subr.bf16.mxu0 0
    %4383 = vmatpush1.bf16.msra.mxu0 0
    %4384 = vmatprep.subr.bf16.mxu0 0
    %4385 = vmatpush1.bf16.msra.mxu0 0
    %4386 = vmatprep.subr.bf16.mxu0 0
    %4387 = vmatpush1.bf16.msra.mxu0 0
    %4388 = vmatprep.subr.bf16.mxu0 0
    %4389 = vmatpush1.bf16.msra.mxu0 0
    %4390 = vmatprep.mubr.bf16.mxu0 0
    %4391 = vmatmul.mubr.bf16.gmra.mrb[0].mxu0 %v4286
    %v4392 = vpop.f32.mrb[0].mxu0
    %v4393 = vadd.f32 %v4308, %v4392
    %v4394 = vpop.f32.mrb[0].mxu0
    %v4395 = vpop.f32.mrb[0].mxu0
    %v4396 = vadd.f32 %v4308, %v4395
    %v4397 = vpop.f32.mrb[0].mxu0
    %4398 = vdwg.mxu0
    %v4399 = vmax.f32 %v4393, 0.0
    %v4400 = vmax.f32 %v4396, 0.0
    %v4401 = vpack.c.bf16 %v4400, %v4399
    %v4402 = vld [vmem:[#allocation11] sm:$0xf]
    %v4403 = vld [vmem:[#allocation11 + $0x4] sm:$0xf]
    %v4404 = vld [vmem:[#allocation11 + $0x8] sm:$0xf]
    %v4405 = vld [vmem:[#allocation11 + $0xc] sm:$0xf]
    %v4406 = vld [vmem:[#allocation11 + $0x10] sm:$0xf]
    %v4407 = vld [vmem:[#allocation11 + $0x14] sm:$0xf]
    %v4408 = vld [vmem:[#allocation11 + $0x18] sm:$0xf]
    %v4409 = vld [vmem:[#allocation11 + $0x1c] sm:$0xf]
    %v4410 = vld [vmem:[#allocation11 + $0x20] sm:$0xf]
    %v4411 = vld [vmem:[#allocation11 + $0x24] sm:$0xf]
    %v4412 = vld [vmem:[#allocation11 + $0x28] sm:$0xf]
    %v4413 = vld [vmem:[#allocation11 + $0x2c] sm:$0xf]
    %v4414 = vld [vmem:[#allocation11 + $0x30] sm:$0xf]
    %v4415 = vld [vmem:[#allocation11 + $0x34] sm:$0xf]
    %v4416 = vld [vmem:[#allocation11 + $0x38] sm:$0xf]
    %v4417 = vld [vmem:[#allocation11 + $0x3c] sm:$0xf]
    %v4418 = vld [vmem:[%s7] sm:$0x1]
    %v4420 = vlaneseq
    %v4421 = vshrl.u32 %v4420, 7
    %v4422 = vsub.s32 0, %v4421
    %v4423 = vrot.slane %v4418, %v4422
    %v4441 = vunpack.c.l.b16 %v4402
    %v4442 = vunpack.c.l.b16 %v4403
    %v4443 = vunpack.c.l.b16 %v4404
    %v4444 = vunpack.c.l.b16 %v4405
    %v4445 = vunpack.c.l.b16 %v4406
    %v4446 = vunpack.c.l.b16 %v4407
    %v4447 = vunpack.c.l.b16 %v4408
    %v4448 = vunpack.c.l.b16 %v4409
    %v4449 = vunpack.c.l.b16 %v4410
    %v4450 = vunpack.c.l.b16 %v4411
    %v4451 = vunpack.c.l.b16 %v4412
    %v4452 = vunpack.c.l.b16 %v4413
    %v4453 = vunpack.c.l.b16 %v4414
    %v4454 = vunpack.c.l.b16 %v4415
    %v4455 = vunpack.c.l.b16 %v4416
    %v4456 = vunpack.c.l.b16 %v4417
    %v4457 = vpack.c.b16 %v4442, %v4441
    %v4458 = vpack.c.b16 %v4444, %v4443
    %v4459 = vpack.c.b16 %v4446, %v4445
    %v4460 = vpack.c.b16 %v4448, %v4447
    %v4461 = vpack.c.b16 %v4450, %v4449
    %v4462 = vpack.c.b16 %v4452, %v4451
    %v4463 = vpack.c.b16 %v4454, %v4453
    %v4464 = vpack.c.b16 %v4456, %v4455
    %4473 = vmatprep.subr.bf16.mxu0 0
    %4474 = vmatpush1.bf16.msra.mxu0 %v4457
    %4475 = vmatprep.subr.bf16.mxu0 0
    %4476 = vmatpush1.bf16.msra.mxu0 %v4458
    %4477 = vmatprep.subr.bf16.mxu0 0
    %4478 = vmatpush1.bf16.msra.mxu0 %v4459
    %4479 = vmatprep.subr.bf16.mxu0 0
    %4480 = vmatpush1.bf16.msra.mxu0 %v4460
    %4481 = vmatprep.subr.bf16.mxu0 0
    %4482 = vmatpush1.bf16.msra.mxu0 %v4461
    %4483 = vmatprep.subr.bf16.mxu0 0
    %4484 = vmatpush1.bf16.msra.mxu0 %v4462
    %4485 = vmatprep.subr.bf16.mxu0 0
    %4486 = vmatpush1.bf16.msra.mxu0 %v4463
    %4487 = vmatprep.subr.bf16.mxu0 0
    %4488 = vmatpush1.bf16.msra.mxu0 %v4464
    %4489 = vmatprep.subr.bf16.mxu0 0
    %4490 = vmatpush1.bf16.msra.mxu0 0
    %4491 = vmatprep.subr.bf16.mxu0 0
    %4492 = vmatpush1.bf16.msra.mxu0 0
    %4493 = vmatprep.subr.bf16.mxu0 0
    %4494 = vmatpush1.bf16.msra.mxu0 0
    %4495 = vmatprep.subr.bf16.mxu0 0
    %4496 = vmatpush1.bf16.msra.mxu0 0
    %4497 = vmatprep.subr.bf16.mxu0 0
    %4498 = vmatpush1.bf16.msra.mxu0 0
    %4499 = vmatprep.subr.bf16.mxu0 0
    %4500 = vmatpush1.bf16.msra.mxu0 0
    %4501 = vmatprep.subr.bf16.mxu0 0
    %4502 = vmatpush1.bf16.msra.mxu0 0
    %4503 = vmatprep.subr.bf16.mxu0 0
    %4504 = vmatpush1.bf16.msra.mxu0 0
    %4505 = vmatprep.mubr.bf16.mxu0 0
    %4506 = vmatmul.mubr.bf16.gmra.mrb[0].mxu0 %v4401
    %v4507 = vpop.f32.mrb[0].mxu0
    %v4508 = vadd.f32 %v4423, %v4507
    %v4509 = vpop.f32.mrb[0].mxu0
    %v4510 = vpop.f32.mrb[0].mxu0
    %v4511 = vadd.f32 %v4423, %v4510
    %v4512 = vpop.f32.mrb[0].mxu0
    %4513 = vdwg.mxu0
    %v4514 = vmax.f32 %v4508, 0.0
    %v4515 = vmax.f32 %v4511, 0.0
    %v4516 = vpack.c.bf16 %v4515, %v4514
    %v4517 = vld [vmem:[%s8] sm:$0xf]
    %v4518 = vld [vmem:[%s8 + $0x4] sm:$0xf]
    %v4519 = vld [vmem:[%s8 + $0x8] sm:$0xf]
    %v4520 = vld [vmem:[%s8 + $0xc] sm:$0xf]
    %v4521 = vld [vmem:[%s8 + $0x10] sm:$0xf]
    %v4522 = vld [vmem:[%s8 + $0x14] sm:$0xf]
    %v4523 = vld [vmem:[%s8 + $0x18] sm:$0xf]
    %v4524 = vld [vmem:[%s8 + $0x1c] sm:$0xf]
    %v4525 = vld [vmem:[%s8 + $0x20] sm:$0xf]
    %v4526 = vld [vmem:[%s8 + $0x24] sm:$0xf]
    %v4527 = vld [vmem:[%s8 + $0x28] sm:$0xf]
    %v4528 = vld [vmem:[%s8 + $0x2c] sm:$0xf]
    %v4529 = vld [vmem:[%s8 + $0x30] sm:$0xf]
    %v4530 = vld [vmem:[%s8 + $0x34] sm:$0xf]
    %v4531 = vld [vmem:[%s8 + $0x38] sm:$0xf]
    %v4532 = vld [vmem:[%s8 + $0x3c] sm:$0xf]
    %v4533 = vld [vmem:[#allocation4] sm:$0x1]
    %v4535 = vlaneseq
    %v4536 = vshrl.u32 %v4535, 7
    %v4537 = vsub.s32 0, %v4536
    %v4538 = vrot.slane %v4533, %v4537
    %v4556 = vunpack.c.l.b16 %v4517
    %v4557 = vunpack.c.l.b16 %v4518
    %v4558 = vunpack.c.l.b16 %v4519
    %v4559 = vunpack.c.l.b16 %v4520
    %v4560 = vunpack.c.l.b16 %v4521
    %v4561 = vunpack.c.l.b16 %v4522
    %v4562 = vunpack.c.l.b16 %v4523
    %v4563 = vunpack.c.l.b16 %v4524
    %v4564 = vunpack.c.l.b16 %v4525
    %v4565 = vunpack.c.l.b16 %v4526
    %v4566 = vunpack.c.l.b16 %v4527
    %v4567 = vunpack.c.l.b16 %v4528
    %v4568 = vunpack.c.l.b16 %v4529
    %v4569 = vunpack.c.l.b16 %v4530
    %v4570 = vunpack.c.l.b16 %v4531
    %v4571 = vunpack.c.l.b16 %v4532
    %v4572 = vpack.c.b16 %v4557, %v4556
    %v4573 = vpack.c.b16 %v4559, %v4558
    %v4574 = vpack.c.b16 %v4561, %v4560
    %v4575 = vpack.c.b16 %v4563, %v4562
    %v4576 = vpack.c.b16 %v4565, %v4564
    %v4577 = vpack.c.b16 %v4567, %v4566
    %v4578 = vpack.c.b16 %v4569, %v4568
    %v4579 = vpack.c.b16 %v4571, %v4570
    %4588 = vmatprep.subr.bf16.mxu0 0
    %4589 = vmatpush1.bf16.msra.mxu0 %v4572
    %4590 = vmatprep.subr.bf16.mxu0 0
    %4591 = vmatpush1.bf16.msra.mxu0 %v4573
    %4592 = vmatprep.subr.bf16.mxu0 0
    %4593 = vmatpush1.bf16.msra.mxu0 %v4574
    %4594 = vmatprep.subr.bf16.mxu0 0
    %4595 = vmatpush1.bf16.msra.mxu0 %v4575
    %4596 = vmatprep.subr.bf16.mxu0 0
    %4597 = vmatpush1.bf16.msra.mxu0 %v4576
    %4598 = vmatprep.subr.bf16.mxu0 0
    %4599 = vmatpush1.bf16.msra.mxu0 %v4577
    %4600 = vmatprep.subr.bf16.mxu0 0
    %4601 = vmatpush1.bf16.msra.mxu0 %v4578
    %4602 = vmatprep.subr.bf16.mxu0 0
    %4603 = vmatpush1.bf16.msra.mxu0 %v4579
    %4604 = vmatprep.subr.bf16.mxu0 0
    %4605 = vmatpush1.bf16.msra.mxu0 0
    %4606 = vmatprep.subr.bf16.mxu0 0
    %4607 = vmatpush1.bf16.msra.mxu0 0
    %4608 = vmatprep.subr.bf16.mxu0 0
    %4609 = vmatpush1.bf16.msra.mxu0 0
    %4610 = vmatprep.subr.bf16.mxu0 0
    %4611 = vmatpush1.bf16.msra.mxu0 0
    %4612 = vmatprep.subr.bf16.mxu0 0
    %4613 = vmatpush1.bf16.msra.mxu0 0
    %4614 = vmatprep.subr.bf16.mxu0 0
    %4615 = vmatpush1.bf16.msra.mxu0 0
    %4616 = vmatprep.subr.bf16.mxu0 0
    %4617 = vmatpush1.bf16.msra.mxu0 0
    %4618 = vmatprep.subr.bf16.mxu0 0
    %4619 = vmatpush1.bf16.msra.mxu0 0
    %4620 = vmatprep.mubr.bf16.mxu0 0
    %4621 = vmatmul.mubr.bf16.gmra.mrb[0].mxu0 %v4516
    %v4622 = vpop.f32.mrb[0].mxu0
    %v4623 = vadd.f32 %v4538, %v4622
    %v4624 = vpop.f32.mrb[0].mxu0
    %v4625 = vpop.f32.mrb[0].mxu0
    %v4626 = vadd.f32 %v4538, %v4625
    %v4627 = vpop.f32.mrb[0].mxu0
    %4628 = vdwg.mxu0
    %v4629 = vxor.u32 %v4623, 2147483648
    %v4630 = vxor.u32 %v4626, 2147483648
    %v4631 = vmul.f32 %v4629, 1.442695
    %v4632 = vpow.pop %v4631
    %v4633 = vmul.f32 %v4630, 1.442695
    %v4634 = vpow.pop %v4633
    %v4635 = vadd.f32 %v4632, 1.0
    %v4636 = vadd.f32 %v4634, 1.0
    %v4637 = vrcp.pop %v4635
    %v4638 = vmul.f32 1.0, %v4637
    %v4639 = vrcp.pop %v4636
    %v4640 = vmul.f32 1.0, %v4639
    %vm4641 = vcmask 7168
    %4642 = vst.msk [vmem:[%s14] sm:$0xff] %vm4641, %v4638
    %4643 = vst.msk [vmem:[%s14 + $0x8] sm:$0xff] %vm4641, %v4640
    // Predicated region
    $region58: #{tpu_custom_call.1} parent=1 // pred_check
      _
    $region59: #{tpu_custom_call.1} parent=1 // pred_check_branch
      %4645 = sbr.rel (0) target = $region61
    $region60: #{tpu_custom_call.1} parent=1 // pred_region
      %s4647 = ssub.s32 2048, 2048
      %4648 = vsyncadd [#allocation7], %s4647
      %s4649 = sshll.u32 [#allocation13], 4
      %s4650 = int_to_ptr.vmem [resolvable:$true] %s4649
      %4655 = dma.vmem_to_hbm [thread:$0]  %s4650, 2048, %s10, [#allocation7], 128, 128, 8
    $region61: #{tpu_custom_call.1} parent=1 // pred_fallthru
      _
    // Predicated region
    $region62: #{tpu_custom_call.1} parent=1 // pred_check
      _
    $region63: #{tpu_custom_call.1} parent=1 // pred_check_branch
      %4657 = sbr.rel (0) target = $region65
    $region64: #{tpu_custom_call.1} parent=1 // pred_region
      %s4659 = ssub.s32 512, 512
      %4660 = vsyncadd [#allocation15], %s4659
      %s4661 = sshll.u32 [#allocation14], 4
      %s4662 = int_to_ptr.vmem [resolvable:$true] %s4661
      %4667 = dma.vmem_to_hbm [thread:$0]  %s4662, 512, %s11, [#allocation15], 128, 128, 8
    $region65: #{tpu_custom_call.1} parent=1 // pred_fallthru
      _
    // Predicated region
    $region66: #{tpu_custom_call.1} parent=1 // pred_check
      _
    $region67: #{tpu_custom_call.1} parent=1 // pred_check_branch
      %4669 = sbr.rel (0) target = $region69
    $region68: #{tpu_custom_call.1} parent=1 // pred_region
      %s4671 = ssub.s32 512, 512
      %4672 = vsyncadd [#allocation15], %s4671
      %s4673 = sshll.u32 [#allocation16], 4
      %s4674 = int_to_ptr.vmem [resolvable:$true] %s4673
      %4679 = dma.vmem_to_hbm [thread:$0]  %s4674, 512, %s12, [#allocation15], 128, 128, 8
    $region69: #{tpu_custom_call.1} parent=1 // pred_fallthru
      _
    // Predicated region
    $region70: #{tpu_custom_call.1} parent=1 // pred_check
      _
    $region71: #{tpu_custom_call.1} parent=1 // pred_check_branch
      %4681 = sbr.rel (0) target = $region73
    $region72: #{tpu_custom_call.1} parent=1 // pred_region
      %s4683 = ssub.s32 256, 256
      %4684 = vsyncadd [#allocation18], %s4683
      %s4685 = sshll.u32 [#allocation17], 4
      %s4686 = int_to_ptr.vmem [resolvable:$true] %s4685
      %4691 = dma.vmem_to_hbm [thread:$0]  %s4686, 256, %s13, [#allocation18], 128, 128, 8
    $region73: #{tpu_custom_call.1} parent=1 // pred_fallthru
      _
    // Predicated region
    $region74: #{tpu_custom_call.1} parent=1 // pred_check
      _
    $region75: #{tpu_custom_call.1} parent=1 // pred_check_branch
      %4693 = sbr.rel (0) target = $region77
    $region76: #{tpu_custom_call.1} parent=1 // pred_region
      _
    $region77: #{tpu_custom_call.1} parent=1 // pred_fallthru
      _
    // Predicated region
    $region78: #{tpu_custom_call.1} parent=1 // pred_check
      _
    $region79: #{tpu_custom_call.1} parent=1 // pred_check_branch
      %4695 = sbr.rel (0) target = $region81
    $region80: #{tpu_custom_call.1} parent=1 // pred_region
      %4696 = dma.done [#allocation7], 2048
    $region81: #{tpu_custom_call.1} parent=1 // pred_fallthru
      _
    // Predicated region
    $region82: #{tpu_custom_call.1} parent=1 // pred_check
      _
    $region83: #{tpu_custom_call.1} parent=1 // pred_check_branch
      %4698 = sbr.rel (0) target = $region85
    $region84: #{tpu_custom_call.1} parent=1 // pred_region
      %4699 = dma.done [#allocation15], 512
    $region85: #{tpu_custom_call.1} parent=1 // pred_fallthru
      _
    // Predicated region
    $region86: #{tpu_custom_call.1} parent=1 // pred_check
      _
    $region87: #{tpu_custom_call.1} parent=1 // pred_check_branch
      %4701 = sbr.rel (0) target = $region89
    $region88: #{tpu_custom_call.1} parent=1 // pred_region
      %4702 = dma.done [#allocation15], 512
    $region89: #{tpu_custom_call.1} parent=1 // pred_fallthru
      _
    // Predicated region
    $region90: #{tpu_custom_call.1} parent=1 // pred_check
      _
    $region91: #{tpu_custom_call.1} parent=1 // pred_check_branch
      %4704 = sbr.rel (0) target = $region93
    $region92: #{tpu_custom_call.1} parent=1 // pred_region
      %4705 = dma.done [#allocation18], 256
    $region93: #{tpu_custom_call.1} parent=1 // pred_fallthru
      _
    // Predicated region
    $region94: #{tpu_custom_call.1} parent=1 // pred_check
      _
    $region95: #{tpu_custom_call.1} parent=1 // pred_check_branch
      %4707 = sbr.rel (0) target = $region97
    $region96: #{tpu_custom_call.1} parent=1 // pred_region
      _
    $region97: #{tpu_custom_call.1} parent=1 // pred_fallthru
      _
    %4708 = vsyncpa [#allocation6], 1
    %4709 = vsyncpa [#allocation9], 1
    %4710 = vsyncpa [#allocation12], 1
    %4711 = vsyncpa [#allocation7], 1
    %4712 = vsyncpa [#allocation15], 1
    %4713 = vsyncpa [#allocation18], 1

</llo_original>
